<compile_context>
chip_gen: v6e
topology: v6e:2x2x1
jax: 0.10.0
libtpu: 0.0.40
codegen_flags: <defaults>
</compile_context>

<pallas_src>
import functools

import jax
import jax.numpy as jnp
from jax import lax
from jax.experimental import pallas as pl
from jax.experimental.pallas import tpu as pltpu


# ----------------------------- config (Y-Net, small) ------------------------
class _Cfg:
    pass


cfg = _Cfg()
cfg.B = 2
cfg.N_SAMPLE = 64
cfg.CHS_IN = 1
cfg.NUM_SPK = 2
cfg.PADDING = True
cfg.C_INTER = 16
cfg.C_INTRA = 16
cfg.K_INTER = 16
cfg.K_INTRA = 16
cfg.S_INTER = 8
cfg.S_INTRA = 8
cfg.NORM = True
cfg.SEP_BACKBONE = "TCN"
cfg.SEP_N = 1            # single separation block -> final fuse == Identity
cfg.SEP_X = (2,)         # dilated temporal conv blocks per BottleneckTCN
cfg.SEP_SKIP = True
cfg.C_INTER_MID = 32
cfg.EPS = 1e-8           # reference uses nn.GroupNorm(1, C, eps=1e-08)


# ----------------------------- kernel 1: encoder -----------------------------
def _encoder_kernel(xb_ref, w_ref, g_ref, b_ref, o_ref, *, T, stride, m_taps,
                    eps, norm):
    """Conv1d(1, C, K, stride) as sum of strided-frame matmuls, fused with gLN."""
    xb = xb_ref[0]                                   # (T + m_taps - 1, stride)
    y = jnp.zeros((T, w_ref.shape[1]), jnp.float32)
    for i in range(m_taps):                          # K == m_taps * stride
        y = y + jnp.dot(xb[i:i + T, :],
                        w_ref[i * stride:(i + 1) * stride, :],
                        preferred_element_type=jnp.float32)
    if norm:                                         # GroupNorm(1, C): whole (T,C)
        mu = jnp.mean(y)
        var = jnp.mean(y * y) - mu * mu              # one-pass, biased (as PyTorch)
        y = (y - mu) * lax.rsqrt(var + eps) * g_ref[...] + b_ref[...]
    o_ref[0] = y


def encoder_call(xb, w, g, b, *, T, stride, eps, norm):
    B, Lb, _ = xb.shape
    K, C = w.shape
    m_taps = K // stride
    return pl.pallas_call(
        functools.partial(_encoder_kernel, T=T, stride=stride, m_taps=m_taps,
                          eps=eps, norm=norm),
        grid=(B,),
        in_specs=[
            pl.BlockSpec((1, Lb, stride), lambda i: (i, 0, 0)),
            pl.BlockSpec((K, C), lambda i: (0, 0)),
            pl.BlockSpec((1, C), lambda i: (0, 0)),
            pl.BlockSpec((1, C), lambda i: (0, 0)),
        ],
        out_specs=pl.BlockSpec((1, T, C), lambda i: (i, 0, 0)),
        out_shape=jax.ShapeDtypeStruct((B, T, C), jnp.float32),
        compiler_params=pltpu.CompilerParams(dimension_semantics=("parallel",)),
    )(xb, w, g, b)


# ------------------------ kernel 2: fused TCN stack --------------------------
def _tcn_stack_kernel(x_ref, w_in_ref, b_in_ref, g1_ref, be1_ref,
                      w_dw_ref, b_dw_ref, g2_ref, be2_ref,
                      w_rs_ref, b_rs_ref, al_ref, skip_ref,
                      *, n_blocks, dilations, T, C, eps):
    """All Conv-TasNet temporal blocks for one sample, intermediates stay in VMEM."""
    x = x_ref[0]                                     # (T, C)
    skip_total = jnp.zeros((T, C), jnp.float32)
    # row/col iotas reused for the dilated depthwise conv (shift-matrix form)
    r = lax.broadcasted_iota(jnp.int32, (T, T), 0)
    c = lax.broadcasted_iota(jnp.int32, (T, T), 1)
    for nb in range(n_blocks):
        d = dilations[nb]
        a1 = al_ref[nb, 0]
        a2 = al_ref[nb, 1]
        # 1x1 conv -> PReLU
        y = jnp.dot(x, w_in_ref[nb], preferred_element_type=jnp.float32) + b_in_ref[nb]
        y = jnp.where(y >= 0, y, a1 * y)
        # gLN
        mu = jnp.mean(y)
        var = jnp.mean(y * y) - mu * mu
        y = (y - mu) * lax.rsqrt(var + eps) * g1_ref[nb] + be1_ref[nb]
        # depthwise dilated conv (k=3, 'same', zero pad) via tiny shift matmuls
        sm = ((r - c) == d).astype(jnp.float32)      # row t -> y[t-d] (0 outside)
        sp = ((c - r) == d).astype(jnp.float32)      # row t -> y[t+d] (0 outside)
        w3 = w_dw_ref[nb]                            # (3, Cmid)
        y = (w3[0] * jnp.dot(sm, y, preferred_element_type=jnp.float32)
             + w3[1] * y
             + w3[2] * jnp.dot(sp, y, preferred_element_type=jnp.float32)
             + b_dw_ref[nb])
        y = jnp.where(y >= 0, y, a2 * y)
        # gLN
        mu = jnp.mean(y)
        var = jnp.mean(y * y) - mu * mu
        y = (y - mu) * lax.rsqrt(var + eps) * g2_ref[nb] + be2_ref[nb]
        # merged residual|skip 1x1 convs (one MXU matmul, slice in-register)
        rs = jnp.dot(y, w_rs_ref[nb], preferred_element_type=jnp.float32) + b_rs_ref[nb]
        x = x + rs[:, :C]
        skip_total = skip_total + rs[:, C:]
    skip_ref[0] = skip_total


def tcn_stack_call(x, p, *, dilations, eps):
    B, T, C = x.shape
    nbt = p["w_in"].shape[0]

    def full(a):
        return pl.BlockSpec(a.shape, lambda i, _nd=a.ndim: (0,) * _nd)

    return pl.pallas_call(
        functools.partial(_tcn_stack_kernel, n_blocks=nbt, dilations=dilations,
                          T=T, C=C, eps=eps),
        grid=(B,),
        in_specs=[pl.BlockSpec((1, T, C), lambda i: (i, 0, 0)),
                  full(p["w_in"]), full(p["b_in"]), full(p["g1"]), full(p["be1"]),
                  full(p["w_dw"]), full(p["b_dw"]), full(p["g2"]), full(p["be2"]),
                  full(p["w_rs"]), full(p["b_rs"]), full(p["alphas"])],
        out_specs=pl.BlockSpec((1, T, C), lambda i: (i, 0, 0)),
        out_shape=jax.ShapeDtypeStruct((B, T, C), jnp.float32),
        compiler_params=pltpu.CompilerParams(dimension_semantics=("parallel",)),
    )(x, p["w_in"], p["b_in"], p["g1"], p["be1"], p["w_dw"], p["b_dw"],
      p["g2"], p["be2"], p["w_rs"], p["b_rs"], p["alphas"])


# --------------------------- kernel 3: fused decoder -------------------------
def _decoder_kernel(skip_ref, mix_ref, wm_ref, bm_ref, wa_ref, wb_ref, a_ref,
                    out_ref, *, T, stride):
    """PReLU + per-speaker mask 1x1 + sigmoid*mix + ConvT matmul + overlap-add + clamp."""
    s = skip_ref[0]                                  # (T, C)
    mix = mix_ref[0]                                 # (T, C)
    a = a_ref[0, 0]
    sp = jnp.where(s >= 0, s, a * s)
    m = jnp.dot(sp, wm_ref[0], preferred_element_type=jnp.float32) + bm_ref[0]
    est = jax.nn.sigmoid(m) * mix                    # (T, C)
    # ConvTranspose1d(C, 1, K=2*stride, stride): split weight into two halves
    fa = jnp.dot(est, wa_ref[...], preferred_element_type=jnp.float32)  # (T, stride)
    fb = jnp.dot(est, wb_ref[...], preferred_element_type=jnp.float32)  # (T, stride)
    # overlap factor is exactly 2: out block j = fa[j] + fb[j-1]
    r = lax.broadcasted_iota(jnp.int32, (T + 1, T), 0)
    c = lax.broadcasted_iota(jnp.int32, (T + 1, T), 1)
    sel0 = (r == c).astype(jnp.float32)
    sel1 = (r == c + 1).astype(jnp.float32)
    wave = (jnp.dot(sel0, fa, preferred_element_type=jnp.float32)
            + jnp.dot(sel1, fb, preferred_element_type=jnp.float32))
    out_ref[0, 0] = jnp.clip(wave, -1.0, 1.0)


def decoder_call(skip, mix, p, *, T, stride, num_spk):
    B, _, C = skip.shape
    return pl.pallas_call(
        functools.partial(_decoder_kernel, T=T, stride=stride),
        grid=(B, num_spk),
        in_specs=[
            pl.BlockSpec((1, T, C), lambda b, s: (b, 0, 0)),
            pl.BlockSpec((1, T, C), lambda b, s: (b, 0, 0)),
            pl.BlockSpec((1, C, C), lambda b, s: (s, 0, 0)),   # per-speaker mask weight
            pl.BlockSpec((1, 1, C), lambda b, s: (s, 0, 0)),   # per-speaker mask bias
            pl.BlockSpec((C, stride), lambda b, s: (0, 0)),
            pl.BlockSpec((C, stride), lambda b, s: (0, 0)),
            pl.BlockSpec((1, 1), lambda b, s: (0, 0)),
        ],
        out_specs=pl.BlockSpec((1, 1, T + 1, stride), lambda b, s: (b, s, 0, 0)),
        out_shape=jax.ShapeDtypeStruct((B, num_spk, T + 1, stride), jnp.float32),
        compiler_params=pltpu.CompilerParams(
            dimension_semantics=("parallel", "parallel")),
    )(skip, mix, p["dec_mask_w"], p["dec_mask_b"], p["dec_tr_a"], p["dec_tr_b"],
      p["dec_mask_a"])


# ----------------------------- forward pass glue -----------------------------
def pad_signal(x, k):
    """Mirror of Y_Net._pad_signal for 2-D input. x: [B, n_sample] -> [B, L]."""
    B, nsample = x.shape
    stride = k // 2
    rest = k - (stride + nsample % k) % k
    if rest > 0:
        x = jnp.concatenate([x, jnp.zeros((B, rest), x.dtype)], axis=1)
    aux = jnp.zeros((B, stride), x.dtype)
    x = jnp.concatenate([aux, x, aux], axis=1)
    return x, stride, stride + nsample


def y_net_forward(params, x):
    K, stride = cfg.K_INTER, cfg.S_INTER
    assert K % stride == 0 and K == 2 * stride, "kernel assumes K_INTER == 2 * S_INTER"
    assert cfg.SEP_N == 1, "LayerFusion (SEP_N > 1) not available"  # TODO(synk)
    xpad, start, end = pad_signal(x, K)
    B, L = xpad.shape
    T = (L - K) // stride + 1
    # stride-aligned frames: pure reshape, no XLA gather (frame t = blocks t, t+1)
    xb = xpad.reshape(B, L // stride, stride)
    y_inter = encoder_call(xb, params["enc_w"], params["enc_g"], params["enc_b"],
                           T=T, stride=stride, eps=cfg.EPS, norm=cfg.NORM)
    # TODO(synk): intra branch (encoder_intra + intra TCN stack) dropped: with
    # SEP_N=1 / SKIP=True the final fuse is Identity and the Decoder only uses the
    # inter path, so the intra branch cannot affect the output.
    dilations = tuple(2 ** i for i in range(cfg.SEP_X[0]))
    skip = tcn_stack_call(y_inter, params, dilations=dilations, eps=cfg.EPS)
    out = decoder_call(skip, y_inter, params, T=T, stride=stride,
                       num_spk=cfg.NUM_SPK)
    out = out.reshape(B, cfg.NUM_SPK, (T + 1) * stride)
    return out[..., start:end]


# ----------------------------- deterministic params --------------------------
def init_params(key):
    """Parameters pre-packed once into kernel-native layouts (no per-call repack)."""
    keys = iter(jax.random.split(key, 64))

    def nrm(shape, scale=0.1):
        return scale * jax.random.normal(next(keys), shape, jnp.float32)

    C1, Cmid, K = cfg.C_INTER, cfg.C_INTER_MID, cfg.K_INTER
    S, stride = cfg.NUM_SPK, cfg.S_INTER
    nbt = cfg.SEP_X[0]                       # temporal blocks in the single repeat

    p = {
        "enc_w": nrm((K, C1)),
        "enc_g": jnp.ones((1, C1), jnp.float32),
        "enc_b": jnp.zeros((1, C1), jnp.float32),
        # stacked TCN temporal-block params
        "w_in": nrm((nbt, C1, Cmid)),
        "b_in": nrm((nbt, 1, Cmid), 0.01),
        "g1": jnp.ones((nbt, 1, Cmid), jnp.float32),
        "be1": jnp.zeros((nbt, 1, Cmid), jnp.float32),
        "w_dw": nrm((nbt, 3, Cmid)),
        "b_dw": nrm((nbt, 1, Cmid), 0.01),
        "g2": jnp.ones((nbt, 1, Cmid), jnp.float32),
        "be2": jnp.zeros((nbt, 1, Cmid), jnp.float32),
        "w_rs": nrm((nbt, Cmid, 2 * C1)),    # merged [res | skip] 1x1 convs
        "b_rs": nrm((nbt, 1, 2 * C1), 0.01),
        "alphas": jnp.full((nbt, 2), 0.25, jnp.float32),   # PReLU (scalar, as nn.PReLU())
    }
    # decoder mask head: Conv1d(C1, S*C1, 1) -> pre-permute to per-speaker [S, Cin, Cout]
    wm = nrm((C1, S * C1))
    p["dec_mask_w"] = wm.reshape(C1, S, C1).transpose(1, 0, 2)
    p["dec_mask_b"] = nrm((S * C1,), 0.01).reshape(S, 1, C1)
    p["dec_mask_a"] = jnp.full((1, 1), 0.25, jnp.float32)
    # ConvTranspose1d(C1, 1, K, stride) weight, split into the two overlap halves
    wt = nrm((C1, K))
    p["dec_tr_a"] = wt[:, :stride]
    p["dec_tr_b"] = wt[:, stride:]
    return p


if __name__ == "__main__":
    key = jax.random.PRNGKey(0)
    pkey, xkey = jax.random.split(key)
    params = init_params(pkey)
    x = 0.5 * jax.random.normal(xkey, (cfg.B, cfg.N_SAMPLE), jnp.float32)

    out = jax.jit(y_net_forward)(params, x)
    out = jax.block_until_ready(out)
    assert out.shape == (cfg.B, cfg.NUM_SPK, cfg.N_SAMPLE), out.shape
    assert bool(jnp.all(jnp.isfinite(out)))
    print("KERNEL_OK")
</pallas_src>

<mosaic_0001>
module attributes {stable_mosaic.version = 11 : i64} {
  func.func @_encoder_kernel(%arg0: i32, %arg1: memref<1x11x8xf32, #tpu.memory_space<vmem>>, %arg2: memref<16x16xf32, #tpu.memory_space<vmem>>, %arg3: memref<1x16xf32, #tpu.memory_space<vmem>>, %arg4: memref<1x16xf32, #tpu.memory_space<vmem>>, %arg5: memref<1x10x16xf32, #tpu.memory_space<vmem>>) attributes {dimension_semantics = [#tpu.dimension_semantics<parallel>], iteration_bounds = array<i64: 2>, scalar_prefetch = 0 : i64, scratch_operands = 0 : i64, tpu.core_type = #tpu.core_type<tc>, window_params = [{transform_indices = @transform_0, window_bounds = array<i64: 1, 11, 8>}, {pipeline_mode = #tpu.pipeline_mode<synchronous>, transform_indices = @transform_1, window_bounds = array<i64: 16, 16>}, {pipeline_mode = #tpu.pipeline_mode<synchronous>, transform_indices = @transform_2, window_bounds = array<i64: 1, 16>}, {pipeline_mode = #tpu.pipeline_mode<synchronous>, transform_indices = @transform_3, window_bounds = array<i64: 1, 16>}, {transform_indices = @transform_4, window_bounds = array<i64: 1, 10, 16>}]} {
    %c0 = arith.constant 0 : index
    %c0_0 = arith.constant 0 : index
    %c0_1 = arith.constant 0 : index
    %0 = vector.load %arg1[%c0, %c0_0, %c0_1] : memref<1x11x8xf32, #tpu.memory_space<vmem>>, vector<1x11x8xf32>
    %1 = vector.shape_cast %0 : vector<1x11x8xf32> to vector<11x8xf32>
    %cst = arith.constant 0.000000e+00 : f32
    %2 = vector.broadcast %cst : f32 to vector<10x16xf32>
    %3 = vector.extract_strided_slice %1 {offsets = [0, 0], sizes = [10, 8], strides = [1, 1]} : vector<11x8xf32> to vector<10x8xf32>
    %c0_2 = arith.constant 0 : index
    %c0_3 = arith.constant 0 : index
    %4 = vector.load %arg2[%c0_2, %c0_3] : memref<16x16xf32, #tpu.memory_space<vmem>>, vector<8x16xf32>
    %cst_4 = arith.constant dense<0.000000e+00> : vector<10x16xf32>
    %5 = tpu.matmul %3, %4, %cst_4 {dimension_numbers = #tpu.dot_dimension_numbers<[1], [0], [0], [1], [0, 0, 1, 1], [], []>} : vector<10x8xf32>, vector<8x16xf32>, vector<10x16xf32> -> vector<10x16xf32>
    %6 = arith.addf %2, %5 : vector<10x16xf32>
    %7 = vector.extract_strided_slice %1 {offsets = [1, 0], sizes = [10, 8], strides = [1, 1]} : vector<11x8xf32> to vector<10x8xf32>
    %c8 = arith.constant 8 : index
    %c0_5 = arith.constant 0 : index
    %8 = vector.load %arg2[%c8, %c0_5] : memref<16x16xf32, #tpu.memory_space<vmem>>, vector<8x16xf32>
    %cst_6 = arith.constant dense<0.000000e+00> : vector<10x16xf32>
    %9 = tpu.matmul %7, %8, %cst_6 {dimension_numbers = #tpu.dot_dimension_numbers<[1], [0], [0], [1], [0, 0, 1, 1], [], []>} : vector<10x8xf32>, vector<8x16xf32>, vector<10x16xf32> -> vector<10x16xf32>
    %10 = arith.addf %6, %9 : vector<10x16xf32>
    %11 = vector.shape_cast %10 : vector<10x16xf32> to vector<1x10x16xf32>
    %cst_7 = arith.constant dense<0.000000e+00> : vector<1xf32>
    %12 = vector.multi_reduction <add>, %11, %cst_7 [1, 2] : vector<1x10x16xf32> to vector<1xf32>
    %13 = vector.shape_cast %12 : vector<1xf32> to vector<1x1x1xf32>
    %14 = vector.extract %13[0, 0, 0] : f32 from vector<1x1x1xf32>
    %cst_8 = arith.constant 1.600000e+02 : f32
    %15 = arith.divf %14, %cst_8 : f32
    %16 = arith.mulf %10, %10 : vector<10x16xf32>
    %17 = vector.shape_cast %16 : vector<10x16xf32> to vector<1x10x16xf32>
    %cst_9 = arith.constant dense<0.000000e+00> : vector<1xf32>
    %18 = vector.multi_reduction <add>, %17, %cst_9 [1, 2] : vector<1x10x16xf32> to vector<1xf32>
    %19 = vector.shape_cast %18 : vector<1xf32> to vector<1x1x1xf32>
    %20 = vector.extract %19[0, 0, 0] : f32 from vector<1x1x1xf32>
    %cst_10 = arith.constant 1.600000e+02 : f32
    %21 = arith.divf %20, %cst_10 : f32
    %22 = arith.mulf %15, %15 : f32
    %23 = arith.subf %21, %22 : f32
    %24 = vector.broadcast %15 : f32 to vector<10x16xf32>
    %25 = arith.subf %10, %24 : vector<10x16xf32>
    %cst_11 = arith.constant 9.99999993E-9 : f32
    %26 = arith.addf %23, %cst_11 : f32
    %27 = math.rsqrt %26 : f32
    %28 = vector.broadcast %27 : f32 to vector<10x16xf32>
    %29 = arith.mulf %25, %28 : vector<10x16xf32>
    %c0_12 = arith.constant 0 : index
    %c0_13 = arith.constant 0 : index
    %30 = vector.load %arg3[%c0_12, %c0_13] : memref<1x16xf32, #tpu.memory_space<vmem>>, vector<1x16xf32>
    %31 = vector.broadcast %30 : vector<1x16xf32> to vector<10x16xf32>
    %32 = arith.mulf %29, %31 : vector<10x16xf32>
    %c0_14 = arith.constant 0 : index
    %c0_15 = arith.constant 0 : index
    %33 = vector.load %arg4[%c0_14, %c0_15] : memref<1x16xf32, #tpu.memory_space<vmem>>, vector<1x16xf32>
    %34 = vector.broadcast %33 : vector<1x16xf32> to vector<10x16xf32>
    %35 = arith.addf %32, %34 : vector<10x16xf32>
    %c0_16 = arith.constant 0 : index
    %c0_17 = arith.constant 0 : index
    %c0_18 = arith.constant 0 : index
    %36 = vector.load %arg5[%c0_16, %c0_17, %c0_18] : memref<1x10x16xf32, #tpu.memory_space<vmem>>, vector<1x10x16xf32>
    %37 = vector.shape_cast %36 : vector<1x10x16xf32> to vector<10x16xf32>
    %38 = vector.shape_cast %35 : vector<10x16xf32> to vector<1x10x16xf32>
    tpu.vector_store %arg5[%c0_16, %c0_17, %c0_18], %38 {strides = array<i32>} : memref<1x10x16xf32, #tpu.memory_space<vmem>>, vector<1x10x16xf32>,
    return
  }
  func.func @transform_0(%arg0: i32) -> (i32, i32, i32) {
    %c0_i32 = arith.constant 0 : i32
    %c0_i32_0 = arith.constant 0 : i32
    %c0_i32_1 = arith.constant 0 : i32
    return %arg0, %c0_i32, %c0_i32_0 : i32, i32, i32
  }
  func.func @transform_1(%arg0: i32) -> (i32, i32) {
    %c0_i32 = arith.constant 0 : i32
    %c0_i32_0 = arith.constant 0 : i32
    %c0_i32_1 = arith.constant 0 : i32
    return %c0_i32, %c0_i32_0 : i32, i32
  }
  func.func @transform_2(%arg0: i32) -> (i32, i32) {
    %c0_i32 = arith.constant 0 : i32
    %c0_i32_0 = arith.constant 0 : i32
    %c0_i32_1 = arith.constant 0 : i32
    return %c0_i32, %c0_i32_0 : i32, i32
  }
  func.func @transform_3(%arg0: i32) -> (i32, i32) {
    %c0_i32 = arith.constant 0 : i32
    %c0_i32_0 = arith.constant 0 : i32
    %c0_i32_1 = arith.constant 0 : i32
    return %c0_i32, %c0_i32_0 : i32, i32
  }
  func.func @transform_4(%arg0: i32) -> (i32, i32, i32) {
    %c0_i32 = arith.constant 0 : i32
    %c0_i32_0 = arith.constant 0 : i32
    %c0_i32_1 = arith.constant 0 : i32
    return %arg0, %c0_i32, %c0_i32_0 : i32, i32, i32
  }
}

module attributes {stable_mosaic.version = 11 : i64} {
  func.func @_decoder_kernel(%arg0: i32, %arg1: i32, %arg2: memref<1x10x16xf32, #tpu.memory_space<vmem>>, %arg3: memref<1x10x16xf32, #tpu.memory_space<vmem>>, %arg4: memref<1x16x16xf32, #tpu.memory_space<vmem>>, %arg5: memref<1x1x16xf32, #tpu.memory_space<vmem>>, %arg6: memref<16x8xf32, #tpu.memory_space<vmem>>, %arg7: memref<16x8xf32, #tpu.memory_space<vmem>>, %arg8: memref<1x1xf32, #tpu.memory_space<vmem>>, %arg9: memref<1x1x11x8xf32, #tpu.memory_space<vmem>>) attributes {dimension_semantics = [#tpu.dimension_semantics<parallel>, #tpu.dimension_semantics<parallel>], iteration_bounds = array<i64: 2, 2>, scalar_prefetch = 0 : i64, scratch_operands = 0 : i64, tpu.core_type = #tpu.core_type<tc>, window_params = [{transform_indices = @transform_0, window_bounds = array<i64: 1, 10, 16>}, {transform_indices = @transform_1, window_bounds = array<i64: 1, 10, 16>}, {transform_indices = @transform_2, window_bounds = array<i64: 1, 16, 16>}, {transform_indices = @transform_3, window_bounds = array<i64: 1, 1, 16>}, {pipeline_mode = #tpu.pipeline_mode<synchronous>, transform_indices = @transform_4, window_bounds = array<i64: 16, 8>}, {pipeline_mode = #tpu.pipeline_mode<synchronous>, transform_indices = @transform_5, window_bounds = array<i64: 16, 8>}, {pipeline_mode = #tpu.pipeline_mode<synchronous>, transform_indices = @transform_6, window_bounds = array<i64: 1, 1>}, {transform_indices = @transform_7, window_bounds = array<i64: 1, 1, 11, 8>}]} {
    %c0 = arith.constant 0 : index
    %c0_0 = arith.constant 0 : index
    %c0_1 = arith.constant 0 : index
    %0 = vector.load %arg2[%c0, %c0_0, %c0_1] : memref<1x10x16xf32, #tpu.memory_space<vmem>>, vector<1x10x16xf32>
    %1 = vector.shape_cast %0 : vector<1x10x16xf32> to vector<10x16xf32>
    %c0_2 = arith.constant 0 : index
    %c0_3 = arith.constant 0 : index
    %c0_4 = arith.constant 0 : index
    %2 = vector.load %arg3[%c0_2, %c0_3, %c0_4] : memref<1x10x16xf32, #tpu.memory_space<vmem>>, vector<1x10x16xf32>
    %3 = vector.shape_cast %2 : vector<1x10x16xf32> to vector<10x16xf32>
    %c0_5 = arith.constant 0 : index
    %c0_6 = arith.constant 0 : index
    %4 = vector.load %arg8[%c0_5, %c0_6] : memref<1x1xf32, #tpu.memory_space<vmem>>, vector<1x1xf32>
    %5 = vector.extract %4[0, 0] : f32 from vector<1x1xf32>
    %cst = arith.constant 0.000000e+00 : f32
    %6 = vector.broadcast %cst : f32 to vector<10x16xf32>
    %7 = arith.cmpf oge, %1, %6 : vector<10x16xf32>
    %8 = vector.broadcast %5 : f32 to vector<10x16xf32>
    %9 = arith.mulf %8, %1 : vector<10x16xf32>
    %10 = arith.select %7, %1, %9 : vector<10x16xi1>, vector<10x16xf32>
    %c0_7 = arith.constant 0 : index
    %c0_8 = arith.constant 0 : index
    %c0_9 = arith.constant 0 : index
    %11 = vector.load %arg4[%c0_7, %c0_8, %c0_9] : memref<1x16x16xf32, #tpu.memory_space<vmem>>, vector<1x16x16xf32>
    %12 = vector.shape_cast %11 : vector<1x16x16xf32> to vector<16x16xf32>
    %cst_10 = arith.constant dense<0.000000e+00> : vector<10x16xf32>
    %13 = tpu.matmul %10, %12, %cst_10 {dimension_numbers = #tpu.dot_dimension_numbers<[1], [0], [0], [1], [0, 0, 1, 1], [], []>} : vector<10x16xf32>, vector<16x16xf32>, vector<10x16xf32> -> vector<10x16xf32>
    %c0_11 = arith.constant 0 : index
    %c0_12 = arith.constant 0 : index
    %c0_13 = arith.constant 0 : index
    %14 = vector.load %arg5[%c0_11, %c0_12, %c0_13] : memref<1x1x16xf32, #tpu.memory_space<vmem>>, vector<1x1x16xf32>
    %15 = vector.shape_cast %14 : vector<1x1x16xf32> to vector<1x16xf32>
    %16 = vector.broadcast %15 : vector<1x16xf32> to vector<10x16xf32>
    %17 = arith.addf %13, %16 : vector<10x16xf32>
    %18 = arith.negf %17 : vector<10x16xf32>
    %19 = math.exp %18 : vector<10x16xf32>
    %cst_14 = arith.constant 1.000000e+00 : f32
    %20 = vector.broadcast %cst_14 : f32 to vector<10x16xf32>
    %21 = arith.addf %20, %19 : vector<10x16xf32>
    %22 = arith.divf %20, %21 : vector<10x16xf32>
    %23 = arith.mulf %22, %3 : vector<10x16xf32>
    %c0_15 = arith.constant 0 : index
    %c0_16 = arith.constant 0 : index
    %24 = vector.load %arg6[%c0_15, %c0_16] : memref<16x8xf32, #tpu.memory_space<vmem>>, vector<16x8xf32>
    %cst_17 = arith.constant dense<0.000000e+00> : vector<10x8xf32>
    %25 = tpu.matmul %23, %24, %cst_17 {dimension_numbers = #tpu.dot_dimension_numbers<[1], [0], [0], [1], [0, 0, 1, 1], [], []>} : vector<10x16xf32>, vector<16x8xf32>, vector<10x8xf32> -> vector<10x8xf32>
    %c0_18 = arith.constant 0 : index
    %c0_19 = arith.constant 0 : index
    %26 = vector.load %arg7[%c0_18, %c0_19] : memref<16x8xf32, #tpu.memory_space<vmem>>, vector<16x8xf32>
    %cst_20 = arith.constant dense<0.000000e+00> : vector<10x8xf32>
    %27 = tpu.matmul %23, %26, %cst_20 {dimension_numbers = #tpu.dot_dimension_numbers<[1], [0], [0], [1], [0, 0, 1, 1], [], []>} : vector<10x16xf32>, vector<16x8xf32>, vector<10x8xf32> -> vector<10x8xf32>
    %28 = tpu.iota {dimensions = array<i32: 0>} : vector<11x10xi32>
    %29 = tpu.iota {dimensions = array<i32: 1>} : vector<11x10xi32>
    %30 = arith.cmpi eq, %28, %29 : vector<11x10xi32>
    %31 = arith.extui %30 : vector<11x10xi1> to vector<11x10xi32>
    %32 = arith.sitofp %31 : vector<11x10xi32> to vector<11x10xf32>
    %c1_i32 = arith.constant 1 : i32
    %33 = vector.broadcast %c1_i32 : i32 to vector<11x10xi32>
    %34 = arith.addi %29, %33 : vector<11x10xi32>
    %35 = arith.cmpi eq, %28, %34 : vector<11x10xi32>
    %36 = arith.extui %35 : vector<11x10xi1> to vector<11x10xi32>
    %37 = arith.sitofp %36 : vector<11x10xi32> to vector<11x10xf32>
    %cst_21 = arith.constant dense<0.000000e+00> : vector<11x8xf32>
    %38 = tpu.matmul %32, %25, %cst_21 {dimension_numbers = #tpu.dot_dimension_numbers<[1], [0], [0], [1], [0, 0, 1, 1], [], []>} : vector<11x10xf32>, vector<10x8xf32>, vector<11x8xf32> -> vector<11x8xf32>
    %cst_22 = arith.constant dense<0.000000e+00> : vector<11x8xf32>
    %39 = tpu.matmul %37, %27, %cst_22 {dimension_numbers = #tpu.dot_dimension_numbers<[1], [0], [0], [1], [0, 0, 1, 1], [], []>} : vector<11x10xf32>, vector<10x8xf32>, vector<11x8xf32> -> vector<11x8xf32>
    %40 = arith.addf %38, %39 : vector<11x8xf32>
    %cst_23 = arith.constant -1.000000e+00 : f32
    %cst_24 = arith.constant 1.000000e+00 : f32
    %41 = vector.broadcast %cst_23 : f32 to vector<11x8xf32>
    %42 = arith.maximumf %41, %40 : vector<11x8xf32>
    %43 = vector.broadcast %cst_24 : f32 to vector<11x8xf32>
    %44 = arith.minimumf %43, %42 : vector<11x8xf32>
    %c0_25 = arith.constant 0 : index
    %c0_26 = arith.constant 0 : index
    %c0_27 = arith.constant 0 : index
    %c0_28 = arith.constant 0 : index
    %45 = vector.load %arg9[%c0_25, %c0_26, %c0_27, %c0_28] : memref<1x1x11x8xf32, #tpu.memory_space<vmem>>, vector<1x1x11x8xf32>
    %46 = vector.shape_cast %45 : vector<1x1x11x8xf32> to vector<11x8xf32>
    %47 = vector.shape_cast %44 : vector<11x8xf32> to vector<1x1x11x8xf32>
    tpu.vector_store %arg9[%c0_25, %c0_26, %c0_27, %c0_28], %47 {strides = array<i32>} : memref<1x1x11x8xf32, #tpu.memory_space<vmem>>, vector<1x1x11x8xf32>,
    return
  }
  func.func @transform_0(%arg0: i32, %arg1: i32) -> (i32, i32, i32) {
    %c0_i32 = arith.constant 0 : i32
    %c0_i32_0 = arith.constant 0 : i32
    %c0_i32_1 = arith.constant 0 : i32
    return %arg0, %c0_i32, %c0_i32_0 : i32, i32, i32
  }
  func.func @transform_1(%arg0: i32, %arg1: i32) -> (i32, i32, i32) {
    %c0_i32 = arith.constant 0 : i32
    %c0_i32_0 = arith.constant 0 : i32
    %c0_i32_1 = arith.constant 0 : i32
    return %arg0, %c0_i32, %c0_i32_0 : i32, i32, i32
  }
  func.func @transform_2(%arg0: i32, %arg1: i32) -> (i32, i32, i32) {
    %c0_i32 = arith.constant 0 : i32
    %c0_i32_0 = arith.constant 0 : i32
    %c0_i32_1 = arith.constant 0 : i32
    return %arg1, %c0_i32, %c0_i32_0 : i32, i32, i32
  }
  func.func @transform_3(%arg0: i32, %arg1: i32) -> (i32, i32, i32) {
    %c0_i32 = arith.constant 0 : i32
    %c0_i32_0 = arith.constant 0 : i32
    %c0_i32_1 = arith.constant 0 : i32
    return %arg1, %c0_i32, %c0_i32_0 : i32, i32, i32
  }
  func.func @transform_4(%arg0: i32, %arg1: i32) -> (i32, i32) {
    %c0_i32 = arith.constant 0 : i32
    %c0_i32_0 = arith.constant 0 : i32
    %c0_i32_1 = arith.constant 0 : i32
    return %c0_i32, %c0_i32_0 : i32, i32
  }
  func.func @transform_5(%arg0: i32, %arg1: i32) -> (i32, i32) {
    %c0_i32 = arith.constant 0 : i32
    %c0_i32_0 = arith.constant 0 : i32
    %c0_i32_1 = arith.constant 0 : i32
    return %c0_i32, %c0_i32_0 : i32, i32
  }
  func.func @transform_6(%arg0: i32, %arg1: i32) -> (i32, i32) {
    %c0_i32 = arith.constant 0 : i32
    %c0_i32_0 = arith.constant 0 : i32
    %c0_i32_1 = arith.constant 0 : i32
    return %c0_i32, %c0_i32_0 : i32, i32
  }
  func.func @transform_7(%arg0: i32, %arg1: i32) -> (i32, i32, i32, i32) {
    %c0_i32 = arith.constant 0 : i32
    %c0_i32_0 = arith.constant 0 : i32
    %c0_i32_1 = arith.constant 0 : i32
    return %arg0, %arg1, %c0_i32, %c0_i32_0 : i32, i32, i32, i32
  }
}

module attributes {stable_mosaic.version = 11 : i64} {
  func.func @_tcn_stack_kernel(%arg0: i32, %arg1: memref<1x10x16xf32, #tpu.memory_space<vmem>>, %arg2: memref<2x16x32xf32, #tpu.memory_space<vmem>>, %arg3: memref<2x1x32xf32, #tpu.memory_space<vmem>>, %arg4: memref<2x1x32xf32, #tpu.memory_space<vmem>>, %arg5: memref<2x1x32xf32, #tpu.memory_space<vmem>>, %arg6: memref<2x3x32xf32, #tpu.memory_space<vmem>>, %arg7: memref<2x1x32xf32, #tpu.memory_space<vmem>>, %arg8: memref<2x1x32xf32, #tpu.memory_space<vmem>>, %arg9: memref<2x1x32xf32, #tpu.memory_space<vmem>>, %arg10: memref<2x32x32xf32, #tpu.memory_space<vmem>>, %arg11: memref<2x1x32xf32, #tpu.memory_space<vmem>>, %arg12: memref<2x2xf32, #tpu.memory_space<vmem>>, %arg13: memref<1x10x16xf32, #tpu.memory_space<vmem>>) attributes {dimension_semantics = [#tpu.dimension_semantics<parallel>], iteration_bounds = array<i64: 2>, scalar_prefetch = 0 : i64, scratch_operands = 0 : i64, tpu.core_type = #tpu.core_type<tc>, window_params = [{transform_indices = @transform_0, window_bounds = array<i64: 1, 10, 16>}, {pipeline_mode = #tpu.pipeline_mode<synchronous>, transform_indices = @transform_1, window_bounds = array<i64: 2, 16, 32>}, {pipeline_mode = #tpu.pipeline_mode<synchronous>, transform_indices = @transform_2, window_bounds = array<i64: 2, 1, 32>}, {pipeline_mode = #tpu.pipeline_mode<synchronous>, transform_indices = @transform_3, window_bounds = array<i64: 2, 1, 32>}, {pipeline_mode = #tpu.pipeline_mode<synchronous>, transform_indices = @transform_4, window_bounds = array<i64: 2, 1, 32>}, {pipeline_mode = #tpu.pipeline_mode<synchronous>, transform_indices = @transform_5, window_bounds = array<i64: 2, 3, 32>}, {pipeline_mode = #tpu.pipeline_mode<synchronous>, transform_indices = @transform_6, window_bounds = array<i64: 2, 1, 32>}, {pipeline_mode = #tpu.pipeline_mode<synchronous>, transform_indices = @transform_7, window_bounds = array<i64: 2, 1, 32>}, {pipeline_mode = #tpu.pipeline_mode<synchronous>, transform_indices = @transform_8, window_bounds = array<i64: 2, 1, 32>}, {pipeline_mode = #tpu.pipeline_mode<synchronous>, transform_indices = @transform_9, window_bounds = array<i64: 2, 32, 32>}, {pipeline_mode = #tpu.pipeline_mode<synchronous>, transform_indices = @transform_10, window_bounds = array<i64: 2, 1, 32>}, {pipeline_mode = #tpu.pipeline_mode<synchronous>, transform_indices = @transform_11, window_bounds = array<i64: 2, 2>}, {transform_indices = @transform_12, window_bounds = array<i64: 1, 10, 16>}]} {
    %c0 = arith.constant 0 : index
    %c0_0 = arith.constant 0 : index
    %c0_1 = arith.constant 0 : index
    %0 = vector.load %arg1[%c0, %c0_0, %c0_1] : memref<1x10x16xf32, #tpu.memory_space<vmem>>, vector<1x10x16xf32>
    %1 = vector.shape_cast %0 : vector<1x10x16xf32> to vector<10x16xf32>
    %cst = arith.constant 0.000000e+00 : f32
    %2 = vector.broadcast %cst : f32 to vector<10x16xf32>
    %3 = tpu.iota {dimensions = array<i32: 0>} : vector<10x10xi32>
    %4 = tpu.iota {dimensions = array<i32: 1>} : vector<10x10xi32>
    %c0_2 = arith.constant 0 : index
    %c0_3 = arith.constant 0 : index
    %5 = vector.load %arg12[%c0_2, %c0_3] : memref<2x2xf32, #tpu.memory_space<vmem>>, vector<1x1xf32>
    %6 = vector.extract %5[0, 0] : f32 from vector<1x1xf32>
    %c0_4 = arith.constant 0 : index
    %c1 = arith.constant 1 : index
    %7 = vector.load %arg12[%c0_4, %c1] : memref<2x2xf32, #tpu.memory_space<vmem>>, vector<1x1xf32>
    %8 = vector.extract %7[0, 0] : f32 from vector<1x1xf32>
    %c0_5 = arith.constant 0 : index
    %c0_6 = arith.constant 0 : index
    %c0_7 = arith.constant 0 : index
    %9 = vector.load %arg2[%c0_5, %c0_6, %c0_7] : memref<2x16x32xf32, #tpu.memory_space<vmem>>, vector<1x16x32xf32>
    %10 = vector.shape_cast %9 : vector<1x16x32xf32> to vector<16x32xf32>
    %cst_8 = arith.constant dense<0.000000e+00> : vector<10x32xf32>
    %11 = tpu.matmul %1, %10, %cst_8 {dimension_numbers = #tpu.dot_dimension_numbers<[1], [0], [0], [1], [0, 0, 1, 1], [], []>} : vector<10x16xf32>, vector<16x32xf32>, vector<10x32xf32> -> vector<10x32xf32>
    %c0_9 = arith.constant 0 : index
    %c0_10 = arith.constant 0 : index
    %c0_11 = arith.constant 0 : index
    %12 = vector.load %arg3[%c0_9, %c0_10, %c0_11] : memref<2x1x32xf32, #tpu.memory_space<vmem>>, vector<1x1x32xf32>
    %13 = vector.shape_cast %12 : vector<1x1x32xf32> to vector<1x32xf32>
    %14 = vector.broadcast %13 : vector<1x32xf32> to vector<10x32xf32>
    %15 = arith.addf %11, %14 : vector<10x32xf32>
    %cst_12 = arith.constant 0.000000e+00 : f32
    %16 = vector.broadcast %cst_12 : f32 to vector<10x32xf32>
    %17 = arith.cmpf oge, %15, %16 : vector<10x32xf32>
    %18 = vector.broadcast %6 : f32 to vector<10x32xf32>
    %19 = arith.mulf %18, %15 : vector<10x32xf32>
    %20 = arith.select %17, %15, %19 : vector<10x32xi1>, vector<10x32xf32>
    %21 = vector.shape_cast %20 : vector<10x32xf32> to vector<1x10x32xf32>
    %cst_13 = arith.constant dense<0.000000e+00> : vector<1xf32>
    %22 = vector.multi_reduction <add>, %21, %cst_13 [1, 2] : vector<1x10x32xf32> to vector<1xf32>
    %23 = vector.shape_cast %22 : vector<1xf32> to vector<1x1x1xf32>
    %24 = vector.extract %23[0, 0, 0] : f32 from vector<1x1x1xf32>
    %cst_14 = arith.constant 3.200000e+02 : f32
    %25 = arith.divf %24, %cst_14 : f32
    %26 = arith.mulf %20, %20 : vector<10x32xf32>
    %27 = vector.shape_cast %26 : vector<10x32xf32> to vector<1x10x32xf32>
    %cst_15 = arith.constant dense<0.000000e+00> : vector<1xf32>
    %28 = vector.multi_reduction <add>, %27, %cst_15 [1, 2] : vector<1x10x32xf32> to vector<1xf32>
    %29 = vector.shape_cast %28 : vector<1xf32> to vector<1x1x1xf32>
    %30 = vector.extract %29[0, 0, 0] : f32 from vector<1x1x1xf32>
    %cst_16 = arith.constant 3.200000e+02 : f32
    %31 = arith.divf %30, %cst_16 : f32
    %32 = arith.mulf %25, %25 : f32
    %33 = arith.subf %31, %32 : f32
    %34 = vector.broadcast %25 : f32 to vector<10x32xf32>
    %35 = arith.subf %20, %34 : vector<10x32xf32>
    %cst_17 = arith.constant 9.99999993E-9 : f32
    %36 = arith.addf %33, %cst_17 : f32
    %37 = math.rsqrt %36 : f32
    %38 = vector.broadcast %37 : f32 to vector<10x32xf32>
    %39 = arith.mulf %35, %38 : vector<10x32xf32>
    %c0_18 = arith.constant 0 : index
    %c0_19 = arith.constant 0 : index
    %c0_20 = arith.constant 0 : index
    %40 = vector.load %arg4[%c0_18, %c0_19, %c0_20] : memref<2x1x32xf32, #tpu.memory_space<vmem>>, vector<1x1x32xf32>
    %41 = vector.shape_cast %40 : vector<1x1x32xf32> to vector<1x32xf32>
    %42 = vector.broadcast %41 : vector<1x32xf32> to vector<10x32xf32>
    %43 = arith.mulf %39, %42 : vector<10x32xf32>
    %c0_21 = arith.constant 0 : index
    %c0_22 = arith.constant 0 : index
    %c0_23 = arith.constant 0 : index
    %44 = vector.load %arg5[%c0_21, %c0_22, %c0_23] : memref<2x1x32xf32, #tpu.memory_space<vmem>>, vector<1x1x32xf32>
    %45 = vector.shape_cast %44 : vector<1x1x32xf32> to vector<1x32xf32>
    %46 = vector.broadcast %45 : vector<1x32xf32> to vector<10x32xf32>
    %47 = arith.addf %43, %46 : vector<10x32xf32>
    %48 = arith.subi %3, %4 : vector<10x10xi32>
    %c1_i32 = arith.constant 1 : i32
    %49 = vector.broadcast %c1_i32 : i32 to vector<10x10xi32>
    %50 = arith.cmpi eq, %48, %49 : vector<10x10xi32>
    %51 = arith.extui %50 : vector<10x10xi1> to vector<10x10xi32>
    %52 = arith.sitofp %51 : vector<10x10xi32> to vector<10x10xf32>
    %53 = arith.subi %4, %3 : vector<10x10xi32>
    %c1_i32_24 = arith.constant 1 : i32
    %54 = vector.broadcast %c1_i32_24 : i32 to vector<10x10xi32>
    %55 = arith.cmpi eq, %53, %54 : vector<10x10xi32>
    %56 = arith.extui %55 : vector<10x10xi1> to vector<10x10xi32>
    %57 = arith.sitofp %56 : vector<10x10xi32> to vector<10x10xf32>
    %c0_25 = arith.constant 0 : index
    %c0_26 = arith.constant 0 : index
    %c0_27 = arith.constant 0 : index
    %58 = vector.load %arg6[%c0_25, %c0_26, %c0_27] : memref<2x3x32xf32, #tpu.memory_space<vmem>>, vector<1x3x32xf32>
    %59 = vector.shape_cast %58 : vector<1x3x32xf32> to vector<3x32xf32>
    %60 = vector.extract_strided_slice %59 {offsets = [0, 0], sizes = [1, 32], strides = [1, 1]} : vector<3x32xf32> to vector<1x32xf32>
    %61 = vector.shape_cast %60 : vector<1x32xf32> to vector<32xf32>
    %cst_28 = arith.constant dense<0.000000e+00> : vector<10x32xf32>
    %62 = tpu.matmul %52, %47, %cst_28 {dimension_numbers = #tpu.dot_dimension_numbers<[1], [0], [0], [1], [0, 0, 1, 1], [], []>} : vector<10x10xf32>, vector<10x32xf32>, vector<10x32xf32> -> vector<10x32xf32>
    %63 = vector.shape_cast %61 : vector<32xf32> to vector<1x32xf32>
    %64 = vector.broadcast %63 : vector<1x32xf32> to vector<10x32xf32>
    %65 = arith.mulf %64, %62 : vector<10x32xf32>
    %66 = vector.extract_strided_slice %59 {offsets = [1, 0], sizes = [1, 32], strides = [1, 1]} : vector<3x32xf32> to vector<1x32xf32>
    %67 = vector.shape_cast %66 : vector<1x32xf32> to vector<32xf32>
    %68 = vector.shape_cast %67 : vector<32xf32> to vector<1x32xf32>
    %69 = vector.broadcast %68 : vector<1x32xf32> to vector<10x32xf32>
    %70 = arith.mulf %69, %47 : vector<10x32xf32>
    %71 = arith.addf %65, %70 : vector<10x32xf32>
    %72 = vector.extract_strided_slice %59 {offsets = [2, 0], sizes = [1, 32], strides = [1, 1]} : vector<3x32xf32> to vector<1x32xf32>
    %73 = vector.shape_cast %72 : vector<1x32xf32> to vector<32xf32>
    %cst_29 = arith.constant dense<0.000000e+00> : vector<10x32xf32>
    %74 = tpu.matmul %57, %47, %cst_29 {dimension_numbers = #tpu.dot_dimension_numbers<[1], [0], [0], [1], [0, 0, 1, 1], [], []>} : vector<10x10xf32>, vector<10x32xf32>, vector<10x32xf32> -> vector<10x32xf32>
    %75 = vector.shape_cast %73 : vector<32xf32> to vector<1x32xf32>
    %76 = vector.broadcast %75 : vector<1x32xf32> to vector<10x32xf32>
    %77 = arith.mulf %76, %74 : vector<10x32xf32>
    %78 = arith.addf %71, %77 : vector<10x32xf32>
    %c0_30 = arith.constant 0 : index
    %c0_31 = arith.constant 0 : index
    %c0_32 = arith.constant 0 : index
    %79 = vector.load %arg7[%c0_30, %c0_31, %c0_32] : memref<2x1x32xf32, #tpu.memory_space<vmem>>, vector<1x1x32xf32>
    %80 = vector.shape_cast %79 : vector<1x1x32xf32> to vector<1x32xf32>
    %81 = vector.broadcast %80 : vector<1x32xf32> to vector<10x32xf32>
    %82 = arith.addf %78, %81 : vector<10x32xf32>
    %cst_33 = arith.constant 0.000000e+00 : f32
    %83 = vector.broadcast %cst_33 : f32 to vector<10x32xf32>
    %84 = arith.cmpf oge, %82, %83 : vector<10x32xf32>
    %85 = vector.broadcast %8 : f32 to vector<10x32xf32>
    %86 = arith.mulf %85, %82 : vector<10x32xf32>
    %87 = arith.select %84, %82, %86 : vector<10x32xi1>, vector<10x32xf32>
    %88 = vector.shape_cast %87 : vector<10x32xf32> to vector<1x10x32xf32>
    %cst_34 = arith.constant dense<0.000000e+00> : vector<1xf32>
    %89 = vector.multi_reduction <add>, %88, %cst_34 [1, 2] : vector<1x10x32xf32> to vector<1xf32>
    %90 = vector.shape_cast %89 : vector<1xf32> to vector<1x1x1xf32>
    %91 = vector.extract %90[0, 0, 0] : f32 from vector<1x1x1xf32>
    %cst_35 = arith.constant 3.200000e+02 : f32
    %92 = arith.divf %91, %cst_35 : f32
    %93 = arith.mulf %87, %87 : vector<10x32xf32>
    %94 = vector.shape_cast %93 : vector<10x32xf32> to vector<1x10x32xf32>
    %cst_36 = arith.constant dense<0.000000e+00> : vector<1xf32>
    %95 = vector.multi_reduction <add>, %94, %cst_36 [1, 2] : vector<1x10x32xf32> to vector<1xf32>
    %96 = vector.shape_cast %95 : vector<1xf32> to vector<1x1x1xf32>
    %97 = vector.extract %96[0, 0, 0] : f32 from vector<1x1x1xf32>
    %cst_37 = arith.constant 3.200000e+02 : f32
    %98 = arith.divf %97, %cst_37 : f32
    %99 = arith.mulf %92, %92 : f32
    %100 = arith.subf %98, %99 : f32
    %101 = vector.broadcast %92 : f32 to vector<10x32xf32>
    %102 = arith.subf %87, %101 : vector<10x32xf32>
    %cst_38 = arith.constant 9.99999993E-9 : f32
    %103 = arith.addf %100, %cst_38 : f32
    %104 = math.rsqrt %103 : f32
    %105 = vector.broadcast %104 : f32 to vector<10x32xf32>
    %106 = arith.mulf %102, %105 : vector<10x32xf32>
    %c0_39 = arith.constant 0 : index
    %c0_40 = arith.constant 0 : index
    %c0_41 = arith.constant 0 : index
    %107 = vector.load %arg8[%c0_39, %c0_40, %c0_41] : memref<2x1x32xf32, #tpu.memory_space<vmem>>, vector<1x1x32xf32>
    %108 = vector.shape_cast %107 : vector<1x1x32xf32> to vector<1x32xf32>
    %109 = vector.broadcast %108 : vector<1x32xf32> to vector<10x32xf32>
    %110 = arith.mulf %106, %109 : vector<10x32xf32>
    %c0_42 = arith.constant 0 : index
    %c0_43 = arith.constant 0 : index
    %c0_44 = arith.constant 0 : index
    %111 = vector.load %arg9[%c0_42, %c0_43, %c0_44] : memref<2x1x32xf32, #tpu.memory_space<vmem>>, vector<1x1x32xf32>
    %112 = vector.shape_cast %111 : vector<1x1x32xf32> to vector<1x32xf32>
    %113 = vector.broadcast %112 : vector<1x32xf32> to vector<10x32xf32>
    %114 = arith.addf %110, %113 : vector<10x32xf32>
    %c0_45 = arith.constant 0 : index
    %c0_46 = arith.constant 0 : index
    %c0_47 = arith.constant 0 : index
    %115 = vector.load %arg10[%c0_45, %c0_46, %c0_47] : memref<2x32x32xf32, #tpu.memory_space<vmem>>, vector<1x32x32xf32>
    %116 = vector.shape_cast %115 : vector<1x32x32xf32> to vector<32x32xf32>
    %cst_48 = arith.constant dense<0.000000e+00> : vector<10x32xf32>
    %117 = tpu.matmul %114, %116, %cst_48 {dimension_numbers = #tpu.dot_dimension_numbers<[1], [0], [0], [1], [0, 0, 1, 1], [], []>} : vector<10x32xf32>, vector<32x32xf32>, vector<10x32xf32> -> vector<10x32xf32>
    %c0_49 = arith.constant 0 : index
    %c0_50 = arith.constant 0 : index
    %c0_51 = arith.constant 0 : index
    %118 = vector.load %arg11[%c0_49, %c0_50, %c0_51] : memref<2x1x32xf32, #tpu.memory_space<vmem>>, vector<1x1x32xf32>
    %119 = vector.shape_cast %118 : vector<1x1x32xf32> to vector<1x32xf32>
    %120 = vector.broadcast %119 : vector<1x32xf32> to vector<10x32xf32>
    %121 = arith.addf %117, %120 : vector<10x32xf32>
    %122 = vector.extract_strided_slice %121 {offsets = [0, 0], sizes = [10, 16], strides = [1, 1]} : vector<10x32xf32> to vector<10x16xf32>
    %123 = arith.addf %1, %122 : vector<10x16xf32>
    %124 = vector.extract_strided_slice %121 {offsets = [0, 16], sizes = [10, 16], strides = [1, 1]} : vector<10x32xf32> to vector<10x16xf32>
    %125 = arith.addf %2, %124 : vector<10x16xf32>
    %c1_52 = arith.constant 1 : index
    %c0_53 = arith.constant 0 : index
    %126 = vector.load %arg12[%c1_52, %c0_53] : memref<2x2xf32, #tpu.memory_space<vmem>>, vector<1x1xf32>
    %127 = vector.extract %126[0, 0] : f32 from vector<1x1xf32>
    %c1_54 = arith.constant 1 : index
    %c1_55 = arith.constant 1 : index
    %128 = vector.load %arg12[%c1_54, %c1_55] : memref<2x2xf32, #tpu.memory_space<vmem>>, vector<1x1xf32>
    %129 = vector.extract %128[0, 0] : f32 from vector<1x1xf32>
    %c1_56 = arith.constant 1 : index
    %c0_57 = arith.constant 0 : index
    %c0_58 = arith.constant 0 : index
    %130 = vector.load %arg2[%c1_56, %c0_57, %c0_58] : memref<2x16x32xf32, #tpu.memory_space<vmem>>, vector<1x16x32xf32>
    %131 = vector.shape_cast %130 : vector<1x16x32xf32> to vector<16x32xf32>
    %cst_59 = arith.constant dense<0.000000e+00> : vector<10x32xf32>
    %132 = tpu.matmul %123, %131, %cst_59 {dimension_numbers = #tpu.dot_dimension_numbers<[1], [0], [0], [1], [0, 0, 1, 1], [], []>} : vector<10x16xf32>, vector<16x32xf32>, vector<10x32xf32> -> vector<10x32xf32>
    %c1_60 = arith.constant 1 : index
    %c0_61 = arith.constant 0 : index
    %c0_62 = arith.constant 0 : index
    %133 = vector.load %arg3[%c1_60, %c0_61, %c0_62] : memref<2x1x32xf32, #tpu.memory_space<vmem>>, vector<1x1x32xf32>
    %134 = vector.shape_cast %133 : vector<1x1x32xf32> to vector<1x32xf32>
    %135 = vector.broadcast %134 : vector<1x32xf32> to vector<10x32xf32>
    %136 = arith.addf %132, %135 : vector<10x32xf32>
    %cst_63 = arith.constant 0.000000e+00 : f32
    %137 = vector.broadcast %cst_63 : f32 to vector<10x32xf32>
    %138 = arith.cmpf oge, %136, %137 : vector<10x32xf32>
    %139 = vector.broadcast %127 : f32 to vector<10x32xf32>
    %140 = arith.mulf %139, %136 : vector<10x32xf32>
    %141 = arith.select %138, %136, %140 : vector<10x32xi1>, vector<10x32xf32>
    %142 = vector.shape_cast %141 : vector<10x32xf32> to vector<1x10x32xf32>
    %cst_64 = arith.constant dense<0.000000e+00> : vector<1xf32>
    %143 = vector.multi_reduction <add>, %142, %cst_64 [1, 2] : vector<1x10x32xf32> to vector<1xf32>
    %144 = vector.shape_cast %143 : vector<1xf32> to vector<1x1x1xf32>
    %145 = vector.extract %144[0, 0, 0] : f32 from vector<1x1x1xf32>
    %cst_65 = arith.constant 3.200000e+02 : f32
    %146 = arith.divf %145, %cst_65 : f32
    %147 = arith.mulf %141, %141 : vector<10x32xf32>
    %148 = vector.shape_cast %147 : vector<10x32xf32> to vector<1x10x32xf32>
    %cst_66 = arith.constant dense<0.000000e+00> : vector<1xf32>
    %149 = vector.multi_reduction <add>, %148, %cst_66 [1, 2] : vector<1x10x32xf32> to vector<1xf32>
    %150 = vector.shape_cast %149 : vector<1xf32> to vector<1x1x1xf32>
    %151 = vector.extract %150[0, 0, 0] : f32 from vector<1x1x1xf32>
    %cst_67 = arith.constant 3.200000e+02 : f32
    %152 = arith.divf %151, %cst_67 : f32
    %153 = arith.mulf %146, %146 : f32
    %154 = arith.subf %152, %153 : f32
    %155 = vector.broadcast %146 : f32 to vector<10x32xf32>
    %156 = arith.subf %141, %155 : vector<10x32xf32>
    %cst_68 = arith.constant 9.99999993E-9 : f32
    %157 = arith.addf %154, %cst_68 : f32
    %158 = math.rsqrt %157 : f32
    %159 = vector.broadcast %158 : f32 to vector<10x32xf32>
    %160 = arith.mulf %156, %159 : vector<10x32xf32>
    %c1_69 = arith.constant 1 : index
    %c0_70 = arith.constant 0 : index
    %c0_71 = arith.constant 0 : index
    %161 = vector.load %arg4[%c1_69, %c0_70, %c0_71] : memref<2x1x32xf32, #tpu.memory_space<vmem>>, vector<1x1x32xf32>
    %162 = vector.shape_cast %161 : vector<1x1x32xf32> to vector<1x32xf32>
    %163 = vector.broadcast %162 : vector<1x32xf32> to vector<10x32xf32>
    %164 = arith.mulf %160, %163 : vector<10x32xf32>
    %c1_72 = arith.constant 1 : index
    %c0_73 = arith.constant 0 : index
    %c0_74 = arith.constant 0 : index
    %165 = vector.load %arg5[%c1_72, %c0_73, %c0_74] : memref<2x1x32xf32, #tpu.memory_space<vmem>>, vector<1x1x32xf32>
    %166 = vector.shape_cast %165 : vector<1x1x32xf32> to vector<1x32xf32>
    %167 = vector.broadcast %166 : vector<1x32xf32> to vector<10x32xf32>
    %168 = arith.addf %164, %167 : vector<10x32xf32>
    %169 = arith.subi %3, %4 : vector<10x10xi32>
    %c2_i32 = arith.constant 2 : i32
    %170 = vector.broadcast %c2_i32 : i32 to vector<10x10xi32>
    %171 = arith.cmpi eq, %169, %170 : vector<10x10xi32>
    %172 = arith.extui %171 : vector<10x10xi1> to vector<10x10xi32>
    %173 = arith.sitofp %172 : vector<10x10xi32> to vector<10x10xf32>
    %174 = arith.subi %4, %3 : vector<10x10xi32>
    %c2_i32_75 = arith.constant 2 : i32
    %175 = vector.broadcast %c2_i32_75 : i32 to vector<10x10xi32>
    %176 = arith.cmpi eq, %174, %175 : vector<10x10xi32>
    %177 = arith.extui %176 : vector<10x10xi1> to vector<10x10xi32>
    %178 = arith.sitofp %177 : vector<10x10xi32> to vector<10x10xf32>
    %c1_76 = arith.constant 1 : index
    %c0_77 = arith.constant 0 : index
    %c0_78 = arith.constant 0 : index
    %179 = vector.load %arg6[%c1_76, %c0_77, %c0_78] : memref<2x3x32xf32, #tpu.memory_space<vmem>>, vector<1x3x32xf32>
    %180 = vector.shape_cast %179 : vector<1x3x32xf32> to vector<3x32xf32>
    %181 = vector.extract_strided_slice %180 {offsets = [0, 0], sizes = [1, 32], strides = [1, 1]} : vector<3x32xf32> to vector<1x32xf32>
    %182 = vector.shape_cast %181 : vector<1x32xf32> to vector<32xf32>
    %cst_79 = arith.constant dense<0.000000e+00> : vector<10x32xf32>
    %183 = tpu.matmul %173, %168, %cst_79 {dimension_numbers = #tpu.dot_dimension_numbers<[1], [0], [0], [1], [0, 0, 1, 1], [], []>} : vector<10x10xf32>, vector<10x32xf32>, vector<10x32xf32> -> vector<10x32xf32>
    %184 = vector.shape_cast %182 : vector<32xf32> to vector<1x32xf32>
    %185 = vector.broadcast %184 : vector<1x32xf32> to vector<10x32xf32>
    %186 = arith.mulf %185, %183 : vector<10x32xf32>
    %187 = vector.extract_strided_slice %180 {offsets = [1, 0], sizes = [1, 32], strides = [1, 1]} : vector<3x32xf32> to vector<1x32xf32>
    %188 = vector.shape_cast %187 : vector<1x32xf32> to vector<32xf32>
    %189 = vector.shape_cast %188 : vector<32xf32> to vector<1x32xf32>
    %190 = vector.broadcast %189 : vector<1x32xf32> to vector<10x32xf32>
    %191 = arith.mulf %190, %168 : vector<10x32xf32>
    %192 = arith.addf %186, %191 : vector<10x32xf32>
    %193 = vector.extract_strided_slice %180 {offsets = [2, 0], sizes = [1, 32], strides = [1, 1]} : vector<3x32xf32> to vector<1x32xf32>
    %194 = vector.shape_cast %193 : vector<1x32xf32> to vector<32xf32>
    %cst_80 = arith.constant dense<0.000000e+00> : vector<10x32xf32>
    %195 = tpu.matmul %178, %168, %cst_80 {dimension_numbers = #tpu.dot_dimension_numbers<[1], [0], [0], [1], [0, 0, 1, 1], [], []>} : vector<10x10xf32>, vector<10x32xf32>, vector<10x32xf32> -> vector<10x32xf32>
    %196 = vector.shape_cast %194 : vector<32xf32> to vector<1x32xf32>
    %197 = vector.broadcast %196 : vector<1x32xf32> to vector<10x32xf32>
    %198 = arith.mulf %197, %195 : vector<10x32xf32>
    %199 = arith.addf %192, %198 : vector<10x32xf32>
    %c1_81 = arith.constant 1 : index
    %c0_82 = arith.constant 0 : index
    %c0_83 = arith.constant 0 : index
    %200 = vector.load %arg7[%c1_81, %c0_82, %c0_83] : memref<2x1x32xf32, #tpu.memory_space<vmem>>, vector<1x1x32xf32>
    %201 = vector.shape_cast %200 : vector<1x1x32xf32> to vector<1x32xf32>
    %202 = vector.broadcast %201 : vector<1x32xf32> to vector<10x32xf32>
    %203 = arith.addf %199, %202 : vector<10x32xf32>
    %cst_84 = arith.constant 0.000000e+00 : f32
    %204 = vector.broadcast %cst_84 : f32 to vector<10x32xf32>
    %205 = arith.cmpf oge, %203, %204 : vector<10x32xf32>
    %206 = vector.broadcast %129 : f32 to vector<10x32xf32>
    %207 = arith.mulf %206, %203 : vector<10x32xf32>
    %208 = arith.select %205, %203, %207 : vector<10x32xi1>, vector<10x32xf32>
    %209 = vector.shape_cast %208 : vector<10x32xf32> to vector<1x10x32xf32>
    %cst_85 = arith.constant dense<0.000000e+00> : vector<1xf32>
    %210 = vector.multi_reduction <add>, %209, %cst_85 [1, 2] : vector<1x10x32xf32> to vector<1xf32>
    %211 = vector.shape_cast %210 : vector<1xf32> to vector<1x1x1xf32>
    %212 = vector.extract %211[0, 0, 0] : f32 from vector<1x1x1xf32>
    %cst_86 = arith.constant 3.200000e+02 : f32
    %213 = arith.divf %212, %cst_86 : f32
    %214 = arith.mulf %208, %208 : vector<10x32xf32>
    %215 = vector.shape_cast %214 : vector<10x32xf32> to vector<1x10x32xf32>
    %cst_87 = arith.constant dense<0.000000e+00> : vector<1xf32>
    %216 = vector.multi_reduction <add>, %215, %cst_87 [1, 2] : vector<1x10x32xf32> to vector<1xf32>
    %217 = vector.shape_cast %216 : vector<1xf32> to vector<1x1x1xf32>
    %218 = vector.extract %217[0, 0, 0] : f32 from vector<1x1x1xf32>
    %cst_88 = arith.constant 3.200000e+02 : f32
    %219 = arith.divf %218, %cst_88 : f32
    %220 = arith.mulf %213, %213 : f32
    %221 = arith.subf %219, %220 : f32
    %222 = vector.broadcast %213 : f32 to vector<10x32xf32>
    %223 = arith.subf %208, %222 : vector<10x32xf32>
    %cst_89 = arith.constant 9.99999993E-9 : f32
    %224 = arith.addf %221, %cst_89 : f32
    %225 = math.rsqrt %224 : f32
    %226 = vector.broadcast %225 : f32 to vector<10x32xf32>
    %227 = arith.mulf %223, %226 : vector<10x32xf32>
    %c1_90 = arith.constant 1 : index
    %c0_91 = arith.constant 0 : index
    %c0_92 = arith.constant 0 : index
    %228 = vector.load %arg8[%c1_90, %c0_91, %c0_92] : memref<2x1x32xf32, #tpu.memory_space<vmem>>, vector<1x1x32xf32>
    %229 = vector.shape_cast %228 : vector<1x1x32xf32> to vector<1x32xf32>
    %230 = vector.broadcast %229 : vector<1x32xf32> to vector<10x32xf32>
    %231 = arith.mulf %227, %230 : vector<10x32xf32>
    %c1_93 = arith.constant 1 : index
    %c0_94 = arith.constant 0 : index
    %c0_95 = arith.constant 0 : index
    %232 = vector.load %arg9[%c1_93, %c0_94, %c0_95] : memref<2x1x32xf32, #tpu.memory_space<vmem>>, vector<1x1x32xf32>
    %233 = vector.shape_cast %232 : vector<1x1x32xf32> to vector<1x32xf32>
    %234 = vector.broadcast %233 : vector<1x32xf32> to vector<10x32xf32>
    %235 = arith.addf %231, %234 : vector<10x32xf32>
    %c1_96 = arith.constant 1 : index
    %c0_97 = arith.constant 0 : index
    %c0_98 = arith.constant 0 : index
    %236 = vector.load %arg10[%c1_96, %c0_97, %c0_98] : memref<2x32x32xf32, #tpu.memory_space<vmem>>, vector<1x32x32xf32>
    %237 = vector.shape_cast %236 : vector<1x32x32xf32> to vector<32x32xf32>
    %cst_99 = arith.constant dense<0.000000e+00> : vector<10x32xf32>
    %238 = tpu.matmul %235, %237, %cst_99 {dimension_numbers = #tpu.dot_dimension_numbers<[1], [0], [0], [1], [0, 0, 1, 1], [], []>} : vector<10x32xf32>, vector<32x32xf32>, vector<10x32xf32> -> vector<10x32xf32>
    %c1_100 = arith.constant 1 : index
    %c0_101 = arith.constant 0 : index
    %c0_102 = arith.constant 0 : index
    %239 = vector.load %arg11[%c1_100, %c0_101, %c0_102] : memref<2x1x32xf32, #tpu.memory_space<vmem>>, vector<1x1x32xf32>
    %240 = vector.shape_cast %239 : vector<1x1x32xf32> to vector<1x32xf32>
    %241 = vector.broadcast %240 : vector<1x32xf32> to vector<10x32xf32>
    %242 = arith.addf %238, %241 : vector<10x32xf32>
    %243 = vector.extract_strided_slice %242 {offsets = [0, 16], sizes = [10, 16], strides = [1, 1]} : vector<10x32xf32> to vector<10x16xf32>
    %244 = arith.addf %125, %243 : vector<10x16xf32>
    %c0_103 = arith.constant 0 : index
    %c0_104 = arith.constant 0 : index
    %c0_105 = arith.constant 0 : index
    %245 = vector.load %arg13[%c0_103, %c0_104, %c0_105] : memref<1x10x16xf32, #tpu.memory_space<vmem>>, vector<1x10x16xf32>
    %246 = vector.shape_cast %245 : vector<1x10x16xf32> to vector<10x16xf32>
    %247 = vector.shape_cast %244 : vector<10x16xf32> to vector<1x10x16xf32>
    tpu.vector_store %arg13[%c0_103, %c0_104, %c0_105], %247 {strides = array<i32>} : memref<1x10x16xf32, #tpu.memory_space<vmem>>, vector<1x10x16xf32>,
    return
  }
  func.func @transform_0(%arg0: i32) -> (i32, i32, i32) {
    %c0_i32 = arith.constant 0 : i32
    %c0_i32_0 = arith.constant 0 : i32
    %c0_i32_1 = arith.constant 0 : i32
    return %arg0, %c0_i32, %c0_i32_0 : i32, i32, i32
  }
  func.func @transform_1(%arg0: i32) -> (i32, i32, i32) {
    %c0_i32 = arith.constant 0 : i32
    %c0_i32_0 = arith.constant 0 : i32
    %c0_i32_1 = arith.constant 0 : i32
    %c0_i32_2 = arith.constant 0 : i32
    return %c0_i32, %c0_i32_0, %c0_i32_1 : i32, i32, i32
  }
  func.func @transform_2(%arg0: i32) -> (i32, i32, i32) {
    %c0_i32 = arith.constant 0 : i32
    %c0_i32_0 = arith.constant 0 : i32
    %c0_i32_1 = arith.constant 0 : i32
    %c0_i32_2 = arith.constant 0 : i32
    return %c0_i32, %c0_i32_0, %c0_i32_1 : i32, i32, i32
  }
  func.func @transform_3(%arg0: i32) -> (i32, i32, i32) {
    %c0_i32 = arith.constant 0 : i32
    %c0_i32_0 = arith.constant 0 : i32
    %c0_i32_1 = arith.constant 0 : i32
    %c0_i32_2 = arith.constant 0 : i32
    return %c0_i32, %c0_i32_0, %c0_i32_1 : i32, i32, i32
  }
  func.func @transform_4(%arg0: i32) -> (i32, i32, i32) {
    %c0_i32 = arith.constant 0 : i32
    %c0_i32_0 = arith.constant 0 : i32
    %c0_i32_1 = arith.constant 0 : i32
    %c0_i32_2 = arith.constant 0 : i32
    return %c0_i32, %c0_i32_0, %c0_i32_1 : i32, i32, i32
  }
  func.func @transform_5(%arg0: i32) -> (i32, i32, i32) {
    %c0_i32 = arith.constant 0 : i32
    %c0_i32_0 = arith.constant 0 : i32
    %c0_i32_1 = arith.constant 0 : i32
    %c0_i32_2 = arith.constant 0 : i32
    return %c0_i32, %c0_i32_0, %c0_i32_1 : i32, i32, i32
  }
  func.func @transform_6(%arg0: i32) -> (i32, i32, i32) {
    %c0_i32 = arith.constant 0 : i32
    %c0_i32_0 = arith.constant 0 : i32
    %c0_i32_1 = arith.constant 0 : i32
    %c0_i32_2 = arith.constant 0 : i32
    return %c0_i32, %c0_i32_0, %c0_i32_1 : i32, i32, i32
  }
  func.func @transform_7(%arg0: i32) -> (i32, i32, i32) {
    %c0_i32 = arith.constant 0 : i32
    %c0_i32_0 = arith.constant 0 : i32
    %c0_i32_1 = arith.constant 0 : i32
    %c0_i32_2 = arith.constant 0 : i32
    return %c0_i32, %c0_i32_0, %c0_i32_1 : i32, i32, i32
  }
  func.func @transform_8(%arg0: i32) -> (i32, i32, i32) {
    %c0_i32 = arith.constant 0 : i32
    %c0_i32_0 = arith.constant 0 : i32
    %c0_i32_1 = arith.constant 0 : i32
    %c0_i32_2 = arith.constant 0 : i32
    return %c0_i32, %c0_i32_0, %c0_i32_1 : i32, i32, i32
  }
  func.func @transform_9(%arg0: i32) -> (i32, i32, i32) {
    %c0_i32 = arith.constant 0 : i32
    %c0_i32_0 = arith.constant 0 : i32
    %c0_i32_1 = arith.constant 0 : i32
    %c0_i32_2 = arith.constant 0 : i32
    return %c0_i32, %c0_i32_0, %c0_i32_1 : i32, i32, i32
  }
  func.func @transform_10(%arg0: i32) -> (i32, i32, i32) {
    %c0_i32 = arith.constant 0 : i32
    %c0_i32_0 = arith.constant 0 : i32
    %c0_i32_1 = arith.constant 0 : i32
    %c0_i32_2 = arith.constant 0 : i32
    return %c0_i32, %c0_i32_0, %c0_i32_1 : i32, i32, i32
  }
  func.func @transform_11(%arg0: i32) -> (i32, i32) {
    %c0_i32 = arith.constant 0 : i32
    %c0_i32_0 = arith.constant 0 : i32
    %c0_i32_1 = arith.constant 0 : i32
    return %c0_i32, %c0_i32_0 : i32, i32
  }
  func.func @transform_12(%arg0: i32) -> (i32, i32, i32) {
    %c0_i32 = arith.constant 0 : i32
    %c0_i32_0 = arith.constant 0 : i32
    %c0_i32_1 = arith.constant 0 : i32
    return %arg0, %c0_i32, %c0_i32_0 : i32, i32, i32
  }
}

</mosaic_0001>

<llo_original>
// kernel: y_net_forward.3
$region0: #{y_net_forward.3}
  #allocation0 [shape = 'u32[]', space=smem, size = 0x4, offset = 0x4, fixed_abs, tag = 'smem constant byte address 0x4 - core index']
  #allocation1 [shape = 'u32[144,128]{1,0:T(1,128)}', space=vmem, size = 0x12000, scoped, tag = 'internal scratch']
  %s0 = inlined_call_operand.vmem [shape: f32[2,11,8], index: 0, kind: input, shape index: {}]
  %s1 = inlined_call_operand.vmem [shape: f32[16,16], index: 1, kind: input, shape index: {}]
  %s2 = inlined_call_operand.vmem [shape: f32[1,16], index: 2, kind: input, shape index: {}]
  %s3 = inlined_call_operand.vmem [shape: f32[1,16], index: 3, kind: input, shape index: {}]
  %s4 = inlined_call_operand.vmem [shape: f32[2,10,16], index: 4, kind: output, shape index: {}]
  %s5 = sld [smem:[#allocation0]]
  $region49: #{y_net_forward.3} parent=0
    _
  %s7 = ssub.s32 1, %s5
  %s8 = scalar_select 0, %s7, %s5
  loop: start=0, step=1, limit=4
  $region2: #{y_net_forward.3} parent=0 // loop_pre_header
    _
  $region3: #{y_net_forward.3} parent=0 // loop_header
    %s10 = sphi 0, %s14
    %p11 = scmp.ge.s32.totalorder %s10, 4
    %s20 = sphi 0, %s22
    %s23 = sphi 0, %s20
    %s24 = sphi 0, %s23
    %s40 = sphi 0, %s24
    %s44 = sphi 0, %s44
    %s46 = sphi 0, %s44
    %s47 = sphi 0, %s46
    %s61 = sphi 0, %s47
    %s65 = sphi 0, %s65
    %s67 = sphi 0, %s65
    %s68 = sphi 0, %s67
    %s82 = sphi 0, %s68
    %s86 = sphi 0, %s86
    %s88 = sphi 0, %s86
    %s89 = sphi 0, %s88
    %s103 = sphi 0, %s89
    %s109 = sphi 0, %s111
    %s112 = sphi 0, %s109
    %s113 = sphi 0, %s112
    %s129 = sphi 0, %s113
  $region4: #{y_net_forward.3} parent=0 // loop_header_branch
    %13 = sbr.rel (%p11) target = $region8
  $region5: #{y_net_forward.3} parent=0 // loop_body
    %s15 = ssub.s32 %s10, 1
    %s16 = ssub.s32 %s10, 2
    %s17 = sadd.s32 %s10, 1
    %s18 = ssub.s32 %s10, %s17
    %p19 = scmp.eq.s32.totalorder %s18, 0
    %s21 = sadd.s32 %s20, 1
    %s22 = scalar_select %p19, %s20, %s21
    %p25 = pneg %p19
    %p26 = scmp.eq.s32.totalorder %s10, 1
    %p27 = por %p25, %p26
    %p28 = scmp.ne.s32.totalorder %s20, %s23
    %p29 = scmp.eq.s32.totalorder %s10, 0
    %p30 = por %p28, %p29
    %p31 = scmp.ne.s32.totalorder %s20, %s23
    %p32 = scmp.eq.s32.totalorder %s15, 1
    %p33 = por %p31, %p32
    %p34 = scmp.ne.s32.totalorder %s23, %s24
    %p35 = scmp.eq.s32.totalorder %s15, 0
    %p36 = por %p34, %p35
    %p37 = scmp.ne.s32.totalorder %s23, %s24
    %p38 = scmp.eq.s32.totalorder %s16, 1
    %p39 = por %p37, %p38
    %p41 = scmp.ne.s32.totalorder %s24, %s40
    %p42 = scmp.eq.s32.totalorder %s16, 0
    %p43 = por %p41, %p42
    %s45 = sadd.s32 %s44, 1
    %p48 = scmp.eq.s32.totalorder %s10, 1
    %p49 = scmp.ne.s32.totalorder %s44, %s46
    %p50 = scmp.eq.s32.totalorder %s10, 0
    %p51 = por %p49, %p50
    %p52 = scmp.ne.s32.totalorder %s44, %s46
    %p53 = scmp.eq.s32.totalorder %s15, 1
    %p54 = por %p52, %p53
    %p55 = scmp.ne.s32.totalorder %s46, %s47
    %p56 = scmp.eq.s32.totalorder %s15, 0
    %p57 = por %p55, %p56
    %p58 = scmp.ne.s32.totalorder %s46, %s47
    %p59 = scmp.eq.s32.totalorder %s16, 1
    %p60 = por %p58, %p59
    %p62 = scmp.ne.s32.totalorder %s47, %s61
    %p63 = scmp.eq.s32.totalorder %s16, 0
    %p64 = por %p62, %p63
    %s66 = sadd.s32 %s65, 1
    %p69 = scmp.eq.s32.totalorder %s10, 1
    %p70 = scmp.ne.s32.totalorder %s65, %s67
    %p71 = scmp.eq.s32.totalorder %s10, 0
    %p72 = por %p70, %p71
    %p73 = scmp.ne.s32.totalorder %s65, %s67
    %p74 = scmp.eq.s32.totalorder %s15, 1
    %p75 = por %p73, %p74
    %p76 = scmp.ne.s32.totalorder %s67, %s68
    %p77 = scmp.eq.s32.totalorder %s15, 0
    %p78 = por %p76, %p77
    %p79 = scmp.ne.s32.totalorder %s67, %s68
    %p80 = scmp.eq.s32.totalorder %s16, 1
    %p81 = por %p79, %p80
    %p83 = scmp.ne.s32.totalorder %s68, %s82
    %p84 = scmp.eq.s32.totalorder %s16, 0
    %p85 = por %p83, %p84
    %s87 = sadd.s32 %s86, 1
    %p90 = scmp.eq.s32.totalorder %s10, 1
    %p91 = scmp.ne.s32.totalorder %s86, %s88
    %p92 = scmp.eq.s32.totalorder %s10, 0
    %p93 = por %p91, %p92
    %p94 = scmp.ne.s32.totalorder %s86, %s88
    %p95 = scmp.eq.s32.totalorder %s15, 1
    %p96 = por %p94, %p95
    %p97 = scmp.ne.s32.totalorder %s88, %s89
    %p98 = scmp.eq.s32.totalorder %s15, 0
    %p99 = por %p97, %p98
    %p100 = scmp.ne.s32.totalorder %s88, %s89
    %p101 = scmp.eq.s32.totalorder %s16, 1
    %p102 = por %p100, %p101
    %p104 = scmp.ne.s32.totalorder %s89, %s103
    %p105 = scmp.eq.s32.totalorder %s16, 0
    %p106 = por %p104, %p105
    %s107 = ssub.s32 %s10, %s17
    %p108 = scmp.eq.s32.totalorder %s107, 0
    %s110 = sadd.s32 %s109, 1
    %s111 = scalar_select %p108, %s109, %s110
    %p114 = pneg %p108
    %p115 = scmp.eq.s32.totalorder %s10, 1
    %p116 = por %p114, %p115
    %p117 = scmp.ne.s32.totalorder %s109, %s112
    %p118 = scmp.eq.s32.totalorder %s10, 0
    %p119 = por %p117, %p118
    %p120 = scmp.ne.s32.totalorder %s109, %s112
    %p121 = scmp.eq.s32.totalorder %s15, 1
    %p122 = por %p120, %p121
    %p123 = scmp.ne.s32.totalorder %s112, %s113
    %p124 = scmp.eq.s32.totalorder %s15, 0
    %p125 = por %p123, %p124
    %p126 = scmp.ne.s32.totalorder %s112, %s113
    %p127 = scmp.eq.s32.totalorder %s16, 1
    %p128 = por %p126, %p127
    %p130 = scmp.ne.s32.totalorder %s113, %s129
    %p131 = scmp.eq.s32.totalorder %s16, 0
    %p132 = por %p130, %p131
    %p133 = scmp.le.s32.totalorder 1, %s10
    %p134 = scmp.lt.s32.totalorder %s10, 3
    %p135 = pnand %p133, %p134
    %p136 = pneg %p135
    // Predicated region
    $region9: #{y_net_forward.3} parent=5 // pred_check
      _
    $region10: #{y_net_forward.3} parent=5 // pred_check_branch
      %138 = sbr.rel (%p135) target = $region12
    $region11: #{y_net_forward.3} parent=5 // pred_region
      %s139 = ssub.s32 %s10, 1
      // Predicated region
      $region13: #{y_net_forward.3} parent=11 // pred_check
        %p140 = pneg %p57
      $region14: #{y_net_forward.3} parent=11 // pred_check_branch
        %142 = sbr.rel (%p140) target = $region16
      $region15: #{y_net_forward.3} parent=11 // pred_region
        _
      $region16: #{y_net_forward.3} parent=11 // pred_fallthru
        _
      // Predicated region
      $region17: #{y_net_forward.3} parent=11 // pred_check
        %p143 = pneg %p78
      $region18: #{y_net_forward.3} parent=11 // pred_check_branch
        %145 = sbr.rel (%p143) target = $region20
      $region19: #{y_net_forward.3} parent=11 // pred_region
        _
      $region20: #{y_net_forward.3} parent=11 // pred_fallthru
        _
      // Predicated region
      $region21: #{y_net_forward.3} parent=11 // pred_check
        %p146 = pneg %p99
      $region22: #{y_net_forward.3} parent=11 // pred_check_branch
        %148 = sbr.rel (%p146) target = $region24
      $region23: #{y_net_forward.3} parent=11 // pred_region
        _
      $region24: #{y_net_forward.3} parent=11 // pred_fallthru
        _
    $region12: #{y_net_forward.3} parent=5 // pred_fallthru
      _
    %p149 = scmp.lt.s32.totalorder %s10, 2
    // Predicated region
    $region25: #{y_net_forward.3} parent=5 // pred_check
      %p150 = pneg %p149
    $region26: #{y_net_forward.3} parent=5 // pred_check_branch
      %152 = sbr.rel (%p150) target = $region28
    $region27: #{y_net_forward.3} parent=5 // pred_region
      // Predicated region
      $region29: #{y_net_forward.3} parent=27 // pred_check
        %p153 = pneg %p30
      $region30: #{y_net_forward.3} parent=27 // pred_check_branch
        %155 = sbr.rel (%p153) target = $region32
      $region31: #{y_net_forward.3} parent=27 // pred_region
        %p156 = scmp.lt.s32.totalorder %s10, 1
        %s157 = scalar_select %p156, %s10, 1
        %s158 = smul.addr %s157, 2
        %s159 = smul.addr %s158, 8
        %s160 = scalar_lea.vmem %s0, %s159
      $region32: #{y_net_forward.3} parent=27 // pred_fallthru
        _
    $region28: #{y_net_forward.3} parent=5 // pred_fallthru
      _
    %p161 = scmp.le.s32.totalorder 1, %s10
    %p162 = scmp.lt.s32.totalorder %s10, 3
    %p163 = pnand %p161, %p162
    %p164 = pneg %p163
    // Predicated region
    $region33: #{y_net_forward.3} parent=5 // pred_check
      _
    $region34: #{y_net_forward.3} parent=5 // pred_check_branch
      %166 = sbr.rel (%p163) target = $region36
    $region35: #{y_net_forward.3} parent=5 // pred_region
      %s167 = ssub.s32 %s10, 1
      %p168 = scmp.lt.s32.totalorder %s15, 1
      %s169 = scalar_select %p168, %s15, 1
      %s170 = smul.addr %s169, 2
      %s171 = smul.addr %s170, 8
      %s172 = scalar_lea.vmem %s0, %s171
      %p173 = pneg %p36
      %p174 = pneg %p33
      %p175 = pneg %p57
      %p176 = pneg %p54
      %p177 = pneg %p78
      %p178 = pneg %p75
      %p179 = pneg %p99
      %p180 = pneg %p96
      %p181 = pneg %p125
      %p182 = pneg %p122
      %p183 = scmp.lt.s32.totalorder %s15, 1
      %s184 = scalar_select %p183, %s15, 1
      %s185 = smul.addr %s184, 2
      %s186 = smul.addr %s185, 8
      %s187 = scalar_lea.vmem %s4, %s186
      %p188 = scmp.lt.s32.totalorder %s15, 1
      %s189 = scalar_select %p188, %s15, 1
      %s190 = smul.addr %s189, 2
      %s191 = smul.addr %s190, 8
      %s192 = scalar_lea.vmem %s0, %s191
      %p193 = scmp.lt.s32.totalorder %s15, 1
      %s194 = scalar_select %p193, %s15, 1
      %s195 = smul.addr %s194, 2
      %s196 = smul.addr %s195, 8
      %s197 = scalar_lea.vmem %s4, %s196
      %v198 = vld [vmem:[%s192] sm:$0xff]
      %v199 = vld [vmem:[%s192 + $0x8] sm:$0x7]
      %v200 = vld [vmem:[%s1] sm:$0xff]
      %v201 = vld [vmem:[%s1 + $0x8] sm:$0xff]
      %vm204 = vcmask 1046528
      %v205 = vrot.slane %v198, 1
      %v206 = vrot.slane %v199, 1
      %v207 = vsel %vm204, %v205, %v206
      %vm208 = vcmask 64512
      %v209 = vsel %vm208, %v207, 0
      %v211 = vsel %vm208, %v206, 0
      %213 = vmatprep.subr.mxu0 0.0
      %214 = vmatpush1.msra.mxu0 0.0
      %215 = vmatprep.subr.mxu0 0.0
      %216 = vmatpush1.msra.mxu0 0.0
      %217 = vmatprep.subr.mxu0 0.0
      %218 = vmatpush1.msra.mxu0 0.0
      %219 = vmatprep.subr.mxu0 0.0
      %220 = vmatpush1.msra.mxu0 0.0
      %221 = vmatprep.subr.mxu0 0.0
      %222 = vmatpush1.msra.mxu0 0.0
      %223 = vmatprep.subr.mxu0 0.0
      %224 = vmatpush1.msra.mxu0 0.0
      %225 = vmatprep.subr.mxu0 0.0
      %226 = vmatpush1.msra.mxu0 0.0
      %227 = vmatprep.subr.mxu0 0.0
      %228 = vmatpush1.msra.mxu0 0.0
      %229 = vmatprep.subr.mxu0 0.0
      %230 = vmatpush1.msra.mxu0 0.0
      %231 = vmatprep.subr.mxu0 0.0
      %232 = vmatpush1.msra.mxu0 0.0
      %233 = vmatprep.subr.mxu0 0.0
      %234 = vmatpush1.msra.mxu0 0.0
      %235 = vmatprep.subr.mxu0 0.0
      %236 = vmatpush1.msra.mxu0 0.0
      %237 = vmatprep.subr.mxu0 0.0
      %238 = vmatpush1.msra.mxu0 0.0
      %239 = vmatprep.subr.mxu0 0.0
      %240 = vmatpush1.msra.mxu0 0.0
      %241 = vmatprep.subr.mxu0 0.0
      %242 = vmatpush1.msra.mxu0 0.0
      %243 = vmatprep.subr.mxu0 0.0
      %244 = vmatpush1.msra.mxu0 %v201
      %245 = vmatprep.subr.mxu0 0.0
      %246 = vmatpush2.msra.mxu0 0.0
      %247 = vmatprep.subr.mxu0 0.0
      %248 = vmatpush2.msra.mxu0 0.0
      %249 = vmatprep.subr.mxu0 0.0
      %250 = vmatpush2.msra.mxu0 0.0
      %251 = vmatprep.subr.mxu0 0.0
      %252 = vmatpush2.msra.mxu0 0.0
      %253 = vmatprep.subr.mxu0 0.0
      %254 = vmatpush2.msra.mxu0 0.0
      %255 = vmatprep.subr.mxu0 0.0
      %256 = vmatpush2.msra.mxu0 0.0
      %257 = vmatprep.subr.mxu0 0.0
      %258 = vmatpush2.msra.mxu0 0.0
      %259 = vmatprep.subr.mxu0 0.0
      %260 = vmatpush2.msra.mxu0 0.0
      %261 = vmatprep.subr.mxu0 0.0
      %262 = vmatpush2.msra.mxu0 0.0
      %263 = vmatprep.subr.mxu0 0.0
      %264 = vmatpush2.msra.mxu0 0.0
      %265 = vmatprep.subr.mxu0 0.0
      %266 = vmatpush2.msra.mxu0 0.0
      %267 = vmatprep.subr.mxu0 0.0
      %268 = vmatpush2.msra.mxu0 0.0
      %269 = vmatprep.subr.mxu0 0.0
      %270 = vmatpush2.msra.mxu0 0.0
      %271 = vmatprep.subr.mxu0 0.0
      %272 = vmatpush2.msra.mxu0 0.0
      %273 = vmatprep.subr.mxu0 0.0
      %274 = vmatpush2.msra.mxu0 0.0
      %275 = vmatprep.subr.mxu0 0.0
      %276 = vmatpush2.msra.mxu0 0.0
      %277 = vmatprep.mubr.f32.mxu0 0.0
      %278 = vmatmul.mubr.f32.gmra.mxu0 %v209
      %v279 = vpop.f32.mrf.mxu0
      %v280 = vadd.f32 0.0, %v279
      %v281 = vpop.f32.mrf.mxu0
      %282 = vmatprep.mubr.f32.mxu0 0.0
      %283 = vmatmul.mubr.f32.gmra.mxu0 %v211
      %v284 = vpop.f32.mrf.mxu0
      %v285 = vadd.f32 0.0, %v284
      %v286 = vpop.f32.mrf.mxu0
      %287 = vdwg.mxu0
      %v288 = vsel %vm208, %v198, 0
      %v290 = vsel %vm208, %v199, 0
      %292 = vmatprep.subr.mxu0 0.0
      %293 = vmatpush1.msra.mxu0 0.0
      %294 = vmatprep.subr.mxu0 0.0
      %295 = vmatpush1.msra.mxu0 0.0
      %296 = vmatprep.subr.mxu0 0.0
      %297 = vmatpush1.msra.mxu0 0.0
      %298 = vmatprep.subr.mxu0 0.0
      %299 = vmatpush1.msra.mxu0 0.0
      %300 = vmatprep.subr.mxu0 0.0
      %301 = vmatpush1.msra.mxu0 0.0
      %302 = vmatprep.subr.mxu0 0.0
      %303 = vmatpush1.msra.mxu0 0.0
      %304 = vmatprep.subr.mxu0 0.0
      %305 = vmatpush1.msra.mxu0 0.0
      %306 = vmatprep.subr.mxu0 0.0
      %307 = vmatpush1.msra.mxu0 0.0
      %308 = vmatprep.subr.mxu0 0.0
      %309 = vmatpush1.msra.mxu0 0.0
      %310 = vmatprep.subr.mxu0 0.0
      %311 = vmatpush1.msra.mxu0 0.0
      %312 = vmatprep.subr.mxu0 0.0
      %313 = vmatpush1.msra.mxu0 0.0
      %314 = vmatprep.subr.mxu0 0.0
      %315 = vmatpush1.msra.mxu0 0.0
      %316 = vmatprep.subr.mxu0 0.0
      %317 = vmatpush1.msra.mxu0 0.0
      %318 = vmatprep.subr.mxu0 0.0
      %319 = vmatpush1.msra.mxu0 0.0
      %320 = vmatprep.subr.mxu0 0.0
      %321 = vmatpush1.msra.mxu0 0.0
      %322 = vmatprep.subr.mxu0 0.0
      %323 = vmatpush1.msra.mxu0 %v200
      %324 = vmatprep.subr.mxu0 0.0
      %325 = vmatpush2.msra.mxu0 0.0
      %326 = vmatprep.subr.mxu0 0.0
      %327 = vmatpush2.msra.mxu0 0.0
      %328 = vmatprep.subr.mxu0 0.0
      %329 = vmatpush2.msra.mxu0 0.0
      %330 = vmatprep.subr.mxu0 0.0
      %331 = vmatpush2.msra.mxu0 0.0
      %332 = vmatprep.subr.mxu0 0.0
      %333 = vmatpush2.msra.mxu0 0.0
      %334 = vmatprep.subr.mxu0 0.0
      %335 = vmatpush2.msra.mxu0 0.0
      %336 = vmatprep.subr.mxu0 0.0
      %337 = vmatpush2.msra.mxu0 0.0
      %338 = vmatprep.subr.mxu0 0.0
      %339 = vmatpush2.msra.mxu0 0.0
      %340 = vmatprep.subr.mxu0 0.0
      %341 = vmatpush2.msra.mxu0 0.0
      %342 = vmatprep.subr.mxu0 0.0
      %343 = vmatpush2.msra.mxu0 0.0
      %344 = vmatprep.subr.mxu0 0.0
      %345 = vmatpush2.msra.mxu0 0.0
      %346 = vmatprep.subr.mxu0 0.0
      %347 = vmatpush2.msra.mxu0 0.0
      %348 = vmatprep.subr.mxu0 0.0
      %349 = vmatpush2.msra.mxu0 0.0
      %350 = vmatprep.subr.mxu0 0.0
      %351 = vmatpush2.msra.mxu0 0.0
      %352 = vmatprep.subr.mxu0 0.0
      %353 = vmatpush2.msra.mxu0 0.0
      %354 = vmatprep.subr.mxu0 0.0
      %355 = vmatpush2.msra.mxu0 0.0
      %356 = vmatprep.mubr.f32.mxu0 0.0
      %357 = vmatmul.mubr.f32.gmra.mxu0 %v288
      %v358 = vpop.f32.mrf.mxu0
      %v359 = vadd.f32 %v280, %v358
      %v360 = vpop.f32.mrf.mxu0
      %361 = vmatprep.mubr.f32.mxu0 0.0
      %362 = vmatmul.mubr.f32.gmra.mxu0 %v290
      %v363 = vpop.f32.mrf.mxu0
      %v364 = vadd.f32 %v285, %v363
      %v365 = vpop.f32.mrf.mxu0
      %366 = vdwg.mxu0
      %vm367 = vcmask 130048
      %v368 = vsel %vm367, %v359, 0.0
      %vm369 = vcmask 123904
      %v370 = vsel %vm369, %v364, 0.0
      %v371 = vadd.f32 %v368, %v370
      %372 = vadd.xlane.f32.xlu0 %v371
      %v373 = vpop.xlane.xlu0 %372
      %v374 = vrot.slane %v373, 4
      %v375 = vadd.f32 %v373, %v374
      %v376 = vrot.slane %v375, 2
      %v377 = vadd.f32 %v375, %v376
      %v378 = vrot.slane %v377, 1
      %v379 = vadd.f32 %v377, %v378
      %s380 = vtos %v379
      %v381 = vrcp.pop 160.0
      %s382 = vtos %v381
      %s383 = smul.f32 %s380, %s382
      %v384 = vmul.f32 %v359, %v359
      %v385 = vmul.f32 %v364, %v364
      %v386 = vsel %vm367, %v384, 0.0
      %v387 = vsel %vm369, %v385, 0.0
      %v388 = vadd.f32 %v386, %v387
      %389 = vadd.xlane.f32.xlu0 %v388
      %v390 = vpop.xlane.xlu0 %389
      %v391 = vrot.slane %v390, 4
      %v392 = vadd.f32 %v390, %v391
      %v393 = vrot.slane %v392, 2
      %v394 = vadd.f32 %v392, %v393
      %v395 = vrot.slane %v394, 1
      %v396 = vadd.f32 %v394, %v395
      %s397 = vtos %v396
      %v398 = vrcp.pop 160.0
      %s399 = vtos %v398
      %s400 = smul.f32 %s397, %s399
      %s401 = smul.f32 %s383, %s383
      %s402 = ssub.f32 %s400, %s401
      %v403 = vstv %s383
      %v404 = vsub.f32 %v359, %v403
      %v405 = vsub.f32 %v364, %v403
      %s406 = sadd.f32 %s402, 1e-08
      %v407 = vstv %s406
      %v408 = vrsqrt.pop %v407
      %s409 = vtos %v408
      %v410 = vstv %s409
      %v411 = vmul.f32 %v404, %v410
      %v412 = vmul.f32 %v405, %v410
      %v413 = vld [vmem:[%s2] sm:$0x1]
      %v415 = vlaneseq
      %v416 = vshrl.u32 %v415, 7
      %v417 = vsub.s32 0, %v416
      %v418 = vrot.slane %v413, %v417
      %v420 = vmul.f32 %v411, %v418
      %v421 = vmul.f32 %v412, %v418
      %v422 = vld [vmem:[%s3] sm:$0x1]
      %v424 = vlaneseq
      %v425 = vshrl.u32 %v424, 7
      %v426 = vsub.s32 0, %v425
      %v427 = vrot.slane %v422, %v426
      %v429 = vadd.f32 %v420, %v427
      %v430 = vadd.f32 %v421, %v427
      %431 = vst.msk [vmem:[%s197] sm:$0xff] %vm367, %v429
      %432 = vst.msk [vmem:[%s197 + $0x8] sm:$0x3] %vm369, %v430
      %p433 = scmp.lt.s32.totalorder %s15, 1
      %s434 = scalar_select %p433, %s15, 1
      %s435 = smul.addr %s434, 2
      %s436 = smul.addr %s435, 8
      %s437 = scalar_lea.vmem %s4, %s436
      // Predicated region
      $region37: #{y_net_forward.3} parent=35 // pred_check
        %p438 = pneg %p122
      $region38: #{y_net_forward.3} parent=35 // pred_check_branch
        %440 = sbr.rel (%p438) target = $region40
      $region39: #{y_net_forward.3} parent=35 // pred_region
        _
      $region40: #{y_net_forward.3} parent=35 // pred_fallthru
        _
    $region36: #{y_net_forward.3} parent=5 // pred_fallthru
      _
    %p441 = scmp.le.s32.totalorder 2, %s10
    // Predicated region
    $region41: #{y_net_forward.3} parent=5 // pred_check
      %p442 = pneg %p441
    $region42: #{y_net_forward.3} parent=5 // pred_check_branch
      %444 = sbr.rel (%p442) target = $region44
    $region43: #{y_net_forward.3} parent=5 // pred_region
      %s445 = ssub.s32 %s10, 2
      // Predicated region
      $region45: #{y_net_forward.3} parent=43 // pred_check
        %p446 = pneg %p128
      $region46: #{y_net_forward.3} parent=43 // pred_check_branch
        %448 = sbr.rel (%p446) target = $region48
      $region47: #{y_net_forward.3} parent=43 // pred_region
        %p449 = scmp.lt.s32.totalorder %s16, 1
        %s450 = scalar_select %p449, %s16, 1
        %s451 = smul.addr %s450, 2
        %s452 = smul.addr %s451, 8
        %s453 = scalar_lea.vmem %s4, %s452
      $region48: #{y_net_forward.3} parent=43 // pred_fallthru
        _
    $region44: #{y_net_forward.3} parent=5 // pred_fallthru
      _
  $region6: #{y_net_forward.3} parent=0 // loop_footer
    %s14 = sadd.s32 1, %s10
  $region7: #{y_net_forward.3} parent=0 // loop_footer_branch
    %9 = sbr.rel target = $region3
  $region8: #{y_net_forward.3} parent=0 // loop_exit
    _

// kernel: y_net_forward.5
$region0: #{y_net_forward.5}
  #allocation0 [shape = 'u32[]', space=smem, size = 0x4, offset = 0x4, fixed_abs, tag = 'smem constant byte address 0x4 - core index']
  #allocation1 [shape = 'u32[144,128]{1,0:T(1,128)}', space=vmem, size = 0x12000, scoped, tag = 'internal scratch']
  #allocation2 [shape = 'f32[1,1]{1,0:T(1,128)S(1)}', space=vmem, size = 0x200, scoped, tag = 'scoped memory for y_net_forward.5']
  %s0 = inlined_call_operand.vmem [shape: f32[2,10,16], index: 0, kind: input, shape index: {}]
  %s1 = inlined_call_operand.vmem [shape: f32[2,10,16], index: 1, kind: input, shape index: {}]
  %s2 = inlined_call_operand.vmem [shape: f32[2,16,16], index: 2, kind: input, shape index: {}]
  %s3 = inlined_call_operand.vmem [shape: f32[2,1,16], index: 3, kind: input, shape index: {}]
  %s4 = inlined_call_operand.vmem [shape: f32[16,8], index: 4, kind: input, shape index: {}]
  %s5 = inlined_call_operand.vmem [shape: f32[16,8], index: 5, kind: input, shape index: {}]
  %s6 = inlined_call_operand.<no memory space> [shape: f32[1,1], index: 6, kind: input, shape index: {}]
  %s7 = inlined_call_operand.vmem [shape: f32[2,2,11,8], index: 7, kind: output, shape index: {}]
  %s8 = sld [smem:[#allocation0]]
  $region61: #{y_net_forward.5} parent=0
    _
  %s10 = ssub.s32 1, %s8
  %s11 = scalar_select 0, %s10, %s8
  %v12 = vstv %s6
  %13 = vst [vmem:[#allocation2] sm:$0x1] %v12
  loop: start=0, step=1, limit=6
  $region2: #{y_net_forward.5} parent=0 // loop_pre_header
    _
  $region3: #{y_net_forward.5} parent=0 // loop_header
    %s15 = sphi 0, %s19
    %p16 = scmp.ge.s32.totalorder %s15, 6
    %s22 = sphi 0, %s34
    %s23 = sphi 0, %s30
    %s24 = sphi 0, %s22
    %s25 = sphi 0, %s23
    %s26 = sphi 0, %s24
    %s27 = sphi 0, %s25
    %s37 = sphi 0, %s39
    %s40 = sphi 0, %s37
    %s41 = sphi 0, %s40
    %s57 = sphi 0, %s41
    %s63 = sphi 0, %s65
    %s66 = sphi 0, %s63
    %s67 = sphi 0, %s66
    %s83 = sphi 0, %s67
    %s89 = sphi 0, %s91
    %s92 = sphi 0, %s89
    %s93 = sphi 0, %s92
    %s109 = sphi 0, %s93
    %s115 = sphi 0, %s117
    %s118 = sphi 0, %s115
    %s119 = sphi 0, %s118
    %s135 = sphi 0, %s119
    %s139 = sphi 0, %s139
    %s141 = sphi 0, %s139
    %s142 = sphi 0, %s141
    %s156 = sphi 0, %s142
    %s160 = sphi 0, %s160
    %s162 = sphi 0, %s160
    %s163 = sphi 0, %s162
    %s177 = sphi 0, %s163
    %s181 = sphi 0, %s181
    %s183 = sphi 0, %s181
    %s184 = sphi 0, %s183
    %s198 = sphi 0, %s184
    %s206 = sphi 0, %s208
    %s209 = sphi 0, %s206
    %s210 = sphi 0, %s209
    %s226 = sphi 0, %s210
  $region4: #{y_net_forward.5} parent=0 // loop_header_branch
    %18 = sbr.rel (%p16) target = $region8
  $region5: #{y_net_forward.5} parent=0 // loop_body
    %s20 = ssub.s32 %s15, 1
    %s21 = ssub.s32 %s15, 2
    %s28 = sadd.s32 1, %s23
    %p29 = scmp.ge.s32.totalorder %s28, 2
    %s30 = scalar_select %p29, 0, %s28
    %s31 = sadd.s32 1, %s22
    %s32 = scalar_select %p29, %s31, %s22
    %p33 = scmp.ge.s32.totalorder %s32, 2
    %s34 = scalar_select %p33, 0, %s32
    %s35 = ssub.s32 %s22, %s34
    %p36 = scmp.eq.s32.totalorder %s35, 0
    %s38 = sadd.s32 %s37, 1
    %s39 = scalar_select %p36, %s37, %s38
    %p42 = pneg %p36
    %p43 = scmp.eq.s32.totalorder %s15, 3
    %p44 = por %p42, %p43
    %p45 = scmp.ne.s32.totalorder %s37, %s40
    %p46 = scmp.eq.s32.totalorder %s15, 0
    %p47 = por %p45, %p46
    %p48 = scmp.ne.s32.totalorder %s37, %s40
    %p49 = scmp.eq.s32.totalorder %s20, 3
    %p50 = por %p48, %p49
    %p51 = scmp.ne.s32.totalorder %s40, %s41
    %p52 = scmp.eq.s32.totalorder %s20, 0
    %p53 = por %p51, %p52
    %p54 = scmp.ne.s32.totalorder %s40, %s41
    %p55 = scmp.eq.s32.totalorder %s21, 3
    %p56 = por %p54, %p55
    %p58 = scmp.ne.s32.totalorder %s41, %s57
    %p59 = scmp.eq.s32.totalorder %s21, 0
    %p60 = por %p58, %p59
    %s61 = ssub.s32 %s22, %s34
    %p62 = scmp.eq.s32.totalorder %s61, 0
    %s64 = sadd.s32 %s63, 1
    %s65 = scalar_select %p62, %s63, %s64
    %p68 = pneg %p62
    %p69 = scmp.eq.s32.totalorder %s15, 3
    %p70 = por %p68, %p69
    %p71 = scmp.ne.s32.totalorder %s63, %s66
    %p72 = scmp.eq.s32.totalorder %s15, 0
    %p73 = por %p71, %p72
    %p74 = scmp.ne.s32.totalorder %s63, %s66
    %p75 = scmp.eq.s32.totalorder %s20, 3
    %p76 = por %p74, %p75
    %p77 = scmp.ne.s32.totalorder %s66, %s67
    %p78 = scmp.eq.s32.totalorder %s20, 0
    %p79 = por %p77, %p78
    %p80 = scmp.ne.s32.totalorder %s66, %s67
    %p81 = scmp.eq.s32.totalorder %s21, 3
    %p82 = por %p80, %p81
    %p84 = scmp.ne.s32.totalorder %s67, %s83
    %p85 = scmp.eq.s32.totalorder %s21, 0
    %p86 = por %p84, %p85
    %s87 = ssub.s32 %s23, %s30
    %p88 = scmp.eq.s32.totalorder %s87, 0
    %s90 = sadd.s32 %s89, 1
    %s91 = scalar_select %p88, %s89, %s90
    %p94 = pneg %p88
    %p95 = scmp.eq.s32.totalorder %s15, 3
    %p96 = por %p94, %p95
    %p97 = scmp.ne.s32.totalorder %s89, %s92
    %p98 = scmp.eq.s32.totalorder %s15, 0
    %p99 = por %p97, %p98
    %p100 = scmp.ne.s32.totalorder %s89, %s92
    %p101 = scmp.eq.s32.totalorder %s20, 3
    %p102 = por %p100, %p101
    %p103 = scmp.ne.s32.totalorder %s92, %s93
    %p104 = scmp.eq.s32.totalorder %s20, 0
    %p105 = por %p103, %p104
    %p106 = scmp.ne.s32.totalorder %s92, %s93
    %p107 = scmp.eq.s32.totalorder %s21, 3
    %p108 = por %p106, %p107
    %p110 = scmp.ne.s32.totalorder %s93, %s109
    %p111 = scmp.eq.s32.totalorder %s21, 0
    %p112 = por %p110, %p111
    %s113 = ssub.s32 %s23, %s30
    %p114 = scmp.eq.s32.totalorder %s113, 0
    %s116 = sadd.s32 %s115, 1
    %s117 = scalar_select %p114, %s115, %s116
    %p120 = pneg %p114
    %p121 = scmp.eq.s32.totalorder %s15, 3
    %p122 = por %p120, %p121
    %p123 = scmp.ne.s32.totalorder %s115, %s118
    %p124 = scmp.eq.s32.totalorder %s15, 0
    %p125 = por %p123, %p124
    %p126 = scmp.ne.s32.totalorder %s115, %s118
    %p127 = scmp.eq.s32.totalorder %s20, 3
    %p128 = por %p126, %p127
    %p129 = scmp.ne.s32.totalorder %s118, %s119
    %p130 = scmp.eq.s32.totalorder %s20, 0
    %p131 = por %p129, %p130
    %p132 = scmp.ne.s32.totalorder %s118, %s119
    %p133 = scmp.eq.s32.totalorder %s21, 3
    %p134 = por %p132, %p133
    %p136 = scmp.ne.s32.totalorder %s119, %s135
    %p137 = scmp.eq.s32.totalorder %s21, 0
    %p138 = por %p136, %p137
    %s140 = sadd.s32 %s139, 1
    %p143 = scmp.eq.s32.totalorder %s15, 3
    %p144 = scmp.ne.s32.totalorder %s139, %s141
    %p145 = scmp.eq.s32.totalorder %s15, 0
    %p146 = por %p144, %p145
    %p147 = scmp.ne.s32.totalorder %s139, %s141
    %p148 = scmp.eq.s32.totalorder %s20, 3
    %p149 = por %p147, %p148
    %p150 = scmp.ne.s32.totalorder %s141, %s142
    %p151 = scmp.eq.s32.totalorder %s20, 0
    %p152 = por %p150, %p151
    %p153 = scmp.ne.s32.totalorder %s141, %s142
    %p154 = scmp.eq.s32.totalorder %s21, 3
    %p155 = por %p153, %p154
    %p157 = scmp.ne.s32.totalorder %s142, %s156
    %p158 = scmp.eq.s32.totalorder %s21, 0
    %p159 = por %p157, %p158
    %s161 = sadd.s32 %s160, 1
    %p164 = scmp.eq.s32.totalorder %s15, 3
    %p165 = scmp.ne.s32.totalorder %s160, %s162
    %p166 = scmp.eq.s32.totalorder %s15, 0
    %p167 = por %p165, %p166
    %p168 = scmp.ne.s32.totalorder %s160, %s162
    %p169 = scmp.eq.s32.totalorder %s20, 3
    %p170 = por %p168, %p169
    %p171 = scmp.ne.s32.totalorder %s162, %s163
    %p172 = scmp.eq.s32.totalorder %s20, 0
    %p173 = por %p171, %p172
    %p174 = scmp.ne.s32.totalorder %s162, %s163
    %p175 = scmp.eq.s32.totalorder %s21, 3
    %p176 = por %p174, %p175
    %p178 = scmp.ne.s32.totalorder %s163, %s177
    %p179 = scmp.eq.s32.totalorder %s21, 0
    %p180 = por %p178, %p179
    %s182 = sadd.s32 %s181, 1
    %p185 = scmp.eq.s32.totalorder %s15, 3
    %p186 = scmp.ne.s32.totalorder %s181, %s183
    %p187 = scmp.eq.s32.totalorder %s15, 0
    %p188 = por %p186, %p187
    %p189 = scmp.ne.s32.totalorder %s181, %s183
    %p190 = scmp.eq.s32.totalorder %s20, 3
    %p191 = por %p189, %p190
    %p192 = scmp.ne.s32.totalorder %s183, %s184
    %p193 = scmp.eq.s32.totalorder %s20, 0
    %p194 = por %p192, %p193
    %p195 = scmp.ne.s32.totalorder %s183, %s184
    %p196 = scmp.eq.s32.totalorder %s21, 3
    %p197 = por %p195, %p196
    %p199 = scmp.ne.s32.totalorder %s184, %s198
    %p200 = scmp.eq.s32.totalorder %s21, 0
    %p201 = por %p199, %p200
    %s202 = ssub.s32 %s22, %s34
    %s203 = ssub.s32 %s23, %s30
    %s204 = sor.u32 %s202, %s203
    %p205 = scmp.eq.s32.totalorder %s204, 0
    %s207 = sadd.s32 %s206, 1
    %s208 = scalar_select %p205, %s206, %s207
    %p211 = pneg %p205
    %p212 = scmp.eq.s32.totalorder %s15, 3
    %p213 = por %p211, %p212
    %p214 = scmp.ne.s32.totalorder %s206, %s209
    %p215 = scmp.eq.s32.totalorder %s15, 0
    %p216 = por %p214, %p215
    %p217 = scmp.ne.s32.totalorder %s206, %s209
    %p218 = scmp.eq.s32.totalorder %s20, 3
    %p219 = por %p217, %p218
    %p220 = scmp.ne.s32.totalorder %s209, %s210
    %p221 = scmp.eq.s32.totalorder %s20, 0
    %p222 = por %p220, %p221
    %p223 = scmp.ne.s32.totalorder %s209, %s210
    %p224 = scmp.eq.s32.totalorder %s21, 3
    %p225 = por %p223, %p224
    %p227 = scmp.ne.s32.totalorder %s210, %s226
    %p228 = scmp.eq.s32.totalorder %s21, 0
    %p229 = por %p227, %p228
    %p230 = scmp.le.s32.totalorder 1, %s15
    %p231 = scmp.lt.s32.totalorder %s15, 5
    %p232 = pnand %p230, %p231
    %p233 = pneg %p232
    // Predicated region
    $region9: #{y_net_forward.5} parent=5 // pred_check
      _
    $region10: #{y_net_forward.5} parent=5 // pred_check_branch
      %235 = sbr.rel (%p232) target = $region12
    $region11: #{y_net_forward.5} parent=5 // pred_region
      %s236 = ssub.s32 %s15, 1
      // Predicated region
      $region13: #{y_net_forward.5} parent=11 // pred_check
        %p237 = pneg %p152
      $region14: #{y_net_forward.5} parent=11 // pred_check_branch
        %239 = sbr.rel (%p237) target = $region16
      $region15: #{y_net_forward.5} parent=11 // pred_region
        _
      $region16: #{y_net_forward.5} parent=11 // pred_fallthru
        _
      // Predicated region
      $region17: #{y_net_forward.5} parent=11 // pred_check
        %p240 = pneg %p173
      $region18: #{y_net_forward.5} parent=11 // pred_check_branch
        %242 = sbr.rel (%p240) target = $region20
      $region19: #{y_net_forward.5} parent=11 // pred_region
        _
      $region20: #{y_net_forward.5} parent=11 // pred_fallthru
        _
      // Predicated region
      $region21: #{y_net_forward.5} parent=11 // pred_check
        %p243 = pneg %p194
      $region22: #{y_net_forward.5} parent=11 // pred_check_branch
        %245 = sbr.rel (%p243) target = $region24
      $region23: #{y_net_forward.5} parent=11 // pred_region
        _
      $region24: #{y_net_forward.5} parent=11 // pred_fallthru
        _
    $region12: #{y_net_forward.5} parent=5 // pred_fallthru
      _
    %p246 = scmp.lt.s32.totalorder %s15, 4
    // Predicated region
    $region25: #{y_net_forward.5} parent=5 // pred_check
      %p247 = pneg %p246
    $region26: #{y_net_forward.5} parent=5 // pred_check_branch
      %249 = sbr.rel (%p247) target = $region28
    $region27: #{y_net_forward.5} parent=5 // pred_region
      // Predicated region
      $region29: #{y_net_forward.5} parent=27 // pred_check
        %p250 = pneg %p47
      $region30: #{y_net_forward.5} parent=27 // pred_check_branch
        %252 = sbr.rel (%p250) target = $region32
      $region31: #{y_net_forward.5} parent=27 // pred_region
        %p253 = scmp.lt.s32.totalorder %s22, 1
        %s254 = scalar_select %p253, %s22, 1
        %s255 = smul.addr %s254, 2
        %s256 = smul.addr %s255, 8
        %s257 = scalar_lea.vmem %s0, %s256
      $region32: #{y_net_forward.5} parent=27 // pred_fallthru
        _
      // Predicated region
      $region33: #{y_net_forward.5} parent=27 // pred_check
        %p258 = pneg %p73
      $region34: #{y_net_forward.5} parent=27 // pred_check_branch
        %260 = sbr.rel (%p258) target = $region36
      $region35: #{y_net_forward.5} parent=27 // pred_region
        %p261 = scmp.lt.s32.totalorder %s22, 1
        %s262 = scalar_select %p261, %s22, 1
        %s263 = smul.addr %s262, 2
        %s264 = smul.addr %s263, 8
        %s265 = scalar_lea.vmem %s1, %s264
      $region36: #{y_net_forward.5} parent=27 // pred_fallthru
        _
      // Predicated region
      $region37: #{y_net_forward.5} parent=27 // pred_check
        %p266 = pneg %p99
      $region38: #{y_net_forward.5} parent=27 // pred_check_branch
        %268 = sbr.rel (%p266) target = $region40
      $region39: #{y_net_forward.5} parent=27 // pred_region
        %p269 = scmp.lt.s32.totalorder %s23, 1
        %s270 = scalar_select %p269, %s23, 1
        %s271 = smul.addr %s270, 2
        %s272 = smul.addr %s271, 8
        %s273 = scalar_lea.vmem %s2, %s272
      $region40: #{y_net_forward.5} parent=27 // pred_fallthru
        _
      // Predicated region
      $region41: #{y_net_forward.5} parent=27 // pred_check
        %p274 = pneg %p125
      $region42: #{y_net_forward.5} parent=27 // pred_check_branch
        %276 = sbr.rel (%p274) target = $region44
      $region43: #{y_net_forward.5} parent=27 // pred_region
        %p277 = scmp.lt.s32.totalorder %s23, 1
        %s278 = scalar_select %p277, %s23, 1
        %s279 = scalar_lea.vmem %s3, %s278
      $region44: #{y_net_forward.5} parent=27 // pred_fallthru
        _
    $region28: #{y_net_forward.5} parent=5 // pred_fallthru
      _
    %p280 = scmp.le.s32.totalorder 1, %s15
    %p281 = scmp.lt.s32.totalorder %s15, 5
    %p282 = pnand %p280, %p281
    %p283 = pneg %p282
    // Predicated region
    $region45: #{y_net_forward.5} parent=5 // pred_check
      _
    $region46: #{y_net_forward.5} parent=5 // pred_check_branch
      %285 = sbr.rel (%p282) target = $region48
    $region47: #{y_net_forward.5} parent=5 // pred_region
      %s286 = ssub.s32 %s15, 1
      %p287 = scmp.lt.s32.totalorder %s24, 1
      %s288 = scalar_select %p287, %s24, 1
      %s289 = smul.addr %s288, 2
      %s290 = smul.addr %s289, 8
      %s291 = scalar_lea.vmem %s0, %s290
      %p292 = pneg %p53
      %p293 = pneg %p50
      %p294 = scmp.lt.s32.totalorder %s24, 1
      %s295 = scalar_select %p294, %s24, 1
      %s296 = smul.addr %s295, 2
      %s297 = smul.addr %s296, 8
      %s298 = scalar_lea.vmem %s1, %s297
      %p299 = pneg %p79
      %p300 = pneg %p76
      %p301 = scmp.lt.s32.totalorder %s25, 1
      %s302 = scalar_select %p301, %s25, 1
      %s303 = smul.addr %s302, 2
      %s304 = smul.addr %s303, 8
      %s305 = scalar_lea.vmem %s2, %s304
      %p306 = pneg %p105
      %p307 = pneg %p102
      %p308 = scmp.lt.s32.totalorder %s25, 1
      %s309 = scalar_select %p308, %s25, 1
      %s310 = scalar_lea.vmem %s3, %s309
      %p311 = pneg %p131
      %p312 = pneg %p128
      %p313 = pneg %p152
      %p314 = pneg %p149
      %p315 = pneg %p173
      %p316 = pneg %p170
      %p317 = pneg %p194
      %p318 = pneg %p191
      %p319 = pneg %p222
      %p320 = pneg %p219
      %p321 = scmp.lt.s32.totalorder %s24, 1
      %s322 = scalar_select %p321, %s24, 1
      %p323 = scmp.lt.s32.totalorder %s25, 1
      %s324 = scalar_select %p323, %s25, 1
      %s325 = smul.addr %s324, 2
      %s326 = smul.addr %s322, 4
      %s327 = sadd.s32 %s325, %s326
      %s328 = smul.addr %s327, 8
      %s329 = scalar_lea.vmem %s7, %s328
      %p330 = scmp.lt.s32.totalorder %s24, 1
      %s331 = scalar_select %p330, %s24, 1
      %s332 = smul.addr %s331, 2
      %s333 = smul.addr %s332, 8
      %s334 = scalar_lea.vmem %s0, %s333
      %p335 = scmp.lt.s32.totalorder %s24, 1
      %s336 = scalar_select %p335, %s24, 1
      %s337 = smul.addr %s336, 2
      %s338 = smul.addr %s337, 8
      %s339 = scalar_lea.vmem %s1, %s338
      %p340 = scmp.lt.s32.totalorder %s25, 1
      %s341 = scalar_select %p340, %s25, 1
      %s342 = smul.addr %s341, 2
      %s343 = smul.addr %s342, 8
      %s344 = scalar_lea.vmem %s2, %s343
      %p345 = scmp.lt.s32.totalorder %s25, 1
      %s346 = scalar_select %p345, %s25, 1
      %s347 = scalar_lea.vmem %s3, %s346
      %p348 = scmp.lt.s32.totalorder %s24, 1
      %s349 = scalar_select %p348, %s24, 1
      %p350 = scmp.lt.s32.totalorder %s25, 1
      %s351 = scalar_select %p350, %s25, 1
      %s352 = smul.addr %s351, 2
      %s353 = smul.addr %s349, 4
      %s354 = sadd.s32 %s352, %s353
      %s355 = smul.addr %s354, 8
      %s356 = scalar_lea.vmem %s7, %s355
      %v357 = vld [vmem:[%s334] sm:$0xff]
      %v358 = vld [vmem:[%s334 + $0x8] sm:$0x3]
      %v359 = vld [vmem:[%s339] sm:$0xff]
      %v360 = vld [vmem:[%s339 + $0x8] sm:$0x3]
      %v361 = vld [vmem:[#allocation2] sm:$0x1]
      %s362 = vtos %v361
      %vm363 = vcmp.ge.f32.partialorder %v357, 0.0
      %vm364 = vcmp.ge.f32.partialorder %v358, 0.0
      %v365 = vstv %s362
      %v366 = vmul.f32 %v365, %v357
      %v367 = vmul.f32 %v365, %v358
      %v368 = vsel %vm363, %v357, %v366
      %v369 = vsel %vm364, %v358, %v367
      %v370 = vld [vmem:[%s344] sm:$0xff]
      %v371 = vld [vmem:[%s344 + $0x8] sm:$0xff]
      %v372 = vld [vmem:[%s347] sm:$0x1]
      %v374 = vlaneseq
      %v375 = vshrl.u32 %v374, 7
      %v376 = vsub.s32 0, %v375
      %v377 = vrot.slane %v372, %v376
      %vm379 = vcmask 130048
      %v381 = vsel %vm379, %v368, 0
      %v384 = vsel %vm379, %v369, 0
      %386 = vmatprep.subr.mxu0 0.0
      %387 = vmatpush1.msra.mxu0 0.0
      %388 = vmatprep.subr.mxu0 0.0
      %389 = vmatpush1.msra.mxu0 0.0
      %390 = vmatprep.subr.mxu0 0.0
      %391 = vmatpush1.msra.mxu0 0.0
      %392 = vmatprep.subr.mxu0 0.0
      %393 = vmatpush1.msra.mxu0 0.0
      %394 = vmatprep.subr.mxu0 0.0
      %395 = vmatpush1.msra.mxu0 0.0
      %396 = vmatprep.subr.mxu0 0.0
      %397 = vmatpush1.msra.mxu0 0.0
      %398 = vmatprep.subr.mxu0 0.0
      %399 = vmatpush1.msra.mxu0 0.0
      %400 = vmatprep.subr.mxu0 0.0
      %401 = vmatpush1.msra.mxu0 0.0
      %402 = vmatprep.subr.mxu0 0.0
      %403 = vmatpush1.msra.mxu0 0.0
      %404 = vmatprep.subr.mxu0 0.0
      %405 = vmatpush1.msra.mxu0 0.0
      %406 = vmatprep.subr.mxu0 0.0
      %407 = vmatpush1.msra.mxu0 0.0
      %408 = vmatprep.subr.mxu0 0.0
      %409 = vmatpush1.msra.mxu0 0.0
      %410 = vmatprep.subr.mxu0 0.0
      %411 = vmatpush1.msra.mxu0 0.0
      %412 = vmatprep.subr.mxu0 0.0
      %413 = vmatpush1.msra.mxu0 0.0
      %414 = vmatprep.subr.mxu0 0.0
      %415 = vmatpush1.msra.mxu0 %v371
      %416 = vmatprep.subr.mxu0 0.0
      %417 = vmatpush1.msra.mxu0 %v370
      %418 = vmatprep.subr.mxu0 0.0
      %419 = vmatpush2.msra.mxu0 0.0
      %420 = vmatprep.subr.mxu0 0.0
      %421 = vmatpush2.msra.mxu0 0.0
      %422 = vmatprep.subr.mxu0 0.0
      %423 = vmatpush2.msra.mxu0 0.0
      %424 = vmatprep.subr.mxu0 0.0
      %425 = vmatpush2.msra.mxu0 0.0
      %426 = vmatprep.subr.mxu0 0.0
      %427 = vmatpush2.msra.mxu0 0.0
      %428 = vmatprep.subr.mxu0 0.0
      %429 = vmatpush2.msra.mxu0 0.0
      %430 = vmatprep.subr.mxu0 0.0
      %431 = vmatpush2.msra.mxu0 0.0
      %432 = vmatprep.subr.mxu0 0.0
      %433 = vmatpush2.msra.mxu0 0.0
      %434 = vmatprep.subr.mxu0 0.0
      %435 = vmatpush2.msra.mxu0 0.0
      %436 = vmatprep.subr.mxu0 0.0
      %437 = vmatpush2.msra.mxu0 0.0
      %438 = vmatprep.subr.mxu0 0.0
      %439 = vmatpush2.msra.mxu0 0.0
      %440 = vmatprep.subr.mxu0 0.0
      %441 = vmatpush2.msra.mxu0 0.0
      %442 = vmatprep.subr.mxu0 0.0
      %443 = vmatpush2.msra.mxu0 0.0
      %444 = vmatprep.subr.mxu0 0.0
      %445 = vmatpush2.msra.mxu0 0.0
      %446 = vmatprep.subr.mxu0 0.0
      %447 = vmatpush2.msra.mxu0 0.0
      %448 = vmatprep.subr.mxu0 0.0
      %449 = vmatpush2.msra.mxu0 0.0
      %450 = vmatprep.mubr.f32.mxu0 0.0
      %451 = vmatmul.mubr.f32.gmra.mxu0 %v381
      %v452 = vpop.f32.mrf.mxu0
      %v453 = vadd.f32 %v377, %v452
      %v454 = vpop.f32.mrf.mxu0
      %455 = vmatprep.mubr.f32.mxu0 0.0
      %456 = vmatmul.mubr.f32.gmra.mxu0 %v384
      %v457 = vpop.f32.mrf.mxu0
      %v458 = vadd.f32 %v377, %v457
      %v459 = vpop.f32.mrf.mxu0
      %460 = vdwg.mxu0
      %v461 = vxor.u32 %v453, 2147483648
      %v462 = vxor.u32 %v458, 2147483648
      %v463 = vmul.f32 %v461, 1.442695
      %v464 = vpow.pop %v463
      %v465 = vmul.f32 %v462, 1.442695
      %v466 = vpow.pop %v465
      %v467 = vadd.f32 %v464, 1.0
      %v468 = vadd.f32 %v466, 1.0
      %v469 = vrcp.pop %v467
      %v470 = vmul.f32 1.0, %v469
      %v471 = vrcp.pop %v468
      %v472 = vmul.f32 1.0, %v471
      %v473 = vmul.f32 %v470, %v359
      %v474 = vmul.f32 %v472, %v360
      %v475 = vld [vmem:[%s4] sm:$0xff]
      %v476 = vld [vmem:[%s4 + $0x8] sm:$0xff]
      %v478 = vsel %vm379, %v473, 0
      %v481 = vsel %vm379, %v474, 0
      %483 = vmatprep.subr.mxu0 0.0
      %484 = vmatpush1.msra.mxu0 0.0
      %485 = vmatprep.subr.mxu0 0.0
      %486 = vmatpush1.msra.mxu0 0.0
      %487 = vmatprep.subr.mxu0 0.0
      %488 = vmatpush1.msra.mxu0 0.0
      %489 = vmatprep.subr.mxu0 0.0
      %490 = vmatpush1.msra.mxu0 0.0
      %491 = vmatprep.subr.mxu0 0.0
      %492 = vmatpush1.msra.mxu0 0.0
      %493 = vmatprep.subr.mxu0 0.0
      %494 = vmatpush1.msra.mxu0 0.0
      %495 = vmatprep.subr.mxu0 0.0
      %496 = vmatpush1.msra.mxu0 0.0
      %497 = vmatprep.subr.mxu0 0.0
      %498 = vmatpush1.msra.mxu0 0.0
      %499 = vmatprep.subr.mxu0 0.0
      %500 = vmatpush1.msra.mxu0 0.0
      %501 = vmatprep.subr.mxu0 0.0
      %502 = vmatpush1.msra.mxu0 0.0
      %503 = vmatprep.subr.mxu0 0.0
      %504 = vmatpush1.msra.mxu0 0.0
      %505 = vmatprep.subr.mxu0 0.0
      %506 = vmatpush1.msra.mxu0 0.0
      %507 = vmatprep.subr.mxu0 0.0
      %508 = vmatpush1.msra.mxu0 0.0
      %509 = vmatprep.subr.mxu0 0.0
      %510 = vmatpush1.msra.mxu0 0.0
      %511 = vmatprep.subr.mxu0 0.0
      %512 = vmatpush1.msra.mxu0 %v476
      %513 = vmatprep.subr.mxu0 0.0
      %514 = vmatpush1.msra.mxu0 %v475
      %515 = vmatprep.subr.mxu0 0.0
      %516 = vmatpush2.msra.mxu0 0.0
      %517 = vmatprep.subr.mxu0 0.0
      %518 = vmatpush2.msra.mxu0 0.0
      %519 = vmatprep.subr.mxu0 0.0
      %520 = vmatpush2.msra.mxu0 0.0
      %521 = vmatprep.subr.mxu0 0.0
      %522 = vmatpush2.msra.mxu0 0.0
      %523 = vmatprep.subr.mxu0 0.0
      %524 = vmatpush2.msra.mxu0 0.0
      %525 = vmatprep.subr.mxu0 0.0
      %526 = vmatpush2.msra.mxu0 0.0
      %527 = vmatprep.subr.mxu0 0.0
      %528 = vmatpush2.msra.mxu0 0.0
      %529 = vmatprep.subr.mxu0 0.0
      %530 = vmatpush2.msra.mxu0 0.0
      %531 = vmatprep.subr.mxu0 0.0
      %532 = vmatpush2.msra.mxu0 0.0
      %533 = vmatprep.subr.mxu0 0.0
      %534 = vmatpush2.msra.mxu0 0.0
      %535 = vmatprep.subr.mxu0 0.0
      %536 = vmatpush2.msra.mxu0 0.0
      %537 = vmatprep.subr.mxu0 0.0
      %538 = vmatpush2.msra.mxu0 0.0
      %539 = vmatprep.subr.mxu0 0.0
      %540 = vmatpush2.msra.mxu0 0.0
      %541 = vmatprep.subr.mxu0 0.0
      %542 = vmatpush2.msra.mxu0 0.0
      %543 = vmatprep.subr.mxu0 0.0
      %544 = vmatpush2.msra.mxu0 0.0
      %545 = vmatprep.subr.mxu0 0.0
      %546 = vmatpush2.msra.mxu0 0.0
      %547 = vmatprep.mubr.f32.mxu0 0.0
      %548 = vmatmul.mubr.f32.gmra.mxu0 %v478
      %v549 = vpop.f32.mrf.mxu0
      %v550 = vadd.f32 0.0, %v549
      %v551 = vpop.f32.mrf.mxu0
      %552 = vmatprep.mubr.f32.mxu0 0.0
      %553 = vmatmul.mubr.f32.gmra.mxu0 %v481
      %v554 = vpop.f32.mrf.mxu0
      %v555 = vadd.f32 0.0, %v554
      %v556 = vpop.f32.mrf.mxu0
      %557 = vdwg.mxu0
      %v558 = vld [vmem:[%s5] sm:$0xff]
      %v559 = vld [vmem:[%s5 + $0x8] sm:$0xff]
      %560 = vmatprep.subr.mxu0 0.0
      %561 = vmatpush1.msra.mxu0 0.0
      %562 = vmatprep.subr.mxu0 0.0
      %563 = vmatpush1.msra.mxu0 0.0
      %564 = vmatprep.subr.mxu0 0.0
      %565 = vmatpush1.msra.mxu0 0.0
      %566 = vmatprep.subr.mxu0 0.0
      %567 = vmatpush1.msra.mxu0 0.0
      %568 = vmatprep.subr.mxu0 0.0
      %569 = vmatpush1.msra.mxu0 0.0
      %570 = vmatprep.subr.mxu0 0.0
      %571 = vmatpush1.msra.mxu0 0.0
      %572 = vmatprep.subr.mxu0 0.0
      %573 = vmatpush1.msra.mxu0 0.0
      %574 = vmatprep.subr.mxu0 0.0
      %575 = vmatpush1.msra.mxu0 0.0
      %576 = vmatprep.subr.mxu0 0.0
      %577 = vmatpush1.msra.mxu0 0.0
      %578 = vmatprep.subr.mxu0 0.0
      %579 = vmatpush1.msra.mxu0 0.0
      %580 = vmatprep.subr.mxu0 0.0
      %581 = vmatpush1.msra.mxu0 0.0
      %582 = vmatprep.subr.mxu0 0.0
      %583 = vmatpush1.msra.mxu0 0.0
      %584 = vmatprep.subr.mxu0 0.0
      %585 = vmatpush1.msra.mxu0 0.0
      %586 = vmatprep.subr.mxu0 0.0
      %587 = vmatpush1.msra.mxu0 0.0
      %588 = vmatprep.subr.mxu0 0.0
      %589 = vmatpush1.msra.mxu0 %v559
      %590 = vmatprep.subr.mxu0 0.0
      %591 = vmatpush1.msra.mxu0 %v558
      %592 = vmatprep.subr.mxu0 0.0
      %593 = vmatpush2.msra.mxu0 0.0
      %594 = vmatprep.subr.mxu0 0.0
      %595 = vmatpush2.msra.mxu0 0.0
      %596 = vmatprep.subr.mxu0 0.0
      %597 = vmatpush2.msra.mxu0 0.0
      %598 = vmatprep.subr.mxu0 0.0
      %599 = vmatpush2.msra.mxu0 0.0
      %600 = vmatprep.subr.mxu0 0.0
      %601 = vmatpush2.msra.mxu0 0.0
      %602 = vmatprep.subr.mxu0 0.0
      %603 = vmatpush2.msra.mxu0 0.0
      %604 = vmatprep.subr.mxu0 0.0
      %605 = vmatpush2.msra.mxu0 0.0
      %606 = vmatprep.subr.mxu0 0.0
      %607 = vmatpush2.msra.mxu0 0.0
      %608 = vmatprep.subr.mxu0 0.0
      %609 = vmatpush2.msra.mxu0 0.0
      %610 = vmatprep.subr.mxu0 0.0
      %611 = vmatpush2.msra.mxu0 0.0
      %612 = vmatprep.subr.mxu0 0.0
      %613 = vmatpush2.msra.mxu0 0.0
      %614 = vmatprep.subr.mxu0 0.0
      %615 = vmatpush2.msra.mxu0 0.0
      %616 = vmatprep.subr.mxu0 0.0
      %617 = vmatpush2.msra.mxu0 0.0
      %618 = vmatprep.subr.mxu0 0.0
      %619 = vmatpush2.msra.mxu0 0.0
      %620 = vmatprep.subr.mxu0 0.0
      %621 = vmatpush2.msra.mxu0 0.0
      %622 = vmatprep.subr.mxu0 0.0
      %623 = vmatpush2.msra.mxu0 0.0
      %624 = vmatprep.mubr.f32.mxu0 0.0
      %625 = vmatmul.mubr.f32.gmra.mxu0 %v478
      %v626 = vpop.f32.mrf.mxu0
      %v627 = vadd.f32 0.0, %v626
      %v628 = vpop.f32.mrf.mxu0
      %629 = vmatprep.mubr.f32.mxu0 0.0
      %630 = vmatmul.mubr.f32.gmra.mxu0 %v481
      %v631 = vpop.f32.mrf.mxu0
      %v632 = vadd.f32 0.0, %v631
      %v633 = vpop.f32.mrf.mxu0
      %634 = vdwg.mxu0
      %v635 = vlaneseq
      %v636 = vshrl.u32 %v635, 7
      %v637 = vadd.s32 %v636, 8
      %v638 = vlaneseq
      %v639 = vand.u32 %v638, 127
      %vm640 = vcmp.eq.s32.totalorder %v636, %v639
      %vm641 = vcmp.eq.s32.totalorder %v637, %v639
      %v642 = vsel %vm640, 1, 0
      %v643 = vsel %vm641, 1, 0
      %v644 = vcvt.s32.f32 %v642
      %v645 = vcvt.s32.f32 %v643
      %v646 = vadd.s32 %v639, 1
      %vm647 = vcmp.eq.s32.totalorder %v636, %v646
      %vm648 = vcmp.eq.s32.totalorder %v637, %v646
      %v649 = vsel %vm647, 1, 0
      %v650 = vsel %vm648, 1, 0
      %v651 = vcvt.s32.f32 %v649
      %v652 = vcvt.s32.f32 %v650
      %vm653 = vcmask 80896
      %v655 = vsel %vm653, %v651, 0
      %v658 = vsel %vm653, %v652, 0
      %vm660 = vcmask 1041408
      %v662 = vsel %vm660, %v632, 0
      %664 = vmatprep.subr.mxu0 0.0
      %665 = vmatpush1.msra.mxu0 0.0
      %666 = vmatprep.subr.mxu0 0.0
      %667 = vmatpush1.msra.mxu0 0.0
      %668 = vmatprep.subr.mxu0 0.0
      %669 = vmatpush1.msra.mxu0 0.0
      %670 = vmatprep.subr.mxu0 0.0
      %671 = vmatpush1.msra.mxu0 0.0
      %672 = vmatprep.subr.mxu0 0.0
      %673 = vmatpush1.msra.mxu0 0.0
      %674 = vmatprep.subr.mxu0 0.0
      %675 = vmatpush1.msra.mxu0 0.0
      %676 = vmatprep.subr.mxu0 0.0
      %677 = vmatpush1.msra.mxu0 0.0
      %678 = vmatprep.subr.mxu0 0.0
      %679 = vmatpush1.msra.mxu0 0.0
      %680 = vmatprep.subr.mxu0 0.0
      %681 = vmatpush1.msra.mxu0 0.0
      %682 = vmatprep.subr.mxu0 0.0
      %683 = vmatpush1.msra.mxu0 0.0
      %684 = vmatprep.subr.mxu0 0.0
      %685 = vmatpush1.msra.mxu0 0.0
      %686 = vmatprep.subr.mxu0 0.0
      %687 = vmatpush1.msra.mxu0 0.0
      %688 = vmatprep.subr.mxu0 0.0
      %689 = vmatpush1.msra.mxu0 0.0
      %690 = vmatprep.subr.mxu0 0.0
      %691 = vmatpush1.msra.mxu0 0.0
      %692 = vmatprep.subr.mxu0 0.0
      %693 = vmatpush1.msra.mxu0 %v662
      %694 = vmatprep.subr.mxu0 0.0
      %695 = vmatpush1.msra.mxu0 %v627
      %696 = vmatprep.subr.mxu0 0.0
      %697 = vmatpush2.msra.mxu0 0.0
      %698 = vmatprep.subr.mxu0 0.0
      %699 = vmatpush2.msra.mxu0 0.0
      %700 = vmatprep.subr.mxu0 0.0
      %701 = vmatpush2.msra.mxu0 0.0
      %702 = vmatprep.subr.mxu0 0.0
      %703 = vmatpush2.msra.mxu0 0.0
      %704 = vmatprep.subr.mxu0 0.0
      %705 = vmatpush2.msra.mxu0 0.0
      %706 = vmatprep.subr.mxu0 0.0
      %707 = vmatpush2.msra.mxu0 0.0
      %708 = vmatprep.subr.mxu0 0.0
      %709 = vmatpush2.msra.mxu0 0.0
      %710 = vmatprep.subr.mxu0 0.0
      %711 = vmatpush2.msra.mxu0 0.0
      %712 = vmatprep.subr.mxu0 0.0
      %713 = vmatpush2.msra.mxu0 0.0
      %714 = vmatprep.subr.mxu0 0.0
      %715 = vmatpush2.msra.mxu0 0.0
      %716 = vmatprep.subr.mxu0 0.0
      %717 = vmatpush2.msra.mxu0 0.0
      %718 = vmatprep.subr.mxu0 0.0
      %719 = vmatpush2.msra.mxu0 0.0
      %720 = vmatprep.subr.mxu0 0.0
      %721 = vmatpush2.msra.mxu0 0.0
      %722 = vmatprep.subr.mxu0 0.0
      %723 = vmatpush2.msra.mxu0 0.0
      %724 = vmatprep.subr.mxu0 0.0
      %725 = vmatpush2.msra.mxu0 0.0
      %726 = vmatprep.subr.mxu0 0.0
      %727 = vmatpush2.msra.mxu0 0.0
      %728 = vmatprep.mubr.f32.mxu0 0.0
      %729 = vmatmul.mubr.f32.gmra.mxu0 %v655
      %v730 = vpop.f32.mrf.mxu0
      %v731 = vadd.f32 0.0, %v730
      %v732 = vpop.f32.mrf.mxu0
      %733 = vmatprep.mubr.f32.mxu0 0.0
      %734 = vmatmul.mubr.f32.gmra.mxu0 %v658
      %v735 = vpop.f32.mrf.mxu0
      %v736 = vadd.f32 0.0, %v735
      %v737 = vpop.f32.mrf.mxu0
      %738 = vdwg.mxu0
      %v740 = vsel %vm653, %v644, 0
      %v743 = vsel %vm653, %v645, 0
      %v746 = vsel %vm660, %v555, 0
      %748 = vmatprep.subr.mxu0 0.0
      %749 = vmatpush1.msra.mxu0 0.0
      %750 = vmatprep.subr.mxu0 0.0
      %751 = vmatpush1.msra.mxu0 0.0
      %752 = vmatprep.subr.mxu0 0.0
      %753 = vmatpush1.msra.mxu0 0.0
      %754 = vmatprep.subr.mxu0 0.0
      %755 = vmatpush1.msra.mxu0 0.0
      %756 = vmatprep.subr.mxu0 0.0
      %757 = vmatpush1.msra.mxu0 0.0
      %758 = vmatprep.subr.mxu0 0.0
      %759 = vmatpush1.msra.mxu0 0.0
      %760 = vmatprep.subr.mxu0 0.0
      %761 = vmatpush1.msra.mxu0 0.0
      %762 = vmatprep.subr.mxu0 0.0
      %763 = vmatpush1.msra.mxu0 0.0
      %764 = vmatprep.subr.mxu0 0.0
      %765 = vmatpush1.msra.mxu0 0.0
      %766 = vmatprep.subr.mxu0 0.0
      %767 = vmatpush1.msra.mxu0 0.0
      %768 = vmatprep.subr.mxu0 0.0
      %769 = vmatpush1.msra.mxu0 0.0
      %770 = vmatprep.subr.mxu0 0.0
      %771 = vmatpush1.msra.mxu0 0.0
      %772 = vmatprep.subr.mxu0 0.0
      %773 = vmatpush1.msra.mxu0 0.0
      %774 = vmatprep.subr.mxu0 0.0
      %775 = vmatpush1.msra.mxu0 0.0
      %776 = vmatprep.subr.mxu0 0.0
      %777 = vmatpush1.msra.mxu0 %v746
      %778 = vmatprep.subr.mxu0 0.0
      %779 = vmatpush1.msra.mxu0 %v550
      %780 = vmatprep.subr.mxu0 0.0
      %781 = vmatpush2.msra.mxu0 0.0
      %782 = vmatprep.subr.mxu0 0.0
      %783 = vmatpush2.msra.mxu0 0.0
      %784 = vmatprep.subr.mxu0 0.0
      %785 = vmatpush2.msra.mxu0 0.0
      %786 = vmatprep.subr.mxu0 0.0
      %787 = vmatpush2.msra.mxu0 0.0
      %788 = vmatprep.subr.mxu0 0.0
      %789 = vmatpush2.msra.mxu0 0.0
      %790 = vmatprep.subr.mxu0 0.0
      %791 = vmatpush2.msra.mxu0 0.0
      %792 = vmatprep.subr.mxu0 0.0
      %793 = vmatpush2.msra.mxu0 0.0
      %794 = vmatprep.subr.mxu0 0.0
      %795 = vmatpush2.msra.mxu0 0.0
      %796 = vmatprep.subr.mxu0 0.0
      %797 = vmatpush2.msra.mxu0 0.0
      %798 = vmatprep.subr.mxu0 0.0
      %799 = vmatpush2.msra.mxu0 0.0
      %800 = vmatprep.subr.mxu0 0.0
      %801 = vmatpush2.msra.mxu0 0.0
      %802 = vmatprep.subr.mxu0 0.0
      %803 = vmatpush2.msra.mxu0 0.0
      %804 = vmatprep.subr.mxu0 0.0
      %805 = vmatpush2.msra.mxu0 0.0
      %806 = vmatprep.subr.mxu0 0.0
      %807 = vmatpush2.msra.mxu0 0.0
      %808 = vmatprep.subr.mxu0 0.0
      %809 = vmatpush2.msra.mxu0 0.0
      %810 = vmatprep.subr.mxu0 0.0
      %811 = vmatpush2.msra.mxu0 0.0
      %812 = vmatprep.mubr.f32.mxu0 0.0
      %813 = vmatmul.mubr.f32.gmra.mxu0 %v740
      %v814 = vpop.f32.mrf.mxu0
      %v815 = vadd.f32 %v731, %v814
      %v816 = vpop.f32.mrf.mxu0
      %817 = vmatprep.mubr.f32.mxu0 0.0
      %818 = vmatmul.mubr.f32.gmra.mxu0 %v743
      %v819 = vpop.f32.mrf.mxu0
      %v820 = vadd.f32 %v736, %v819
      %v821 = vpop.f32.mrf.mxu0
      %822 = vdwg.mxu0
      %v823 = vmax.f32 %v815, -1.0
      %v824 = vmax.f32 %v820, -1.0
      %v825 = vmin.f32 %v823, 1.0
      %v826 = vmin.f32 %v824, 1.0
      %vm827 = vcmask 64512
      %828 = vst.msk [vmem:[%s356] sm:$0xff] %vm827, %v825
      %vm829 = vcmask 59392
      %830 = vst.msk [vmem:[%s356 + $0x8] sm:$0x7] %vm829, %v826
      %p831 = scmp.lt.s32.totalorder %s24, 1
      %s832 = scalar_select %p831, %s24, 1
      %p833 = scmp.lt.s32.totalorder %s25, 1
      %s834 = scalar_select %p833, %s25, 1
      %s835 = smul.addr %s834, 2
      %s836 = smul.addr %s832, 4
      %s837 = sadd.s32 %s835, %s836
      %s838 = smul.addr %s837, 8
      %s839 = scalar_lea.vmem %s7, %s838
      // Predicated region
      $region49: #{y_net_forward.5} parent=47 // pred_check
        %p840 = pneg %p219
      $region50: #{y_net_forward.5} parent=47 // pred_check_branch
        %842 = sbr.rel (%p840) target = $region52
      $region51: #{y_net_forward.5} parent=47 // pred_region
        _
      $region52: #{y_net_forward.5} parent=47 // pred_fallthru
        _
    $region48: #{y_net_forward.5} parent=5 // pred_fallthru
      _
    %p843 = scmp.le.s32.totalorder 2, %s15
    // Predicated region
    $region53: #{y_net_forward.5} parent=5 // pred_check
      %p844 = pneg %p843
    $region54: #{y_net_forward.5} parent=5 // pred_check_branch
      %846 = sbr.rel (%p844) target = $region56
    $region55: #{y_net_forward.5} parent=5 // pred_region
      %s847 = ssub.s32 %s15, 2
      // Predicated region
      $region57: #{y_net_forward.5} parent=55 // pred_check
        %p848 = pneg %p225
      $region58: #{y_net_forward.5} parent=55 // pred_check_branch
        %850 = sbr.rel (%p848) target = $region60
      $region59: #{y_net_forward.5} parent=55 // pred_region
        %p851 = scmp.lt.s32.totalorder %s26, 1
        %s852 = scalar_select %p851, %s26, 1
        %p853 = scmp.lt.s32.totalorder %s27, 1
        %s854 = scalar_select %p853, %s27, 1
        %s855 = smul.addr %s854, 2
        %s856 = smul.addr %s852, 4
        %s857 = sadd.s32 %s855, %s856
        %s858 = smul.addr %s857, 8
        %s859 = scalar_lea.vmem %s7, %s858
      $region60: #{y_net_forward.5} parent=55 // pred_fallthru
        _
    $region56: #{y_net_forward.5} parent=5 // pred_fallthru
      _
  $region6: #{y_net_forward.5} parent=0 // loop_footer
    %s19 = sadd.s32 1, %s15
  $region7: #{y_net_forward.5} parent=0 // loop_footer_branch
    %14 = sbr.rel target = $region3
  $region8: #{y_net_forward.5} parent=0 // loop_exit
    _

// kernel: y_net_forward.4
$region0: #{y_net_forward.4}
  #allocation0 [shape = 'u32[]', space=smem, size = 0x4, offset = 0x4, fixed_abs, tag = 'smem constant byte address 0x4 - core index']
  #allocation1 [shape = 'u32[144,128]{1,0:T(1,128)}', space=vmem, size = 0x12000, scoped, tag = 'internal scratch']
  %s0 = inlined_call_operand.vmem [shape: f32[2,10,16], index: 0, kind: input, shape index: {}]
  %s1 = inlined_call_operand.vmem [shape: f32[2,16,32], index: 1, kind: input, shape index: {}]
  %s2 = inlined_call_operand.vmem [shape: f32[2,1,32], index: 2, kind: input, shape index: {}]
  %s3 = inlined_call_operand.vmem [shape: f32[2,1,32], index: 3, kind: input, shape index: {}]
  %s4 = inlined_call_operand.vmem [shape: f32[2,1,32], index: 4, kind: input, shape index: {}]
  %s5 = inlined_call_operand.vmem [shape: f32[2,3,32], index: 5, kind: input, shape index: {}]
  %s6 = inlined_call_operand.vmem [shape: f32[2,1,32], index: 6, kind: input, shape index: {}]
  %s7 = inlined_call_operand.vmem [shape: f32[2,1,32], index: 7, kind: input, shape index: {}]
  %s8 = inlined_call_operand.vmem [shape: f32[2,1,32], index: 8, kind: input, shape index: {}]
  %s9 = inlined_call_operand.vmem [shape: f32[2,32,32], index: 9, kind: input, shape index: {}]
  %s10 = inlined_call_operand.vmem [shape: f32[2,1,32], index: 10, kind: input, shape index: {}]
  %s11 = inlined_call_operand.vmem [shape: f32[2,2], index: 11, kind: input, shape index: {}]
  %s12 = inlined_call_operand.vmem [shape: f32[2,10,16], index: 12, kind: output, shape index: {}]
  %s13 = sld [smem:[#allocation0]]
  $region81: #{y_net_forward.4} parent=0
    _
  %s15 = ssub.s32 1, %s13
  %s16 = scalar_select 0, %s15, %s13
  loop: start=0, step=1, limit=4
  $region2: #{y_net_forward.4} parent=0 // loop_pre_header
    _
  $region3: #{y_net_forward.4} parent=0 // loop_header
    %s18 = sphi 0, %s22
    %p19 = scmp.ge.s32.totalorder %s18, 4
    %s28 = sphi 0, %s30
    %s31 = sphi 0, %s28
    %s32 = sphi 0, %s31
    %s48 = sphi 0, %s32
    %s52 = sphi 0, %s52
    %s54 = sphi 0, %s52
    %s55 = sphi 0, %s54
    %s69 = sphi 0, %s55
    %s73 = sphi 0, %s73
    %s75 = sphi 0, %s73
    %s76 = sphi 0, %s75
    %s90 = sphi 0, %s76
    %s94 = sphi 0, %s94
    %s96 = sphi 0, %s94
    %s97 = sphi 0, %s96
    %s111 = sphi 0, %s97
    %s115 = sphi 0, %s115
    %s117 = sphi 0, %s115
    %s118 = sphi 0, %s117
    %s132 = sphi 0, %s118
    %s136 = sphi 0, %s136
    %s138 = sphi 0, %s136
    %s139 = sphi 0, %s138
    %s153 = sphi 0, %s139
    %s157 = sphi 0, %s157
    %s159 = sphi 0, %s157
    %s160 = sphi 0, %s159
    %s174 = sphi 0, %s160
    %s178 = sphi 0, %s178
    %s180 = sphi 0, %s178
    %s181 = sphi 0, %s180
    %s195 = sphi 0, %s181
    %s199 = sphi 0, %s199
    %s201 = sphi 0, %s199
    %s202 = sphi 0, %s201
    %s216 = sphi 0, %s202
    %s220 = sphi 0, %s220
    %s222 = sphi 0, %s220
    %s223 = sphi 0, %s222
    %s237 = sphi 0, %s223
    %s241 = sphi 0, %s241
    %s243 = sphi 0, %s241
    %s244 = sphi 0, %s243
    %s258 = sphi 0, %s244
    %s262 = sphi 0, %s262
    %s264 = sphi 0, %s262
    %s265 = sphi 0, %s264
    %s279 = sphi 0, %s265
    %s285 = sphi 0, %s287
    %s288 = sphi 0, %s285
    %s289 = sphi 0, %s288
    %s305 = sphi 0, %s289
  $region4: #{y_net_forward.4} parent=0 // loop_header_branch
    %21 = sbr.rel (%p19) target = $region8
  $region5: #{y_net_forward.4} parent=0 // loop_body
    %s23 = ssub.s32 %s18, 1
    %s24 = ssub.s32 %s18, 2
    %s25 = sadd.s32 %s18, 1
    %s26 = ssub.s32 %s18, %s25
    %p27 = scmp.eq.s32.totalorder %s26, 0
    %s29 = sadd.s32 %s28, 1
    %s30 = scalar_select %p27, %s28, %s29
    %p33 = pneg %p27
    %p34 = scmp.eq.s32.totalorder %s18, 1
    %p35 = por %p33, %p34
    %p36 = scmp.ne.s32.totalorder %s28, %s31
    %p37 = scmp.eq.s32.totalorder %s18, 0
    %p38 = por %p36, %p37
    %p39 = scmp.ne.s32.totalorder %s28, %s31
    %p40 = scmp.eq.s32.totalorder %s23, 1
    %p41 = por %p39, %p40
    %p42 = scmp.ne.s32.totalorder %s31, %s32
    %p43 = scmp.eq.s32.totalorder %s23, 0
    %p44 = por %p42, %p43
    %p45 = scmp.ne.s32.totalorder %s31, %s32
    %p46 = scmp.eq.s32.totalorder %s24, 1
    %p47 = por %p45, %p46
    %p49 = scmp.ne.s32.totalorder %s32, %s48
    %p50 = scmp.eq.s32.totalorder %s24, 0
    %p51 = por %p49, %p50
    %s53 = sadd.s32 %s52, 1
    %p56 = scmp.eq.s32.totalorder %s18, 1
    %p57 = scmp.ne.s32.totalorder %s52, %s54
    %p58 = scmp.eq.s32.totalorder %s18, 0
    %p59 = por %p57, %p58
    %p60 = scmp.ne.s32.totalorder %s52, %s54
    %p61 = scmp.eq.s32.totalorder %s23, 1
    %p62 = por %p60, %p61
    %p63 = scmp.ne.s32.totalorder %s54, %s55
    %p64 = scmp.eq.s32.totalorder %s23, 0
    %p65 = por %p63, %p64
    %p66 = scmp.ne.s32.totalorder %s54, %s55
    %p67 = scmp.eq.s32.totalorder %s24, 1
    %p68 = por %p66, %p67
    %p70 = scmp.ne.s32.totalorder %s55, %s69
    %p71 = scmp.eq.s32.totalorder %s24, 0
    %p72 = por %p70, %p71
    %s74 = sadd.s32 %s73, 1
    %p77 = scmp.eq.s32.totalorder %s18, 1
    %p78 = scmp.ne.s32.totalorder %s73, %s75
    %p79 = scmp.eq.s32.totalorder %s18, 0
    %p80 = por %p78, %p79
    %p81 = scmp.ne.s32.totalorder %s73, %s75
    %p82 = scmp.eq.s32.totalorder %s23, 1
    %p83 = por %p81, %p82
    %p84 = scmp.ne.s32.totalorder %s75, %s76
    %p85 = scmp.eq.s32.totalorder %s23, 0
    %p86 = por %p84, %p85
    %p87 = scmp.ne.s32.totalorder %s75, %s76
    %p88 = scmp.eq.s32.totalorder %s24, 1
    %p89 = por %p87, %p88
    %p91 = scmp.ne.s32.totalorder %s76, %s90
    %p92 = scmp.eq.s32.totalorder %s24, 0
    %p93 = por %p91, %p92
    %s95 = sadd.s32 %s94, 1
    %p98 = scmp.eq.s32.totalorder %s18, 1
    %p99 = scmp.ne.s32.totalorder %s94, %s96
    %p100 = scmp.eq.s32.totalorder %s18, 0
    %p101 = por %p99, %p100
    %p102 = scmp.ne.s32.totalorder %s94, %s96
    %p103 = scmp.eq.s32.totalorder %s23, 1
    %p104 = por %p102, %p103
    %p105 = scmp.ne.s32.totalorder %s96, %s97
    %p106 = scmp.eq.s32.totalorder %s23, 0
    %p107 = por %p105, %p106
    %p108 = scmp.ne.s32.totalorder %s96, %s97
    %p109 = scmp.eq.s32.totalorder %s24, 1
    %p110 = por %p108, %p109
    %p112 = scmp.ne.s32.totalorder %s97, %s111
    %p113 = scmp.eq.s32.totalorder %s24, 0
    %p114 = por %p112, %p113
    %s116 = sadd.s32 %s115, 1
    %p119 = scmp.eq.s32.totalorder %s18, 1
    %p120 = scmp.ne.s32.totalorder %s115, %s117
    %p121 = scmp.eq.s32.totalorder %s18, 0
    %p122 = por %p120, %p121
    %p123 = scmp.ne.s32.totalorder %s115, %s117
    %p124 = scmp.eq.s32.totalorder %s23, 1
    %p125 = por %p123, %p124
    %p126 = scmp.ne.s32.totalorder %s117, %s118
    %p127 = scmp.eq.s32.totalorder %s23, 0
    %p128 = por %p126, %p127
    %p129 = scmp.ne.s32.totalorder %s117, %s118
    %p130 = scmp.eq.s32.totalorder %s24, 1
    %p131 = por %p129, %p130
    %p133 = scmp.ne.s32.totalorder %s118, %s132
    %p134 = scmp.eq.s32.totalorder %s24, 0
    %p135 = por %p133, %p134
    %s137 = sadd.s32 %s136, 1
    %p140 = scmp.eq.s32.totalorder %s18, 1
    %p141 = scmp.ne.s32.totalorder %s136, %s138
    %p142 = scmp.eq.s32.totalorder %s18, 0
    %p143 = por %p141, %p142
    %p144 = scmp.ne.s32.totalorder %s136, %s138
    %p145 = scmp.eq.s32.totalorder %s23, 1
    %p146 = por %p144, %p145
    %p147 = scmp.ne.s32.totalorder %s138, %s139
    %p148 = scmp.eq.s32.totalorder %s23, 0
    %p149 = por %p147, %p148
    %p150 = scmp.ne.s32.totalorder %s138, %s139
    %p151 = scmp.eq.s32.totalorder %s24, 1
    %p152 = por %p150, %p151
    %p154 = scmp.ne.s32.totalorder %s139, %s153
    %p155 = scmp.eq.s32.totalorder %s24, 0
    %p156 = por %p154, %p155
    %s158 = sadd.s32 %s157, 1
    %p161 = scmp.eq.s32.totalorder %s18, 1
    %p162 = scmp.ne.s32.totalorder %s157, %s159
    %p163 = scmp.eq.s32.totalorder %s18, 0
    %p164 = por %p162, %p163
    %p165 = scmp.ne.s32.totalorder %s157, %s159
    %p166 = scmp.eq.s32.totalorder %s23, 1
    %p167 = por %p165, %p166
    %p168 = scmp.ne.s32.totalorder %s159, %s160
    %p169 = scmp.eq.s32.totalorder %s23, 0
    %p170 = por %p168, %p169
    %p171 = scmp.ne.s32.totalorder %s159, %s160
    %p172 = scmp.eq.s32.totalorder %s24, 1
    %p173 = por %p171, %p172
    %p175 = scmp.ne.s32.totalorder %s160, %s174
    %p176 = scmp.eq.s32.totalorder %s24, 0
    %p177 = por %p175, %p176
    %s179 = sadd.s32 %s178, 1
    %p182 = scmp.eq.s32.totalorder %s18, 1
    %p183 = scmp.ne.s32.totalorder %s178, %s180
    %p184 = scmp.eq.s32.totalorder %s18, 0
    %p185 = por %p183, %p184
    %p186 = scmp.ne.s32.totalorder %s178, %s180
    %p187 = scmp.eq.s32.totalorder %s23, 1
    %p188 = por %p186, %p187
    %p189 = scmp.ne.s32.totalorder %s180, %s181
    %p190 = scmp.eq.s32.totalorder %s23, 0
    %p191 = por %p189, %p190
    %p192 = scmp.ne.s32.totalorder %s180, %s181
    %p193 = scmp.eq.s32.totalorder %s24, 1
    %p194 = por %p192, %p193
    %p196 = scmp.ne.s32.totalorder %s181, %s195
    %p197 = scmp.eq.s32.totalorder %s24, 0
    %p198 = por %p196, %p197
    %s200 = sadd.s32 %s199, 1
    %p203 = scmp.eq.s32.totalorder %s18, 1
    %p204 = scmp.ne.s32.totalorder %s199, %s201
    %p205 = scmp.eq.s32.totalorder %s18, 0
    %p206 = por %p204, %p205
    %p207 = scmp.ne.s32.totalorder %s199, %s201
    %p208 = scmp.eq.s32.totalorder %s23, 1
    %p209 = por %p207, %p208
    %p210 = scmp.ne.s32.totalorder %s201, %s202
    %p211 = scmp.eq.s32.totalorder %s23, 0
    %p212 = por %p210, %p211
    %p213 = scmp.ne.s32.totalorder %s201, %s202
    %p214 = scmp.eq.s32.totalorder %s24, 1
    %p215 = por %p213, %p214
    %p217 = scmp.ne.s32.totalorder %s202, %s216
    %p218 = scmp.eq.s32.totalorder %s24, 0
    %p219 = por %p217, %p218
    %s221 = sadd.s32 %s220, 1
    %p224 = scmp.eq.s32.totalorder %s18, 1
    %p225 = scmp.ne.s32.totalorder %s220, %s222
    %p226 = scmp.eq.s32.totalorder %s18, 0
    %p227 = por %p225, %p226
    %p228 = scmp.ne.s32.totalorder %s220, %s222
    %p229 = scmp.eq.s32.totalorder %s23, 1
    %p230 = por %p228, %p229
    %p231 = scmp.ne.s32.totalorder %s222, %s223
    %p232 = scmp.eq.s32.totalorder %s23, 0
    %p233 = por %p231, %p232
    %p234 = scmp.ne.s32.totalorder %s222, %s223
    %p235 = scmp.eq.s32.totalorder %s24, 1
    %p236 = por %p234, %p235
    %p238 = scmp.ne.s32.totalorder %s223, %s237
    %p239 = scmp.eq.s32.totalorder %s24, 0
    %p240 = por %p238, %p239
    %s242 = sadd.s32 %s241, 1
    %p245 = scmp.eq.s32.totalorder %s18, 1
    %p246 = scmp.ne.s32.totalorder %s241, %s243
    %p247 = scmp.eq.s32.totalorder %s18, 0
    %p248 = por %p246, %p247
    %p249 = scmp.ne.s32.totalorder %s241, %s243
    %p250 = scmp.eq.s32.totalorder %s23, 1
    %p251 = por %p249, %p250
    %p252 = scmp.ne.s32.totalorder %s243, %s244
    %p253 = scmp.eq.s32.totalorder %s23, 0
    %p254 = por %p252, %p253
    %p255 = scmp.ne.s32.totalorder %s243, %s244
    %p256 = scmp.eq.s32.totalorder %s24, 1
    %p257 = por %p255, %p256
    %p259 = scmp.ne.s32.totalorder %s244, %s258
    %p260 = scmp.eq.s32.totalorder %s24, 0
    %p261 = por %p259, %p260
    %s263 = sadd.s32 %s262, 1
    %p266 = scmp.eq.s32.totalorder %s18, 1
    %p267 = scmp.ne.s32.totalorder %s262, %s264
    %p268 = scmp.eq.s32.totalorder %s18, 0
    %p269 = por %p267, %p268
    %p270 = scmp.ne.s32.totalorder %s262, %s264
    %p271 = scmp.eq.s32.totalorder %s23, 1
    %p272 = por %p270, %p271
    %p273 = scmp.ne.s32.totalorder %s264, %s265
    %p274 = scmp.eq.s32.totalorder %s23, 0
    %p275 = por %p273, %p274
    %p276 = scmp.ne.s32.totalorder %s264, %s265
    %p277 = scmp.eq.s32.totalorder %s24, 1
    %p278 = por %p276, %p277
    %p280 = scmp.ne.s32.totalorder %s265, %s279
    %p281 = scmp.eq.s32.totalorder %s24, 0
    %p282 = por %p280, %p281
    %s283 = ssub.s32 %s18, %s25
    %p284 = scmp.eq.s32.totalorder %s283, 0
    %s286 = sadd.s32 %s285, 1
    %s287 = scalar_select %p284, %s285, %s286
    %p290 = pneg %p284
    %p291 = scmp.eq.s32.totalorder %s18, 1
    %p292 = por %p290, %p291
    %p293 = scmp.ne.s32.totalorder %s285, %s288
    %p294 = scmp.eq.s32.totalorder %s18, 0
    %p295 = por %p293, %p294
    %p296 = scmp.ne.s32.totalorder %s285, %s288
    %p297 = scmp.eq.s32.totalorder %s23, 1
    %p298 = por %p296, %p297
    %p299 = scmp.ne.s32.totalorder %s288, %s289
    %p300 = scmp.eq.s32.totalorder %s23, 0
    %p301 = por %p299, %p300
    %p302 = scmp.ne.s32.totalorder %s288, %s289
    %p303 = scmp.eq.s32.totalorder %s24, 1
    %p304 = por %p302, %p303
    %p306 = scmp.ne.s32.totalorder %s289, %s305
    %p307 = scmp.eq.s32.totalorder %s24, 0
    %p308 = por %p306, %p307
    %p309 = scmp.le.s32.totalorder 1, %s18
    %p310 = scmp.lt.s32.totalorder %s18, 3
    %p311 = pnand %p309, %p310
    %p312 = pneg %p311
    // Predicated region
    $region9: #{y_net_forward.4} parent=5 // pred_check
      _
    $region10: #{y_net_forward.4} parent=5 // pred_check_branch
      %314 = sbr.rel (%p311) target = $region12
    $region11: #{y_net_forward.4} parent=5 // pred_region
      %s315 = ssub.s32 %s18, 1
      // Predicated region
      $region13: #{y_net_forward.4} parent=11 // pred_check
        %p316 = pneg %p65
      $region14: #{y_net_forward.4} parent=11 // pred_check_branch
        %318 = sbr.rel (%p316) target = $region16
      $region15: #{y_net_forward.4} parent=11 // pred_region
        _
      $region16: #{y_net_forward.4} parent=11 // pred_fallthru
        _
      // Predicated region
      $region17: #{y_net_forward.4} parent=11 // pred_check
        %p319 = pneg %p86
      $region18: #{y_net_forward.4} parent=11 // pred_check_branch
        %321 = sbr.rel (%p319) target = $region20
      $region19: #{y_net_forward.4} parent=11 // pred_region
        _
      $region20: #{y_net_forward.4} parent=11 // pred_fallthru
        _
      // Predicated region
      $region21: #{y_net_forward.4} parent=11 // pred_check
        %p322 = pneg %p107
      $region22: #{y_net_forward.4} parent=11 // pred_check_branch
        %324 = sbr.rel (%p322) target = $region24
      $region23: #{y_net_forward.4} parent=11 // pred_region
        _
      $region24: #{y_net_forward.4} parent=11 // pred_fallthru
        _
      // Predicated region
      $region25: #{y_net_forward.4} parent=11 // pred_check
        %p325 = pneg %p128
      $region26: #{y_net_forward.4} parent=11 // pred_check_branch
        %327 = sbr.rel (%p325) target = $region28
      $region27: #{y_net_forward.4} parent=11 // pred_region
        _
      $region28: #{y_net_forward.4} parent=11 // pred_fallthru
        _
      // Predicated region
      $region29: #{y_net_forward.4} parent=11 // pred_check
        %p328 = pneg %p149
      $region30: #{y_net_forward.4} parent=11 // pred_check_branch
        %330 = sbr.rel (%p328) target = $region32
      $region31: #{y_net_forward.4} parent=11 // pred_region
        _
      $region32: #{y_net_forward.4} parent=11 // pred_fallthru
        _
      // Predicated region
      $region33: #{y_net_forward.4} parent=11 // pred_check
        %p331 = pneg %p170
      $region34: #{y_net_forward.4} parent=11 // pred_check_branch
        %333 = sbr.rel (%p331) target = $region36
      $region35: #{y_net_forward.4} parent=11 // pred_region
        _
      $region36: #{y_net_forward.4} parent=11 // pred_fallthru
        _
      // Predicated region
      $region37: #{y_net_forward.4} parent=11 // pred_check
        %p334 = pneg %p191
      $region38: #{y_net_forward.4} parent=11 // pred_check_branch
        %336 = sbr.rel (%p334) target = $region40
      $region39: #{y_net_forward.4} parent=11 // pred_region
        _
      $region40: #{y_net_forward.4} parent=11 // pred_fallthru
        _
      // Predicated region
      $region41: #{y_net_forward.4} parent=11 // pred_check
        %p337 = pneg %p212
      $region42: #{y_net_forward.4} parent=11 // pred_check_branch
        %339 = sbr.rel (%p337) target = $region44
      $region43: #{y_net_forward.4} parent=11 // pred_region
        _
      $region44: #{y_net_forward.4} parent=11 // pred_fallthru
        _
      // Predicated region
      $region45: #{y_net_forward.4} parent=11 // pred_check
        %p340 = pneg %p233
      $region46: #{y_net_forward.4} parent=11 // pred_check_branch
        %342 = sbr.rel (%p340) target = $region48
      $region47: #{y_net_forward.4} parent=11 // pred_region
        _
      $region48: #{y_net_forward.4} parent=11 // pred_fallthru
        _
      // Predicated region
      $region49: #{y_net_forward.4} parent=11 // pred_check
        %p343 = pneg %p254
      $region50: #{y_net_forward.4} parent=11 // pred_check_branch
        %345 = sbr.rel (%p343) target = $region52
      $region51: #{y_net_forward.4} parent=11 // pred_region
        _
      $region52: #{y_net_forward.4} parent=11 // pred_fallthru
        _
      // Predicated region
      $region53: #{y_net_forward.4} parent=11 // pred_check
        %p346 = pneg %p275
      $region54: #{y_net_forward.4} parent=11 // pred_check_branch
        %348 = sbr.rel (%p346) target = $region56
      $region55: #{y_net_forward.4} parent=11 // pred_region
        _
      $region56: #{y_net_forward.4} parent=11 // pred_fallthru
        _
    $region12: #{y_net_forward.4} parent=5 // pred_fallthru
      _
    %p349 = scmp.lt.s32.totalorder %s18, 2
    // Predicated region
    $region57: #{y_net_forward.4} parent=5 // pred_check
      %p350 = pneg %p349
    $region58: #{y_net_forward.4} parent=5 // pred_check_branch
      %352 = sbr.rel (%p350) target = $region60
    $region59: #{y_net_forward.4} parent=5 // pred_region
      // Predicated region
      $region61: #{y_net_forward.4} parent=59 // pred_check
        %p353 = pneg %p38
      $region62: #{y_net_forward.4} parent=59 // pred_check_branch
        %355 = sbr.rel (%p353) target = $region64
      $region63: #{y_net_forward.4} parent=59 // pred_region
        %p356 = scmp.lt.s32.totalorder %s18, 1
        %s357 = scalar_select %p356, %s18, 1
        %s358 = smul.addr %s357, 2
        %s359 = smul.addr %s358, 8
        %s360 = scalar_lea.vmem %s0, %s359
      $region64: #{y_net_forward.4} parent=59 // pred_fallthru
        _
    $region60: #{y_net_forward.4} parent=5 // pred_fallthru
      _
    %p361 = scmp.le.s32.totalorder 1, %s18
    %p362 = scmp.lt.s32.totalorder %s18, 3
    %p363 = pnand %p361, %p362
    %p364 = pneg %p363
    // Predicated region
    $region65: #{y_net_forward.4} parent=5 // pred_check
      _
    $region66: #{y_net_forward.4} parent=5 // pred_check_branch
      %366 = sbr.rel (%p363) target = $region68
    $region67: #{y_net_forward.4} parent=5 // pred_region
      %s367 = ssub.s32 %s18, 1
      %p368 = scmp.lt.s32.totalorder %s23, 1
      %s369 = scalar_select %p368, %s23, 1
      %s370 = smul.addr %s369, 2
      %s371 = smul.addr %s370, 8
      %s372 = scalar_lea.vmem %s0, %s371
      %p373 = pneg %p44
      %p374 = pneg %p41
      %p375 = pneg %p65
      %p376 = pneg %p62
      %p377 = pneg %p86
      %p378 = pneg %p83
      %p379 = pneg %p107
      %p380 = pneg %p104
      %p381 = pneg %p128
      %p382 = pneg %p125
      %p383 = pneg %p149
      %p384 = pneg %p146
      %p385 = pneg %p170
      %p386 = pneg %p167
      %p387 = pneg %p191
      %p388 = pneg %p188
      %p389 = pneg %p212
      %p390 = pneg %p209
      %p391 = pneg %p233
      %p392 = pneg %p230
      %p393 = pneg %p254
      %p394 = pneg %p251
      %p395 = pneg %p275
      %p396 = pneg %p272
      %p397 = pneg %p301
      %p398 = pneg %p298
      %p399 = scmp.lt.s32.totalorder %s23, 1
      %s400 = scalar_select %p399, %s23, 1
      %s401 = smul.addr %s400, 2
      %s402 = smul.addr %s401, 8
      %s403 = scalar_lea.vmem %s12, %s402
      %p404 = scmp.lt.s32.totalorder %s23, 1
      %s405 = scalar_select %p404, %s23, 1
      %s406 = smul.addr %s405, 2
      %s407 = smul.addr %s406, 8
      %s408 = scalar_lea.vmem %s0, %s407
      %p409 = scmp.lt.s32.totalorder %s23, 1
      %s410 = scalar_select %p409, %s23, 1
      %s411 = smul.addr %s410, 2
      %s412 = smul.addr %s411, 8
      %s413 = scalar_lea.vmem %s12, %s412
      %v414 = vld [vmem:[%s408] sm:$0xff]
      %v415 = vld [vmem:[%s408 + $0x8] sm:$0x3]
      %v416 = vlaneseq
      %v417 = vshrl.u32 %v416, 7
      %v418 = vadd.s32 %v417, 8
      %v419 = vlaneseq
      %v420 = vand.u32 %v419, 127
      %v421 = vld [vmem:[%s11] sm:$0x1]
      %s422 = vtos %v421
      %424 = vrot.lane.b32.xlu0 %v421, 127
      %v425 = vpop.permute.xlu0 %424
      %s427 = vtos %v425
      %v428 = vld [vmem:[%s1] sm:$0xff]
      %v429 = vld [vmem:[%s1 + $0x8] sm:$0xff]
      %v430 = vld [vmem:[%s2] sm:$0x1]
      %v432 = vlaneseq
      %v433 = vshrl.u32 %v432, 7
      %v434 = vsub.s32 0, %v433
      %v435 = vrot.slane %v430, %v434
      %vm437 = vcmask 130048
      %v439 = vsel %vm437, %v414, 0
      %v442 = vsel %vm437, %v415, 0
      %444 = vmatprep.subr.mxu0 0.0
      %445 = vmatpush1.msra.mxu0 0.0
      %446 = vmatprep.subr.mxu0 0.0
      %447 = vmatpush1.msra.mxu0 0.0
      %448 = vmatprep.subr.mxu0 0.0
      %449 = vmatpush1.msra.mxu0 0.0
      %450 = vmatprep.subr.mxu0 0.0
      %451 = vmatpush1.msra.mxu0 0.0
      %452 = vmatprep.subr.mxu0 0.0
      %453 = vmatpush1.msra.mxu0 0.0
      %454 = vmatprep.subr.mxu0 0.0
      %455 = vmatpush1.msra.mxu0 0.0
      %456 = vmatprep.subr.mxu0 0.0
      %457 = vmatpush1.msra.mxu0 0.0
      %458 = vmatprep.subr.mxu0 0.0
      %459 = vmatpush1.msra.mxu0 0.0
      %460 = vmatprep.subr.mxu0 0.0
      %461 = vmatpush1.msra.mxu0 0.0
      %462 = vmatprep.subr.mxu0 0.0
      %463 = vmatpush1.msra.mxu0 0.0
      %464 = vmatprep.subr.mxu0 0.0
      %465 = vmatpush1.msra.mxu0 0.0
      %466 = vmatprep.subr.mxu0 0.0
      %467 = vmatpush1.msra.mxu0 0.0
      %468 = vmatprep.subr.mxu0 0.0
      %469 = vmatpush1.msra.mxu0 0.0
      %470 = vmatprep.subr.mxu0 0.0
      %471 = vmatpush1.msra.mxu0 0.0
      %472 = vmatprep.subr.mxu0 0.0
      %473 = vmatpush1.msra.mxu0 %v429
      %474 = vmatprep.subr.mxu0 0.0
      %475 = vmatpush1.msra.mxu0 %v428
      %476 = vmatprep.subr.mxu0 0.0
      %477 = vmatpush2.msra.mxu0 0.0
      %478 = vmatprep.subr.mxu0 0.0
      %479 = vmatpush2.msra.mxu0 0.0
      %480 = vmatprep.subr.mxu0 0.0
      %481 = vmatpush2.msra.mxu0 0.0
      %482 = vmatprep.subr.mxu0 0.0
      %483 = vmatpush2.msra.mxu0 0.0
      %484 = vmatprep.subr.mxu0 0.0
      %485 = vmatpush2.msra.mxu0 0.0
      %486 = vmatprep.subr.mxu0 0.0
      %487 = vmatpush2.msra.mxu0 0.0
      %488 = vmatprep.subr.mxu0 0.0
      %489 = vmatpush2.msra.mxu0 0.0
      %490 = vmatprep.subr.mxu0 0.0
      %491 = vmatpush2.msra.mxu0 0.0
      %492 = vmatprep.subr.mxu0 0.0
      %493 = vmatpush2.msra.mxu0 0.0
      %494 = vmatprep.subr.mxu0 0.0
      %495 = vmatpush2.msra.mxu0 0.0
      %496 = vmatprep.subr.mxu0 0.0
      %497 = vmatpush2.msra.mxu0 0.0
      %498 = vmatprep.subr.mxu0 0.0
      %499 = vmatpush2.msra.mxu0 0.0
      %500 = vmatprep.subr.mxu0 0.0
      %501 = vmatpush2.msra.mxu0 0.0
      %502 = vmatprep.subr.mxu0 0.0
      %503 = vmatpush2.msra.mxu0 0.0
      %504 = vmatprep.subr.mxu0 0.0
      %505 = vmatpush2.msra.mxu0 0.0
      %506 = vmatprep.subr.mxu0 0.0
      %507 = vmatpush2.msra.mxu0 0.0
      %508 = vmatprep.mubr.f32.mxu0 0.0
      %509 = vmatmul.mubr.f32.gmra.mxu0 %v439
      %v510 = vpop.f32.mrf.mxu0
      %v511 = vadd.f32 %v435, %v510
      %v512 = vpop.f32.mrf.mxu0
      %513 = vmatprep.mubr.f32.mxu0 0.0
      %514 = vmatmul.mubr.f32.gmra.mxu0 %v442
      %v515 = vpop.f32.mrf.mxu0
      %v516 = vadd.f32 %v435, %v515
      %v517 = vpop.f32.mrf.mxu0
      %518 = vdwg.mxu0
      %vm519 = vcmp.ge.f32.partialorder %v511, 0.0
      %vm520 = vcmp.ge.f32.partialorder %v516, 0.0
      %v521 = vstv %s422
      %v522 = vmul.f32 %v521, %v511
      %v523 = vmul.f32 %v521, %v516
      %v524 = vsel %vm519, %v511, %v522
      %v525 = vsel %vm520, %v516, %v523
      %vm526 = vcmask 261120
      %v527 = vsel %vm526, %v524, 0.0
      %vm528 = vcmask 254976
      %v529 = vsel %vm528, %v525, 0.0
      %v530 = vadd.f32 %v527, %v529
      %531 = vadd.xlane.f32.xlu0 %v530
      %v532 = vpop.xlane.xlu0 %531
      %v533 = vrot.slane %v532, 4
      %v534 = vadd.f32 %v532, %v533
      %v535 = vrot.slane %v534, 2
      %v536 = vadd.f32 %v534, %v535
      %v537 = vrot.slane %v536, 1
      %v538 = vadd.f32 %v536, %v537
      %s539 = vtos %v538
      %v540 = vrcp.pop 320.0
      %s541 = vtos %v540
      %s542 = smul.f32 %s539, %s541
      %v543 = vmul.f32 %v524, %v524
      %v544 = vmul.f32 %v525, %v525
      %v545 = vsel %vm526, %v543, 0.0
      %v546 = vsel %vm528, %v544, 0.0
      %v547 = vadd.f32 %v545, %v546
      %548 = vadd.xlane.f32.xlu0 %v547
      %v549 = vpop.xlane.xlu0 %548
      %v550 = vrot.slane %v549, 4
      %v551 = vadd.f32 %v549, %v550
      %v552 = vrot.slane %v551, 2
      %v553 = vadd.f32 %v551, %v552
      %v554 = vrot.slane %v553, 1
      %v555 = vadd.f32 %v553, %v554
      %s556 = vtos %v555
      %v557 = vrcp.pop 320.0
      %s558 = vtos %v557
      %s559 = smul.f32 %s556, %s558
      %s560 = smul.f32 %s542, %s542
      %s561 = ssub.f32 %s559, %s560
      %v562 = vstv %s542
      %v563 = vsub.f32 %v524, %v562
      %v564 = vsub.f32 %v525, %v562
      %s565 = sadd.f32 %s561, 1e-08
      %v566 = vstv %s565
      %v567 = vrsqrt.pop %v566
      %s568 = vtos %v567
      %v569 = vstv %s568
      %v570 = vmul.f32 %v563, %v569
      %v571 = vmul.f32 %v564, %v569
      %v572 = vld [vmem:[%s3] sm:$0x1]
      %v574 = vlaneseq
      %v575 = vshrl.u32 %v574, 7
      %v576 = vsub.s32 0, %v575
      %v577 = vrot.slane %v572, %v576
      %v579 = vmul.f32 %v570, %v577
      %v580 = vmul.f32 %v571, %v577
      %v581 = vld [vmem:[%s4] sm:$0x1]
      %v583 = vlaneseq
      %v584 = vshrl.u32 %v583, 7
      %v585 = vsub.s32 0, %v584
      %v586 = vrot.slane %v581, %v585
      %v588 = vadd.f32 %v579, %v586
      %v589 = vadd.f32 %v580, %v586
      %v590 = vsub.s32 %v417, %v420
      %v591 = vsub.s32 %v418, %v420
      %vm592 = vcmp.eq.s32.totalorder %v590, 1
      %vm593 = vcmp.eq.s32.totalorder %v591, 1
      %v594 = vsel %vm592, 1, 0
      %v595 = vsel %vm593, 1, 0
      %v596 = vcvt.s32.f32 %v594
      %v597 = vcvt.s32.f32 %v595
      %v598 = vsub.s32 %v420, %v417
      %v599 = vsub.s32 %v420, %v418
      %vm600 = vcmp.eq.s32.totalorder %v598, 1
      %vm601 = vcmp.eq.s32.totalorder %v599, 1
      %v602 = vsel %vm600, 1, 0
      %v603 = vsel %vm601, 1, 0
      %v604 = vcvt.s32.f32 %v602
      %v605 = vcvt.s32.f32 %v603
      %v606 = vld [vmem:[%s5] sm:$0x7]
      %vm607 = vcmask 80896
      %v609 = vsel %vm607, %v596, 0
      %v612 = vsel %vm607, %v597, 0
      %vm614 = vcmask 1041408
      %v616 = vsel %vm614, %v589, 0
      %618 = vmatprep.subr.mxu0 0.0
      %619 = vmatpush1.msra.mxu0 0.0
      %620 = vmatprep.subr.mxu0 0.0
      %621 = vmatpush1.msra.mxu0 0.0
      %622 = vmatprep.subr.mxu0 0.0
      %623 = vmatpush1.msra.mxu0 0.0
      %624 = vmatprep.subr.mxu0 0.0
      %625 = vmatpush1.msra.mxu0 0.0
      %626 = vmatprep.subr.mxu0 0.0
      %627 = vmatpush1.msra.mxu0 0.0
      %628 = vmatprep.subr.mxu0 0.0
      %629 = vmatpush1.msra.mxu0 0.0
      %630 = vmatprep.subr.mxu0 0.0
      %631 = vmatpush1.msra.mxu0 0.0
      %632 = vmatprep.subr.mxu0 0.0
      %633 = vmatpush1.msra.mxu0 0.0
      %634 = vmatprep.subr.mxu0 0.0
      %635 = vmatpush1.msra.mxu0 0.0
      %636 = vmatprep.subr.mxu0 0.0
      %637 = vmatpush1.msra.mxu0 0.0
      %638 = vmatprep.subr.mxu0 0.0
      %639 = vmatpush1.msra.mxu0 0.0
      %640 = vmatprep.subr.mxu0 0.0
      %641 = vmatpush1.msra.mxu0 0.0
      %642 = vmatprep.subr.mxu0 0.0
      %643 = vmatpush1.msra.mxu0 0.0
      %644 = vmatprep.subr.mxu0 0.0
      %645 = vmatpush1.msra.mxu0 0.0
      %646 = vmatprep.subr.mxu0 0.0
      %647 = vmatpush1.msra.mxu0 %v616
      %648 = vmatprep.subr.mxu0 0.0
      %649 = vmatpush1.msra.mxu0 %v588
      %650 = vmatprep.subr.mxu0 0.0
      %651 = vmatpush2.msra.mxu0 0.0
      %652 = vmatprep.subr.mxu0 0.0
      %653 = vmatpush2.msra.mxu0 0.0
      %654 = vmatprep.subr.mxu0 0.0
      %655 = vmatpush2.msra.mxu0 0.0
      %656 = vmatprep.subr.mxu0 0.0
      %657 = vmatpush2.msra.mxu0 0.0
      %658 = vmatprep.subr.mxu0 0.0
      %659 = vmatpush2.msra.mxu0 0.0
      %660 = vmatprep.subr.mxu0 0.0
      %661 = vmatpush2.msra.mxu0 0.0
      %662 = vmatprep.subr.mxu0 0.0
      %663 = vmatpush2.msra.mxu0 0.0
      %664 = vmatprep.subr.mxu0 0.0
      %665 = vmatpush2.msra.mxu0 0.0
      %666 = vmatprep.subr.mxu0 0.0
      %667 = vmatpush2.msra.mxu0 0.0
      %668 = vmatprep.subr.mxu0 0.0
      %669 = vmatpush2.msra.mxu0 0.0
      %670 = vmatprep.subr.mxu0 0.0
      %671 = vmatpush2.msra.mxu0 0.0
      %672 = vmatprep.subr.mxu0 0.0
      %673 = vmatpush2.msra.mxu0 0.0
      %674 = vmatprep.subr.mxu0 0.0
      %675 = vmatpush2.msra.mxu0 0.0
      %676 = vmatprep.subr.mxu0 0.0
      %677 = vmatpush2.msra.mxu0 0.0
      %678 = vmatprep.subr.mxu0 0.0
      %679 = vmatpush2.msra.mxu0 0.0
      %680 = vmatprep.subr.mxu0 0.0
      %681 = vmatpush2.msra.mxu0 0.0
      %682 = vmatprep.mubr.f32.mxu0 0.0
      %683 = vmatmul.mubr.f32.gmra.mxu0 %v609
      %v684 = vpop.f32.mrf.mxu0
      %v685 = vadd.f32 0.0, %v684
      %v686 = vpop.f32.mrf.mxu0
      %687 = vmatprep.mubr.f32.mxu0 0.0
      %688 = vmatmul.mubr.f32.gmra.mxu0 %v612
      %v689 = vpop.f32.mrf.mxu0
      %v690 = vadd.f32 0.0, %v689
      %v691 = vpop.f32.mrf.mxu0
      %692 = vdwg.mxu0
      %v693 = vlaneseq
      %v694 = vshrl.u32 %v693, 7
      %v695 = vsub.s32 0, %v694
      %v696 = vrot.slane %v606, %v695
      %v697 = vmul.f32 %v696, %v685
      %v698 = vmul.f32 %v696, %v690
      %v699 = vlaneseq
      %v700 = vshrl.u32 %v699, 7
      %v701 = vsub.s32 1, %v700
      %v702 = vrot.slane %v606, %v701
      %v703 = vmul.f32 %v702, %v588
      %v704 = vmul.f32 %v702, %v589
      %v705 = vadd.f32 %v697, %v703
      %v706 = vadd.f32 %v698, %v704
      %v708 = vsel %vm607, %v604, 0
      %v711 = vsel %vm607, %v605, 0
      %713 = vmatprep.subr.mxu0 0.0
      %714 = vmatpush1.msra.mxu0 0.0
      %715 = vmatprep.subr.mxu0 0.0
      %716 = vmatpush1.msra.mxu0 0.0
      %717 = vmatprep.subr.mxu0 0.0
      %718 = vmatpush1.msra.mxu0 0.0
      %719 = vmatprep.subr.mxu0 0.0
      %720 = vmatpush1.msra.mxu0 0.0
      %721 = vmatprep.subr.mxu0 0.0
      %722 = vmatpush1.msra.mxu0 0.0
      %723 = vmatprep.subr.mxu0 0.0
      %724 = vmatpush1.msra.mxu0 0.0
      %725 = vmatprep.subr.mxu0 0.0
      %726 = vmatpush1.msra.mxu0 0.0
      %727 = vmatprep.subr.mxu0 0.0
      %728 = vmatpush1.msra.mxu0 0.0
      %729 = vmatprep.subr.mxu0 0.0
      %730 = vmatpush1.msra.mxu0 0.0
      %731 = vmatprep.subr.mxu0 0.0
      %732 = vmatpush1.msra.mxu0 0.0
      %733 = vmatprep.subr.mxu0 0.0
      %734 = vmatpush1.msra.mxu0 0.0
      %735 = vmatprep.subr.mxu0 0.0
      %736 = vmatpush1.msra.mxu0 0.0
      %737 = vmatprep.subr.mxu0 0.0
      %738 = vmatpush1.msra.mxu0 0.0
      %739 = vmatprep.subr.mxu0 0.0
      %740 = vmatpush1.msra.mxu0 0.0
      %741 = vmatprep.subr.mxu0 0.0
      %742 = vmatpush1.msra.mxu0 %v616
      %743 = vmatprep.subr.mxu0 0.0
      %744 = vmatpush1.msra.mxu0 %v588
      %745 = vmatprep.subr.mxu0 0.0
      %746 = vmatpush2.msra.mxu0 0.0
      %747 = vmatprep.subr.mxu0 0.0
      %748 = vmatpush2.msra.mxu0 0.0
      %749 = vmatprep.subr.mxu0 0.0
      %750 = vmatpush2.msra.mxu0 0.0
      %751 = vmatprep.subr.mxu0 0.0
      %752 = vmatpush2.msra.mxu0 0.0
      %753 = vmatprep.subr.mxu0 0.0
      %754 = vmatpush2.msra.mxu0 0.0
      %755 = vmatprep.subr.mxu0 0.0
      %756 = vmatpush2.msra.mxu0 0.0
      %757 = vmatprep.subr.mxu0 0.0
      %758 = vmatpush2.msra.mxu0 0.0
      %759 = vmatprep.subr.mxu0 0.0
      %760 = vmatpush2.msra.mxu0 0.0
      %761 = vmatprep.subr.mxu0 0.0
      %762 = vmatpush2.msra.mxu0 0.0
      %763 = vmatprep.subr.mxu0 0.0
      %764 = vmatpush2.msra.mxu0 0.0
      %765 = vmatprep.subr.mxu0 0.0
      %766 = vmatpush2.msra.mxu0 0.0
      %767 = vmatprep.subr.mxu0 0.0
      %768 = vmatpush2.msra.mxu0 0.0
      %769 = vmatprep.subr.mxu0 0.0
      %770 = vmatpush2.msra.mxu0 0.0
      %771 = vmatprep.subr.mxu0 0.0
      %772 = vmatpush2.msra.mxu0 0.0
      %773 = vmatprep.subr.mxu0 0.0
      %774 = vmatpush2.msra.mxu0 0.0
      %775 = vmatprep.subr.mxu0 0.0
      %776 = vmatpush2.msra.mxu0 0.0
      %777 = vmatprep.mubr.f32.mxu0 0.0
      %778 = vmatmul.mubr.f32.gmra.mxu0 %v708
      %v779 = vpop.f32.mrf.mxu0
      %v780 = vadd.f32 0.0, %v779
      %v781 = vpop.f32.mrf.mxu0
      %782 = vmatprep.mubr.f32.mxu0 0.0
      %783 = vmatmul.mubr.f32.gmra.mxu0 %v711
      %v784 = vpop.f32.mrf.mxu0
      %v785 = vadd.f32 0.0, %v784
      %v786 = vpop.f32.mrf.mxu0
      %787 = vdwg.mxu0
      %v788 = vlaneseq
      %v789 = vshrl.u32 %v788, 7
      %v790 = vsub.s32 2, %v789
      %v791 = vrot.slane %v606, %v790
      %v792 = vmul.f32 %v791, %v780
      %v793 = vmul.f32 %v791, %v785
      %v794 = vadd.f32 %v705, %v792
      %v795 = vadd.f32 %v706, %v793
      %v796 = vld [vmem:[%s6] sm:$0x1]
      %v798 = vlaneseq
      %v799 = vshrl.u32 %v798, 7
      %v800 = vsub.s32 0, %v799
      %v801 = vrot.slane %v796, %v800
      %v803 = vadd.f32 %v794, %v801
      %v804 = vadd.f32 %v795, %v801
      %vm805 = vcmp.ge.f32.partialorder %v803, 0.0
      %vm806 = vcmp.ge.f32.partialorder %v804, 0.0
      %v807 = vstv %s427
      %v808 = vmul.f32 %v807, %v803
      %v809 = vmul.f32 %v807, %v804
      %v810 = vsel %vm805, %v803, %v808
      %v811 = vsel %vm806, %v804, %v809
      %v812 = vsel %vm526, %v810, 0.0
      %v813 = vsel %vm528, %v811, 0.0
      %v814 = vadd.f32 %v812, %v813
      %815 = vadd.xlane.f32.xlu0 %v814
      %v816 = vpop.xlane.xlu0 %815
      %v817 = vrot.slane %v816, 4
      %v818 = vadd.f32 %v816, %v817
      %v819 = vrot.slane %v818, 2
      %v820 = vadd.f32 %v818, %v819
      %v821 = vrot.slane %v820, 1
      %v822 = vadd.f32 %v820, %v821
      %s823 = vtos %v822
      %v824 = vrcp.pop 320.0
      %s825 = vtos %v824
      %s826 = smul.f32 %s823, %s825
      %v827 = vmul.f32 %v810, %v810
      %v828 = vmul.f32 %v811, %v811
      %v829 = vsel %vm526, %v827, 0.0
      %v830 = vsel %vm528, %v828, 0.0
      %v831 = vadd.f32 %v829, %v830
      %832 = vadd.xlane.f32.xlu0 %v831
      %v833 = vpop.xlane.xlu0 %832
      %v834 = vrot.slane %v833, 4
      %v835 = vadd.f32 %v833, %v834
      %v836 = vrot.slane %v835, 2
      %v837 = vadd.f32 %v835, %v836
      %v838 = vrot.slane %v837, 1
      %v839 = vadd.f32 %v837, %v838
      %s840 = vtos %v839
      %v841 = vrcp.pop 320.0
      %s842 = vtos %v841
      %s843 = smul.f32 %s840, %s842
      %s844 = smul.f32 %s826, %s826
      %s845 = ssub.f32 %s843, %s844
      %v846 = vstv %s826
      %v847 = vsub.f32 %v810, %v846
      %v848 = vsub.f32 %v811, %v846
      %s849 = sadd.f32 %s845, 1e-08
      %v850 = vstv %s849
      %v851 = vrsqrt.pop %v850
      %s852 = vtos %v851
      %v853 = vstv %s852
      %v854 = vmul.f32 %v847, %v853
      %v855 = vmul.f32 %v848, %v853
      %v856 = vld [vmem:[%s7] sm:$0x1]
      %v858 = vlaneseq
      %v859 = vshrl.u32 %v858, 7
      %v860 = vsub.s32 0, %v859
      %v861 = vrot.slane %v856, %v860
      %v863 = vmul.f32 %v854, %v861
      %v864 = vmul.f32 %v855, %v861
      %v865 = vld [vmem:[%s8] sm:$0x1]
      %v867 = vlaneseq
      %v868 = vshrl.u32 %v867, 7
      %v869 = vsub.s32 0, %v868
      %v870 = vrot.slane %v865, %v869
      %v872 = vadd.f32 %v863, %v870
      %v873 = vadd.f32 %v864, %v870
      %v874 = vld [vmem:[%s9] sm:$0xff]
      %v875 = vld [vmem:[%s9 + $0x8] sm:$0xff]
      %v876 = vld [vmem:[%s9 + $0x10] sm:$0xff]
      %v877 = vld [vmem:[%s9 + $0x18] sm:$0xff]
      %v878 = vld [vmem:[%s10] sm:$0x1]
      %v880 = vlaneseq
      %v881 = vshrl.u32 %v880, 7
      %v882 = vsub.s32 0, %v881
      %v883 = vrot.slane %v878, %v882
      %v886 = vsel %vm526, %v872, 0
      %v889 = vsel %vm526, %v873, 0
      %891 = vmatprep.subr.mxu0 0.0
      %892 = vmatpush1.msra.mxu0 0.0
      %893 = vmatprep.subr.mxu0 0.0
      %894 = vmatpush1.msra.mxu0 0.0
      %895 = vmatprep.subr.mxu0 0.0
      %896 = vmatpush1.msra.mxu0 0.0
      %897 = vmatprep.subr.mxu0 0.0
      %898 = vmatpush1.msra.mxu0 0.0
      %899 = vmatprep.subr.mxu0 0.0
      %900 = vmatpush1.msra.mxu0 0.0
      %901 = vmatprep.subr.mxu0 0.0
      %902 = vmatpush1.msra.mxu0 0.0
      %903 = vmatprep.subr.mxu0 0.0
      %904 = vmatpush1.msra.mxu0 0.0
      %905 = vmatprep.subr.mxu0 0.0
      %906 = vmatpush1.msra.mxu0 0.0
      %907 = vmatprep.subr.mxu0 0.0
      %908 = vmatpush1.msra.mxu0 0.0
      %909 = vmatprep.subr.mxu0 0.0
      %910 = vmatpush1.msra.mxu0 0.0
      %911 = vmatprep.subr.mxu0 0.0
      %912 = vmatpush1.msra.mxu0 0.0
      %913 = vmatprep.subr.mxu0 0.0
      %914 = vmatpush1.msra.mxu0 0.0
      %915 = vmatprep.subr.mxu0 0.0
      %916 = vmatpush1.msra.mxu0 %v877
      %917 = vmatprep.subr.mxu0 0.0
      %918 = vmatpush1.msra.mxu0 %v876
      %919 = vmatprep.subr.mxu0 0.0
      %920 = vmatpush1.msra.mxu0 %v875
      %921 = vmatprep.subr.mxu0 0.0
      %922 = vmatpush1.msra.mxu0 %v874
      %923 = vmatprep.subr.mxu0 0.0
      %924 = vmatpush2.msra.mxu0 0.0
      %925 = vmatprep.subr.mxu0 0.0
      %926 = vmatpush2.msra.mxu0 0.0
      %927 = vmatprep.subr.mxu0 0.0
      %928 = vmatpush2.msra.mxu0 0.0
      %929 = vmatprep.subr.mxu0 0.0
      %930 = vmatpush2.msra.mxu0 0.0
      %931 = vmatprep.subr.mxu0 0.0
      %932 = vmatpush2.msra.mxu0 0.0
      %933 = vmatprep.subr.mxu0 0.0
      %934 = vmatpush2.msra.mxu0 0.0
      %935 = vmatprep.subr.mxu0 0.0
      %936 = vmatpush2.msra.mxu0 0.0
      %937 = vmatprep.subr.mxu0 0.0
      %938 = vmatpush2.msra.mxu0 0.0
      %939 = vmatprep.subr.mxu0 0.0
      %940 = vmatpush2.msra.mxu0 0.0
      %941 = vmatprep.subr.mxu0 0.0
      %942 = vmatpush2.msra.mxu0 0.0
      %943 = vmatprep.subr.mxu0 0.0
      %944 = vmatpush2.msra.mxu0 0.0
      %945 = vmatprep.subr.mxu0 0.0
      %946 = vmatpush2.msra.mxu0 0.0
      %947 = vmatprep.subr.mxu0 0.0
      %948 = vmatpush2.msra.mxu0 0.0
      %949 = vmatprep.subr.mxu0 0.0
      %950 = vmatpush2.msra.mxu0 0.0
      %951 = vmatprep.subr.mxu0 0.0
      %952 = vmatpush2.msra.mxu0 0.0
      %953 = vmatprep.subr.mxu0 0.0
      %954 = vmatpush2.msra.mxu0 0.0
      %955 = vmatprep.mubr.f32.mxu0 0.0
      %956 = vmatmul.mubr.f32.gmra.mxu0 %v886
      %v957 = vpop.f32.mrf.mxu0
      %v958 = vadd.f32 %v883, %v957
      %v959 = vpop.f32.mrf.mxu0
      %960 = vmatprep.mubr.f32.mxu0 0.0
      %961 = vmatmul.mubr.f32.gmra.mxu0 %v889
      %v962 = vpop.f32.mrf.mxu0
      %v963 = vadd.f32 %v883, %v962
      %v964 = vpop.f32.mrf.mxu0
      %965 = vdwg.mxu0
      %v966 = vadd.f32 %v414, %v958
      %v967 = vadd.f32 %v415, %v963
      %v968 = vadd.f32 %v958, 0.0
      %v969 = vadd.f32 %v963, 0.0
      %v970 = vld [vmem:[%s11 + $0x1] sm:$0x1]
      %s971 = vtos %v970
      %973 = vrot.lane.b32.xlu0 %v970, 127
      %v974 = vpop.permute.xlu0 %973
      %s976 = vtos %v974
      %s977 = scalar_lea.vmem %s1, 16
      %v978 = vld [vmem:[%s977] sm:$0xff]
      %v979 = vld [vmem:[%s977 + $0x8] sm:$0xff]
      %s980 = scalar_lea.vmem %s2, 1
      %v981 = vld [vmem:[%s980] sm:$0x1]
      %v983 = vlaneseq
      %v984 = vshrl.u32 %v983, 7
      %v985 = vsub.s32 0, %v984
      %v986 = vrot.slane %v981, %v985
      %v989 = vsel %vm437, %v966, 0
      %v992 = vsel %vm437, %v967, 0
      %994 = vmatprep.subr.mxu0 0.0
      %995 = vmatpush1.msra.mxu0 0.0
      %996 = vmatprep.subr.mxu0 0.0
      %997 = vmatpush1.msra.mxu0 0.0
      %998 = vmatprep.subr.mxu0 0.0
      %999 = vmatpush1.msra.mxu0 0.0
      %1000 = vmatprep.subr.mxu0 0.0
      %1001 = vmatpush1.msra.mxu0 0.0
      %1002 = vmatprep.subr.mxu0 0.0
      %1003 = vmatpush1.msra.mxu0 0.0
      %1004 = vmatprep.subr.mxu0 0.0
      %1005 = vmatpush1.msra.mxu0 0.0
      %1006 = vmatprep.subr.mxu0 0.0
      %1007 = vmatpush1.msra.mxu0 0.0
      %1008 = vmatprep.subr.mxu0 0.0
      %1009 = vmatpush1.msra.mxu0 0.0
      %1010 = vmatprep.subr.mxu0 0.0
      %1011 = vmatpush1.msra.mxu0 0.0
      %1012 = vmatprep.subr.mxu0 0.0
      %1013 = vmatpush1.msra.mxu0 0.0
      %1014 = vmatprep.subr.mxu0 0.0
      %1015 = vmatpush1.msra.mxu0 0.0
      %1016 = vmatprep.subr.mxu0 0.0
      %1017 = vmatpush1.msra.mxu0 0.0
      %1018 = vmatprep.subr.mxu0 0.0
      %1019 = vmatpush1.msra.mxu0 0.0
      %1020 = vmatprep.subr.mxu0 0.0
      %1021 = vmatpush1.msra.mxu0 0.0
      %1022 = vmatprep.subr.mxu0 0.0
      %1023 = vmatpush1.msra.mxu0 %v979
      %1024 = vmatprep.subr.mxu0 0.0
      %1025 = vmatpush1.msra.mxu0 %v978
      %1026 = vmatprep.subr.mxu0 0.0
      %1027 = vmatpush2.msra.mxu0 0.0
      %1028 = vmatprep.subr.mxu0 0.0
      %1029 = vmatpush2.msra.mxu0 0.0
      %1030 = vmatprep.subr.mxu0 0.0
      %1031 = vmatpush2.msra.mxu0 0.0
      %1032 = vmatprep.subr.mxu0 0.0
      %1033 = vmatpush2.msra.mxu0 0.0
      %1034 = vmatprep.subr.mxu0 0.0
      %1035 = vmatpush2.msra.mxu0 0.0
      %1036 = vmatprep.subr.mxu0 0.0
      %1037 = vmatpush2.msra.mxu0 0.0
      %1038 = vmatprep.subr.mxu0 0.0
      %1039 = vmatpush2.msra.mxu0 0.0
      %1040 = vmatprep.subr.mxu0 0.0
      %1041 = vmatpush2.msra.mxu0 0.0
      %1042 = vmatprep.subr.mxu0 0.0
      %1043 = vmatpush2.msra.mxu0 0.0
      %1044 = vmatprep.subr.mxu0 0.0
      %1045 = vmatpush2.msra.mxu0 0.0
      %1046 = vmatprep.subr.mxu0 0.0
      %1047 = vmatpush2.msra.mxu0 0.0
      %1048 = vmatprep.subr.mxu0 0.0
      %1049 = vmatpush2.msra.mxu0 0.0
      %1050 = vmatprep.subr.mxu0 0.0
      %1051 = vmatpush2.msra.mxu0 0.0
      %1052 = vmatprep.subr.mxu0 0.0
      %1053 = vmatpush2.msra.mxu0 0.0
      %1054 = vmatprep.subr.mxu0 0.0
      %1055 = vmatpush2.msra.mxu0 0.0
      %1056 = vmatprep.subr.mxu0 0.0
      %1057 = vmatpush2.msra.mxu0 0.0
      %1058 = vmatprep.mubr.f32.mxu0 0.0
      %1059 = vmatmul.mubr.f32.gmra.mxu0 %v989
      %v1060 = vpop.f32.mrf.mxu0
      %v1061 = vadd.f32 %v986, %v1060
      %v1062 = vpop.f32.mrf.mxu0
      %1063 = vmatprep.mubr.f32.mxu0 0.0
      %1064 = vmatmul.mubr.f32.gmra.mxu0 %v992
      %v1065 = vpop.f32.mrf.mxu0
      %v1066 = vadd.f32 %v986, %v1065
      %v1067 = vpop.f32.mrf.mxu0
      %1068 = vdwg.mxu0
      %vm1069 = vcmp.ge.f32.partialorder %v1061, 0.0
      %vm1070 = vcmp.ge.f32.partialorder %v1066, 0.0
      %v1071 = vstv %s971
      %v1072 = vmul.f32 %v1071, %v1061
      %v1073 = vmul.f32 %v1071, %v1066
      %v1074 = vsel %vm1069, %v1061, %v1072
      %v1075 = vsel %vm1070, %v1066, %v1073
      %v1076 = vsel %vm526, %v1074, 0.0
      %v1077 = vsel %vm528, %v1075, 0.0
      %v1078 = vadd.f32 %v1076, %v1077
      %1079 = vadd.xlane.f32.xlu0 %v1078
      %v1080 = vpop.xlane.xlu0 %1079
      %v1081 = vrot.slane %v1080, 4
      %v1082 = vadd.f32 %v1080, %v1081
      %v1083 = vrot.slane %v1082, 2
      %v1084 = vadd.f32 %v1082, %v1083
      %v1085 = vrot.slane %v1084, 1
      %v1086 = vadd.f32 %v1084, %v1085
      %s1087 = vtos %v1086
      %v1088 = vrcp.pop 320.0
      %s1089 = vtos %v1088
      %s1090 = smul.f32 %s1087, %s1089
      %v1091 = vmul.f32 %v1074, %v1074
      %v1092 = vmul.f32 %v1075, %v1075
      %v1093 = vsel %vm526, %v1091, 0.0
      %v1094 = vsel %vm528, %v1092, 0.0
      %v1095 = vadd.f32 %v1093, %v1094
      %1096 = vadd.xlane.f32.xlu0 %v1095
      %v1097 = vpop.xlane.xlu0 %1096
      %v1098 = vrot.slane %v1097, 4
      %v1099 = vadd.f32 %v1097, %v1098
      %v1100 = vrot.slane %v1099, 2
      %v1101 = vadd.f32 %v1099, %v1100
      %v1102 = vrot.slane %v1101, 1
      %v1103 = vadd.f32 %v1101, %v1102
      %s1104 = vtos %v1103
      %v1105 = vrcp.pop 320.0
      %s1106 = vtos %v1105
      %s1107 = smul.f32 %s1104, %s1106
      %s1108 = smul.f32 %s1090, %s1090
      %s1109 = ssub.f32 %s1107, %s1108
      %v1110 = vstv %s1090
      %v1111 = vsub.f32 %v1074, %v1110
      %v1112 = vsub.f32 %v1075, %v1110
      %s1113 = sadd.f32 %s1109, 1e-08
      %v1114 = vstv %s1113
      %v1115 = vrsqrt.pop %v1114
      %s1116 = vtos %v1115
      %v1117 = vstv %s1116
      %v1118 = vmul.f32 %v1111, %v1117
      %v1119 = vmul.f32 %v1112, %v1117
      %s1120 = scalar_lea.vmem %s3, 1
      %v1121 = vld [vmem:[%s1120] sm:$0x1]
      %v1123 = vlaneseq
      %v1124 = vshrl.u32 %v1123, 7
      %v1125 = vsub.s32 0, %v1124
      %v1126 = vrot.slane %v1121, %v1125
      %v1128 = vmul.f32 %v1118, %v1126
      %v1129 = vmul.f32 %v1119, %v1126
      %s1130 = scalar_lea.vmem %s4, 1
      %v1131 = vld [vmem:[%s1130] sm:$0x1]
      %v1133 = vlaneseq
      %v1134 = vshrl.u32 %v1133, 7
      %v1135 = vsub.s32 0, %v1134
      %v1136 = vrot.slane %v1131, %v1135
      %v1138 = vadd.f32 %v1128, %v1136
      %v1139 = vadd.f32 %v1129, %v1136
      %vm1140 = vcmp.eq.s32.totalorder %v590, 2
      %vm1141 = vcmp.eq.s32.totalorder %v591, 2
      %v1142 = vsel %vm1140, 1, 0
      %v1143 = vsel %vm1141, 1, 0
      %v1144 = vcvt.s32.f32 %v1142
      %v1145 = vcvt.s32.f32 %v1143
      %vm1146 = vcmp.eq.s32.totalorder %v598, 2
      %vm1147 = vcmp.eq.s32.totalorder %v599, 2
      %v1148 = vsel %vm1146, 1, 0
      %v1149 = vsel %vm1147, 1, 0
      %v1150 = vcvt.s32.f32 %v1148
      %v1151 = vcvt.s32.f32 %v1149
      %s1152 = scalar_lea.vmem %s5, 4
      %v1153 = vld [vmem:[%s1152] sm:$0x7]
      %v1155 = vsel %vm607, %v1144, 0
      %v1158 = vsel %vm607, %v1145, 0
      %v1161 = vsel %vm614, %v1139, 0
      %1163 = vmatprep.subr.mxu0 0.0
      %1164 = vmatpush1.msra.mxu0 0.0
      %1165 = vmatprep.subr.mxu0 0.0
      %1166 = vmatpush1.msra.mxu0 0.0
      %1167 = vmatprep.subr.mxu0 0.0
      %1168 = vmatpush1.msra.mxu0 0.0
      %1169 = vmatprep.subr.mxu0 0.0
      %1170 = vmatpush1.msra.mxu0 0.0
      %1171 = vmatprep.subr.mxu0 0.0
      %1172 = vmatpush1.msra.mxu0 0.0
      %1173 = vmatprep.subr.mxu0 0.0
      %1174 = vmatpush1.msra.mxu0 0.0
      %1175 = vmatprep.subr.mxu0 0.0
      %1176 = vmatpush1.msra.mxu0 0.0
      %1177 = vmatprep.subr.mxu0 0.0
      %1178 = vmatpush1.msra.mxu0 0.0
      %1179 = vmatprep.subr.mxu0 0.0
      %1180 = vmatpush1.msra.mxu0 0.0
      %1181 = vmatprep.subr.mxu0 0.0
      %1182 = vmatpush1.msra.mxu0 0.0
      %1183 = vmatprep.subr.mxu0 0.0
      %1184 = vmatpush1.msra.mxu0 0.0
      %1185 = vmatprep.subr.mxu0 0.0
      %1186 = vmatpush1.msra.mxu0 0.0
      %1187 = vmatprep.subr.mxu0 0.0
      %1188 = vmatpush1.msra.mxu0 0.0
      %1189 = vmatprep.subr.mxu0 0.0
      %1190 = vmatpush1.msra.mxu0 0.0
      %1191 = vmatprep.subr.mxu0 0.0
      %1192 = vmatpush1.msra.mxu0 %v1161
      %1193 = vmatprep.subr.mxu0 0.0
      %1194 = vmatpush1.msra.mxu0 %v1138
      %1195 = vmatprep.subr.mxu0 0.0
      %1196 = vmatpush2.msra.mxu0 0.0
      %1197 = vmatprep.subr.mxu0 0.0
      %1198 = vmatpush2.msra.mxu0 0.0
      %1199 = vmatprep.subr.mxu0 0.0
      %1200 = vmatpush2.msra.mxu0 0.0
      %1201 = vmatprep.subr.mxu0 0.0
      %1202 = vmatpush2.msra.mxu0 0.0
      %1203 = vmatprep.subr.mxu0 0.0
      %1204 = vmatpush2.msra.mxu0 0.0
      %1205 = vmatprep.subr.mxu0 0.0
      %1206 = vmatpush2.msra.mxu0 0.0
      %1207 = vmatprep.subr.mxu0 0.0
      %1208 = vmatpush2.msra.mxu0 0.0
      %1209 = vmatprep.subr.mxu0 0.0
      %1210 = vmatpush2.msra.mxu0 0.0
      %1211 = vmatprep.subr.mxu0 0.0
      %1212 = vmatpush2.msra.mxu0 0.0
      %1213 = vmatprep.subr.mxu0 0.0
      %1214 = vmatpush2.msra.mxu0 0.0
      %1215 = vmatprep.subr.mxu0 0.0
      %1216 = vmatpush2.msra.mxu0 0.0
      %1217 = vmatprep.subr.mxu0 0.0
      %1218 = vmatpush2.msra.mxu0 0.0
      %1219 = vmatprep.subr.mxu0 0.0
      %1220 = vmatpush2.msra.mxu0 0.0
      %1221 = vmatprep.subr.mxu0 0.0
      %1222 = vmatpush2.msra.mxu0 0.0
      %1223 = vmatprep.subr.mxu0 0.0
      %1224 = vmatpush2.msra.mxu0 0.0
      %1225 = vmatprep.subr.mxu0 0.0
      %1226 = vmatpush2.msra.mxu0 0.0
      %1227 = vmatprep.mubr.f32.mxu0 0.0
      %1228 = vmatmul.mubr.f32.gmra.mxu0 %v1155
      %v1229 = vpop.f32.mrf.mxu0
      %v1230 = vadd.f32 0.0, %v1229
      %v1231 = vpop.f32.mrf.mxu0
      %1232 = vmatprep.mubr.f32.mxu0 0.0
      %1233 = vmatmul.mubr.f32.gmra.mxu0 %v1158
      %v1234 = vpop.f32.mrf.mxu0
      %v1235 = vadd.f32 0.0, %v1234
      %v1236 = vpop.f32.mrf.mxu0
      %1237 = vdwg.mxu0
      %v1238 = vlaneseq
      %v1239 = vshrl.u32 %v1238, 7
      %v1240 = vsub.s32 0, %v1239
      %v1241 = vrot.slane %v1153, %v1240
      %v1242 = vmul.f32 %v1241, %v1230
      %v1243 = vmul.f32 %v1241, %v1235
      %v1244 = vlaneseq
      %v1245 = vshrl.u32 %v1244, 7
      %v1246 = vsub.s32 1, %v1245
      %v1247 = vrot.slane %v1153, %v1246
      %v1248 = vmul.f32 %v1247, %v1138
      %v1249 = vmul.f32 %v1247, %v1139
      %v1250 = vadd.f32 %v1242, %v1248
      %v1251 = vadd.f32 %v1243, %v1249
      %v1253 = vsel %vm607, %v1150, 0
      %v1256 = vsel %vm607, %v1151, 0
      %1258 = vmatprep.subr.mxu0 0.0
      %1259 = vmatpush1.msra.mxu0 0.0
      %1260 = vmatprep.subr.mxu0 0.0
      %1261 = vmatpush1.msra.mxu0 0.0
      %1262 = vmatprep.subr.mxu0 0.0
      %1263 = vmatpush1.msra.mxu0 0.0
      %1264 = vmatprep.subr.mxu0 0.0
      %1265 = vmatpush1.msra.mxu0 0.0
      %1266 = vmatprep.subr.mxu0 0.0
      %1267 = vmatpush1.msra.mxu0 0.0
      %1268 = vmatprep.subr.mxu0 0.0
      %1269 = vmatpush1.msra.mxu0 0.0
      %1270 = vmatprep.subr.mxu0 0.0
      %1271 = vmatpush1.msra.mxu0 0.0
      %1272 = vmatprep.subr.mxu0 0.0
      %1273 = vmatpush1.msra.mxu0 0.0
      %1274 = vmatprep.subr.mxu0 0.0
      %1275 = vmatpush1.msra.mxu0 0.0
      %1276 = vmatprep.subr.mxu0 0.0
      %1277 = vmatpush1.msra.mxu0 0.0
      %1278 = vmatprep.subr.mxu0 0.0
      %1279 = vmatpush1.msra.mxu0 0.0
      %1280 = vmatprep.subr.mxu0 0.0
      %1281 = vmatpush1.msra.mxu0 0.0
      %1282 = vmatprep.subr.mxu0 0.0
      %1283 = vmatpush1.msra.mxu0 0.0
      %1284 = vmatprep.subr.mxu0 0.0
      %1285 = vmatpush1.msra.mxu0 0.0
      %1286 = vmatprep.subr.mxu0 0.0
      %1287 = vmatpush1.msra.mxu0 %v1161
      %1288 = vmatprep.subr.mxu0 0.0
      %1289 = vmatpush1.msra.mxu0 %v1138
      %1290 = vmatprep.subr.mxu0 0.0
      %1291 = vmatpush2.msra.mxu0 0.0
      %1292 = vmatprep.subr.mxu0 0.0
      %1293 = vmatpush2.msra.mxu0 0.0
      %1294 = vmatprep.subr.mxu0 0.0
      %1295 = vmatpush2.msra.mxu0 0.0
      %1296 = vmatprep.subr.mxu0 0.0
      %1297 = vmatpush2.msra.mxu0 0.0
      %1298 = vmatprep.subr.mxu0 0.0
      %1299 = vmatpush2.msra.mxu0 0.0
      %1300 = vmatprep.subr.mxu0 0.0
      %1301 = vmatpush2.msra.mxu0 0.0
      %1302 = vmatprep.subr.mxu0 0.0
      %1303 = vmatpush2.msra.mxu0 0.0
      %1304 = vmatprep.subr.mxu0 0.0
      %1305 = vmatpush2.msra.mxu0 0.0
      %1306 = vmatprep.subr.mxu0 0.0
      %1307 = vmatpush2.msra.mxu0 0.0
      %1308 = vmatprep.subr.mxu0 0.0
      %1309 = vmatpush2.msra.mxu0 0.0
      %1310 = vmatprep.subr.mxu0 0.0
      %1311 = vmatpush2.msra.mxu0 0.0
      %1312 = vmatprep.subr.mxu0 0.0
      %1313 = vmatpush2.msra.mxu0 0.0
      %1314 = vmatprep.subr.mxu0 0.0
      %1315 = vmatpush2.msra.mxu0 0.0
      %1316 = vmatprep.subr.mxu0 0.0
      %1317 = vmatpush2.msra.mxu0 0.0
      %1318 = vmatprep.subr.mxu0 0.0
      %1319 = vmatpush2.msra.mxu0 0.0
      %1320 = vmatprep.subr.mxu0 0.0
      %1321 = vmatpush2.msra.mxu0 0.0
      %1322 = vmatprep.mubr.f32.mxu0 0.0
      %1323 = vmatmul.mubr.f32.gmra.mxu0 %v1253
      %v1324 = vpop.f32.mrf.mxu0
      %v1325 = vadd.f32 0.0, %v1324
      %v1326 = vpop.f32.mrf.mxu0
      %1327 = vmatprep.mubr.f32.mxu0 0.0
      %1328 = vmatmul.mubr.f32.gmra.mxu0 %v1256
      %v1329 = vpop.f32.mrf.mxu0
      %v1330 = vadd.f32 0.0, %v1329
      %v1331 = vpop.f32.mrf.mxu0
      %1332 = vdwg.mxu0
      %v1333 = vlaneseq
      %v1334 = vshrl.u32 %v1333, 7
      %v1335 = vsub.s32 2, %v1334
      %v1336 = vrot.slane %v1153, %v1335
      %v1337 = vmul.f32 %v1336, %v1325
      %v1338 = vmul.f32 %v1336, %v1330
      %v1339 = vadd.f32 %v1250, %v1337
      %v1340 = vadd.f32 %v1251, %v1338
      %s1341 = scalar_lea.vmem %s6, 1
      %v1342 = vld [vmem:[%s1341] sm:$0x1]
      %v1344 = vlaneseq
      %v1345 = vshrl.u32 %v1344, 7
      %v1346 = vsub.s32 0, %v1345
      %v1347 = vrot.slane %v1342, %v1346
      %v1349 = vadd.f32 %v1339, %v1347
      %v1350 = vadd.f32 %v1340, %v1347
      %vm1351 = vcmp.ge.f32.partialorder %v1349, 0.0
      %vm1352 = vcmp.ge.f32.partialorder %v1350, 0.0
      %v1353 = vstv %s976
      %v1354 = vmul.f32 %v1353, %v1349
      %v1355 = vmul.f32 %v1353, %v1350
      %v1356 = vsel %vm1351, %v1349, %v1354
      %v1357 = vsel %vm1352, %v1350, %v1355
      %v1358 = vsel %vm526, %v1356, 0.0
      %v1359 = vsel %vm528, %v1357, 0.0
      %v1360 = vadd.f32 %v1358, %v1359
      %1361 = vadd.xlane.f32.xlu0 %v1360
      %v1362 = vpop.xlane.xlu0 %1361
      %v1363 = vrot.slane %v1362, 4
      %v1364 = vadd.f32 %v1362, %v1363
      %v1365 = vrot.slane %v1364, 2
      %v1366 = vadd.f32 %v1364, %v1365
      %v1367 = vrot.slane %v1366, 1
      %v1368 = vadd.f32 %v1366, %v1367
      %s1369 = vtos %v1368
      %v1370 = vrcp.pop 320.0
      %s1371 = vtos %v1370
      %s1372 = smul.f32 %s1369, %s1371
      %v1373 = vmul.f32 %v1356, %v1356
      %v1374 = vmul.f32 %v1357, %v1357
      %v1375 = vsel %vm526, %v1373, 0.0
      %v1376 = vsel %vm528, %v1374, 0.0
      %v1377 = vadd.f32 %v1375, %v1376
      %1378 = vadd.xlane.f32.xlu0 %v1377
      %v1379 = vpop.xlane.xlu0 %1378
      %v1380 = vrot.slane %v1379, 4
      %v1381 = vadd.f32 %v1379, %v1380
      %v1382 = vrot.slane %v1381, 2
      %v1383 = vadd.f32 %v1381, %v1382
      %v1384 = vrot.slane %v1383, 1
      %v1385 = vadd.f32 %v1383, %v1384
      %s1386 = vtos %v1385
      %v1387 = vrcp.pop 320.0
      %s1388 = vtos %v1387
      %s1389 = smul.f32 %s1386, %s1388
      %s1390 = smul.f32 %s1372, %s1372
      %s1391 = ssub.f32 %s1389, %s1390
      %v1392 = vstv %s1372
      %v1393 = vsub.f32 %v1356, %v1392
      %v1394 = vsub.f32 %v1357, %v1392
      %s1395 = sadd.f32 %s1391, 1e-08
      %v1396 = vstv %s1395
      %v1397 = vrsqrt.pop %v1396
      %s1398 = vtos %v1397
      %v1399 = vstv %s1398
      %v1400 = vmul.f32 %v1393, %v1399
      %v1401 = vmul.f32 %v1394, %v1399
      %s1402 = scalar_lea.vmem %s7, 1
      %v1403 = vld [vmem:[%s1402] sm:$0x1]
      %v1405 = vlaneseq
      %v1406 = vshrl.u32 %v1405, 7
      %v1407 = vsub.s32 0, %v1406
      %v1408 = vrot.slane %v1403, %v1407
      %v1410 = vmul.f32 %v1400, %v1408
      %v1411 = vmul.f32 %v1401, %v1408
      %s1412 = scalar_lea.vmem %s8, 1
      %v1413 = vld [vmem:[%s1412] sm:$0x1]
      %v1415 = vlaneseq
      %v1416 = vshrl.u32 %v1415, 7
      %v1417 = vsub.s32 0, %v1416
      %v1418 = vrot.slane %v1413, %v1417
      %v1420 = vadd.f32 %v1410, %v1418
      %v1421 = vadd.f32 %v1411, %v1418
      %s1422 = scalar_lea.vmem %s9, 32
      %v1423 = vld [vmem:[%s1422] sm:$0xff]
      %v1424 = vld [vmem:[%s1422 + $0x8] sm:$0xff]
      %v1425 = vld [vmem:[%s1422 + $0x10] sm:$0xff]
      %v1426 = vld [vmem:[%s1422 + $0x18] sm:$0xff]
      %s1427 = scalar_lea.vmem %s10, 1
      %v1428 = vld [vmem:[%s1427] sm:$0x1]
      %v1430 = vlaneseq
      %v1431 = vshrl.u32 %v1430, 7
      %v1432 = vsub.s32 0, %v1431
      %v1433 = vrot.slane %v1428, %v1432
      %v1436 = vsel %vm526, %v1420, 0
      %v1439 = vsel %vm526, %v1421, 0
      %1441 = vmatprep.subr.mxu0 0.0
      %1442 = vmatpush1.msra.mxu0 0.0
      %1443 = vmatprep.subr.mxu0 0.0
      %1444 = vmatpush1.msra.mxu0 0.0
      %1445 = vmatprep.subr.mxu0 0.0
      %1446 = vmatpush1.msra.mxu0 0.0
      %1447 = vmatprep.subr.mxu0 0.0
      %1448 = vmatpush1.msra.mxu0 0.0
      %1449 = vmatprep.subr.mxu0 0.0
      %1450 = vmatpush1.msra.mxu0 0.0
      %1451 = vmatprep.subr.mxu0 0.0
      %1452 = vmatpush1.msra.mxu0 0.0
      %1453 = vmatprep.subr.mxu0 0.0
      %1454 = vmatpush1.msra.mxu0 0.0
      %1455 = vmatprep.subr.mxu0 0.0
      %1456 = vmatpush1.msra.mxu0 0.0
      %1457 = vmatprep.subr.mxu0 0.0
      %1458 = vmatpush1.msra.mxu0 0.0
      %1459 = vmatprep.subr.mxu0 0.0
      %1460 = vmatpush1.msra.mxu0 0.0
      %1461 = vmatprep.subr.mxu0 0.0
      %1462 = vmatpush1.msra.mxu0 0.0
      %1463 = vmatprep.subr.mxu0 0.0
      %1464 = vmatpush1.msra.mxu0 0.0
      %1465 = vmatprep.subr.mxu0 0.0
      %1466 = vmatpush1.msra.mxu0 %v1426
      %1467 = vmatprep.subr.mxu0 0.0
      %1468 = vmatpush1.msra.mxu0 %v1425
      %1469 = vmatprep.subr.mxu0 0.0
      %1470 = vmatpush1.msra.mxu0 %v1424
      %1471 = vmatprep.subr.mxu0 0.0
      %1472 = vmatpush1.msra.mxu0 %v1423
      %1473 = vmatprep.subr.mxu0 0.0
      %1474 = vmatpush2.msra.mxu0 0.0
      %1475 = vmatprep.subr.mxu0 0.0
      %1476 = vmatpush2.msra.mxu0 0.0
      %1477 = vmatprep.subr.mxu0 0.0
      %1478 = vmatpush2.msra.mxu0 0.0
      %1479 = vmatprep.subr.mxu0 0.0
      %1480 = vmatpush2.msra.mxu0 0.0
      %1481 = vmatprep.subr.mxu0 0.0
      %1482 = vmatpush2.msra.mxu0 0.0
      %1483 = vmatprep.subr.mxu0 0.0
      %1484 = vmatpush2.msra.mxu0 0.0
      %1485 = vmatprep.subr.mxu0 0.0
      %1486 = vmatpush2.msra.mxu0 0.0
      %1487 = vmatprep.subr.mxu0 0.0
      %1488 = vmatpush2.msra.mxu0 0.0
      %1489 = vmatprep.subr.mxu0 0.0
      %1490 = vmatpush2.msra.mxu0 0.0
      %1491 = vmatprep.subr.mxu0 0.0
      %1492 = vmatpush2.msra.mxu0 0.0
      %1493 = vmatprep.subr.mxu0 0.0
      %1494 = vmatpush2.msra.mxu0 0.0
      %1495 = vmatprep.subr.mxu0 0.0
      %1496 = vmatpush2.msra.mxu0 0.0
      %1497 = vmatprep.subr.mxu0 0.0
      %1498 = vmatpush2.msra.mxu0 0.0
      %1499 = vmatprep.subr.mxu0 0.0
      %1500 = vmatpush2.msra.mxu0 0.0
      %1501 = vmatprep.subr.mxu0 0.0
      %1502 = vmatpush2.msra.mxu0 0.0
      %1503 = vmatprep.subr.mxu0 0.0
      %1504 = vmatpush2.msra.mxu0 0.0
      %1505 = vmatprep.mubr.f32.mxu0 0.0
      %1506 = vmatmul.mubr.f32.gmra.mxu0 %v1436
      %v1507 = vpop.f32.mrf.mxu0
      %v1508 = vadd.f32 %v1433, %v1507
      %v1509 = vpop.f32.mrf.mxu0
      %1510 = vmatprep.mubr.f32.mxu0 0.0
      %1511 = vmatmul.mubr.f32.gmra.mxu0 %v1439
      %v1512 = vpop.f32.mrf.mxu0
      %v1513 = vadd.f32 %v1433, %v1512
      %v1514 = vpop.f32.mrf.mxu0
      %1515 = vdwg.mxu0
      %v1516 = vadd.f32 %v968, %v1508
      %v1517 = vadd.f32 %v969, %v1513
      %1520 = vrot.lane.b32.xlu0 %v1516, 112
      %v1521 = vpop.permute.xlu0 %1520
      %1522 = vrot.lane.b32.xlu0 %v1517, 112
      %v1523 = vpop.permute.xlu0 %1522
      %1526 = vst.msk [vmem:[%s413] sm:$0xff] %vm437, %v1521
      %vm1527 = vcmask 123904
      %1528 = vst.msk [vmem:[%s413 + $0x8] sm:$0x3] %vm1527, %v1523
      %p1529 = scmp.lt.s32.totalorder %s23, 1
      %s1530 = scalar_select %p1529, %s23, 1
      %s1531 = smul.addr %s1530, 2
      %s1532 = smul.addr %s1531, 8
      %s1533 = scalar_lea.vmem %s12, %s1532
      // Predicated region
      $region69: #{y_net_forward.4} parent=67 // pred_check
        %p1534 = pneg %p298
      $region70: #{y_net_forward.4} parent=67 // pred_check_branch
        %1536 = sbr.rel (%p1534) target = $region72
      $region71: #{y_net_forward.4} parent=67 // pred_region
        _
      $region72: #{y_net_forward.4} parent=67 // pred_fallthru
        _
    $region68: #{y_net_forward.4} parent=5 // pred_fallthru
      _
    %p1537 = scmp.le.s32.totalorder 2, %s18
    // Predicated region
    $region73: #{y_net_forward.4} parent=5 // pred_check
      %p1538 = pneg %p1537
    $region74: #{y_net_forward.4} parent=5 // pred_check_branch
      %1540 = sbr.rel (%p1538) target = $region76
    $region75: #{y_net_forward.4} parent=5 // pred_region
      %s1541 = ssub.s32 %s18, 2
      // Predicated region
      $region77: #{y_net_forward.4} parent=75 // pred_check
        %p1542 = pneg %p304
      $region78: #{y_net_forward.4} parent=75 // pred_check_branch
        %1544 = sbr.rel (%p1542) target = $region80
      $region79: #{y_net_forward.4} parent=75 // pred_region
        %p1545 = scmp.lt.s32.totalorder %s24, 1
        %s1546 = scalar_select %p1545, %s24, 1
        %s1547 = smul.addr %s1546, 2
        %s1548 = smul.addr %s1547, 8
        %s1549 = scalar_lea.vmem %s12, %s1548
      $region80: #{y_net_forward.4} parent=75 // pred_fallthru
        _
    $region76: #{y_net_forward.4} parent=5 // pred_fallthru
      _
  $region6: #{y_net_forward.4} parent=0 // loop_footer
    %s22 = sadd.s32 1, %s18
  $region7: #{y_net_forward.4} parent=0 // loop_footer_branch
    %17 = sbr.rel target = $region3
  $region8: #{y_net_forward.4} parent=0 // loop_exit
    _

</llo_original>
